<compile_context>
chip_gen: v6e
topology: v6e:2x2x1
jax: 0.10.0
libtpu: 0.0.40
codegen_flags: <defaults>
</compile_context>

<pallas_src>
import jax
import jax.numpy as jnp
from jax import lax
from jax.experimental import pallas as pl
from jax.experimental.pallas import tpu as pltpu

EPS = 1e-5  # nn.BatchNorm default eps


# --------------------------------------------------------------------------
# Fused Pallas kernel: conv1+BN+ReLU -> conv2+BN+ReLU -> fc1+ReLU -> dueling head
# --------------------------------------------------------------------------
def ddqn_fused_kernel(p1_ref, w1_ref, g1_ref, b1_ref,
                      w2_ref, g2_ref, b2_ref,
                      wf1_ref, bf1_ref, wh_ref, bh_ref,
                      o_ref, y2_scr):
    """
    p1_ref : [64*B, 640] bf16  conv1 im2col patches; rows ordered (tap, hw2, b),
                               tap = (oh1%2)*2 + (ow1%2), hw2 = (oh1//2)*4 + (ow1//2);
                               K padded 588 -> 640 with zeros.
    w1_ref : [640, 128] bf16   conv1 weights, K- and N-padded with zeros.
    g1/b1  : [1, 128]  f32     BN1 gamma/beta (padded: gamma=1, beta=0).
    w2_ref : [4, 128, 128] bf16  conv2 per-tap weights [tap, c_in(pad), c_out].
    g2/b2  : [1, 128]  f32
    wf1_ref: [16, 128, 256] bf16 fc1 weights regrouped as [hw2, c_in, f].
    bf1    : [1, 256]  f32
    wh_ref : [256, A+1] bf16   [adv_w.T | v_w.T]
    bh     : [1, A+1]  f32
    o_ref  : [B, A]    f32
    y2_scr : [16*B, 128] f32 VMEM scratch (conv2 activations, rows = (hw2, b)).
    """
    B, A = o_ref.shape
    m1 = p1_ref.shape[0]          # 64*B  conv1 output rows
    m2 = m1 // 4                  # 16*B  conv2 output rows

    def bn_relu(y, g, b, m):
        # training-mode BatchNorm over rows (== (N,H,W)), biased variance, + ReLU.
        s = jnp.sum(y, axis=0, keepdims=True)
        ss = jnp.sum(y * y, axis=0, keepdims=True)
        mu = s * (1.0 / m)
        var = jnp.maximum(ss * (1.0 / m) - mu * mu, 0.0)
        scale = lax.rsqrt(var + EPS) * g
        shift = b - mu * scale
        return jnp.maximum(y * scale + shift, 0.0)

    # ---- conv1 (im2col matmul; bias folded away by train-mode BN) ----
    y1 = jnp.dot(p1_ref[...], w1_ref[...], preferred_element_type=jnp.float32)
    y1 = bn_relu(y1, g1_ref[...], b1_ref[...], m1)            # [64B, 128] f32

    # ---- conv2 as 4 accumulated tap matmuls over contiguous row blocks ----
    y2 = jnp.dot(y1[0:m2].astype(jnp.bfloat16), w2_ref[0],
                 preferred_element_type=jnp.float32)
    for t in range(1, 4):
        y2 = y2 + jnp.dot(y1[t * m2:(t + 1) * m2].astype(jnp.bfloat16), w2_ref[t],
                          preferred_element_type=jnp.float32)
    y2 = bn_relu(y2, g2_ref[...], b2_ref[...], m2)            # [16B, 128] f32
    y2_scr[...] = y2

    # ---- fc1 (torch NCHW flatten folded into the wf1 permutation) + ReLU ----
    h = jnp.dot(y2_scr[pl.ds(0, B), :].astype(jnp.bfloat16), wf1_ref[0],
                preferred_element_type=jnp.float32)
    for hw in range(1, 16):
        h = h + jnp.dot(y2_scr[pl.ds(hw * B, B), :].astype(jnp.bfloat16),
                        wf1_ref[hw], preferred_element_type=jnp.float32)
    h = jnp.maximum(h + bf1_ref[...], 0.0)                    # [B, 256] f32

    # ---- dueling head: one [256, A+1] matmul (adv columns | value column) ----
    q = jnp.dot(h.astype(jnp.bfloat16), wh_ref[...],
                preferred_element_type=jnp.float32) + bh_ref[...]   # [B, A+1]
    lane = lax.broadcasted_iota(jnp.int32, q.shape, 1)
    is_val = lane == A
    val = jnp.sum(jnp.where(is_val, q, 0.0), axis=1, keepdims=True)
    adv_mean = jnp.sum(jnp.where(is_val, 0.0, q), axis=1, keepdims=True) * (1.0 / A)
    o_ref[...] = q[:, :A] + val - adv_mean


# --------------------------------------------------------------------------
# One-time parameter prep: PyTorch layouts -> kernel layouts (bf16, padded)
# --------------------------------------------------------------------------
def prep_params(p):
    bf = jnp.bfloat16
    # conv1: (64,12,7,7) -> (kh,kw,ci,co) -> (588,64) -> pad K 640, N 128
    w1 = jnp.transpose(p["conv1_w"], (2, 3, 1, 0)).reshape(7 * 7 * 12, 64)
    w1 = jnp.pad(w1, ((0, 640 - 588), (0, 64))).astype(bf)
    g1 = jnp.pad(p["bn1_g"], (0, 64), constant_values=1.0)[None, :]
    b1 = jnp.pad(p["bn1_b"], (0, 64))[None, :]
    # conv2: (128,64,2,2) -> (kh,kw,ci,co), pad ci 64->128, -> (4,128,128)
    w2 = jnp.transpose(p["conv2_w"], (2, 3, 1, 0))
    w2 = jnp.pad(w2, ((0, 0), (0, 0), (0, 64), (0, 0))).reshape(4, 128, 128).astype(bf)
    g2 = p["bn2_g"][None, :]
    b2 = p["bn2_b"][None, :]
    # fc1: torch flat index j = c*16 + hw  ->  wf1[hw, c, f] = fc1_w[f, j]
    wf1 = p["fc1_w"].reshape(256, 128, 16).transpose(2, 1, 0).astype(bf)
    bf1 = p["fc1_b"][None, :]
    # dueling head: [adv | value] columns
    wh = jnp.concatenate([p["adv_w"].T, p["v_w"].T], axis=1).astype(bf)  # [256, A+1]
    bh = jnp.concatenate([p["adv_b"], p["v_b"]])[None, :]
    return dict(w1=w1, g1=g1, b1=b1, w2=w2, g2=g2, b2=b2,
                wf1=wf1, bf1=bf1, wh=wh, bh=bh)


# --------------------------------------------------------------------------
# Forward: vectorized im2col glue + single pallas_call
# --------------------------------------------------------------------------
def ddqn_forward(kp, x_nchw):
    """Pallas implementation of DDQN.forward. Input: NCHW [B, 12, 84, 84]."""
    B = x_nchw.shape[0]
    A = kp["wh"].shape[1] - 1

    # vectorized im2col for conv1 (k=7, s=11): patches are disjoint since s > k.
    x = jnp.transpose(x_nchw, (0, 2, 3, 1))                      # NHWC [B,84,84,12]
    x = jnp.pad(x, ((0, 0), (0, 4), (0, 4), (0, 0)))             # [B,88,88,12]
    p = x.reshape(B, 8, 11, 8, 11, 12)[:, :, :7, :, :7, :]       # [B,oh1,kh,ow1,kw,c]
    # split oh1 -> (oh2, kh2), ow1 -> (ow2, kw2) so conv2 taps are contiguous rows
    p = p.reshape(B, 4, 2, 7, 4, 2, 7, 12)
    p = p.transpose(2, 5, 1, 4, 0, 3, 6, 7)                      # [kh2,kw2,oh2,ow2,B,kh,kw,c]
    p = p.reshape(64 * B, 7 * 7 * 12)
    p = jnp.pad(p, ((0, 0), (0, 640 - 588))).astype(jnp.bfloat16)  # [64B, 640]

    args = (p, kp["w1"], kp["g1"], kp["b1"], kp["w2"], kp["g2"], kp["b2"],
            kp["wf1"], kp["bf1"], kp["wh"], kp["bh"])

    flops = 2 * (64 * B * 640 * 128 + 4 * 16 * B * 128 * 128
                 + 16 * B * 128 * 256 + B * 256 * (A + 1))
    bytes_accessed = sum(int(a.size) * a.dtype.itemsize for a in args) + B * A * 4

    vmem = pl.BlockSpec(memory_space=pltpu.MemorySpace.VMEM)
    return pl.pallas_call(
        ddqn_fused_kernel,
        out_shape=jax.ShapeDtypeStruct((B, A), jnp.float32),
        in_specs=[vmem] * len(args),
        out_specs=vmem,
        scratch_shapes=[pltpu.VMEM((16 * B, 128), jnp.float32)],
        compiler_params=pltpu.CompilerParams(vmem_limit_bytes=32 * 1024 * 1024),
        cost_estimate=pl.CostEstimate(flops=flops, transcendentals=256,
                                      bytes_accessed=bytes_accessed),
    )(*args)


# --------------------------------------------------------------------------
# Synthetic params in PyTorch layouts/shapes
# --------------------------------------------------------------------------
def init_params(key, action_size=4):
    ks = jax.random.split(key, 14)

    def u(k, shape, fan_in):
        bound = 1.0 / jnp.sqrt(jnp.float32(fan_in))
        return jax.random.uniform(k, shape, jnp.float32, -bound, bound)

    p = {}
    p["conv1_w"] = u(ks[0], (64, 12, 7, 7), 12 * 7 * 7)
    p["conv1_b"] = u(ks[1], (64,), 12 * 7 * 7)
    p["bn1_g"] = 1.0 + 0.1 * jax.random.normal(ks[2], (64,), jnp.float32)
    p["bn1_b"] = 0.1 * jax.random.normal(ks[3], (64,), jnp.float32)
    p["conv2_w"] = u(ks[4], (128, 64, 2, 2), 64 * 2 * 2)
    p["conv2_b"] = u(ks[5], (128,), 64 * 2 * 2)
    p["bn2_g"] = 1.0 + 0.1 * jax.random.normal(ks[6], (128,), jnp.float32)
    p["bn2_b"] = 0.1 * jax.random.normal(ks[7], (128,), jnp.float32)
    p["fc1_w"] = u(ks[8], (256, 2048), 2048)
    p["fc1_b"] = u(ks[9], (256,), 2048)
    p["adv_w"] = u(ks[10], (action_size, 256), 256)   # fc3_adv
    p["adv_b"] = u(ks[11], (action_size,), 256)
    p["v_w"] = u(ks[12], (1, 256), 256)                # fc3_v
    p["v_b"] = u(ks[13], (1,), 256)
    # NOTE: conv1maxp/conv2maxp/fc2/fc3/fc*bnorm exist in __init__ but are dead
    # code in forward(), so they are intentionally not materialized here.
    return p


# --------------------------------------------------------------------------
# References: exact f32 PyTorch semantics, plus a bf16-matmul twin of the kernel
# --------------------------------------------------------------------------
def _bn_train_nchw(y, g, b):
    mu = jnp.mean(y, axis=(0, 2, 3), keepdims=True)
    var = jnp.mean((y - mu) ** 2, axis=(0, 2, 3), keepdims=True)
    return ((y - mu) * lax.rsqrt(var + EPS)
            * g[None, :, None, None] + b[None, :, None, None])


def ref_forward_f32(params, x):
    dn = ("NCHW", "OIHW", "NCHW")
    y = lax.conv_general_dilated(x, params["conv1_w"], (11, 11), "VALID",
                                 dimension_numbers=dn)
    y = y + params["conv1_b"][None, :, None, None]
    y = jnp.maximum(_bn_train_nchw(y, params["bn1_g"], params["bn1_b"]), 0.0)
    y = lax.conv_general_dilated(y, params["conv2_w"], (2, 2), "VALID",
                                 dimension_numbers=dn)
    y = y + params["conv2_b"][None, :, None, None]
    y = jnp.maximum(_bn_train_nchw(y, params["bn2_g"], params["bn2_b"]), 0.0)
    flat = y.reshape(y.shape[0], -1)
    h = jnp.maximum(flat @ params["fc1_w"].T + params["fc1_b"], 0.0)
    adv = h @ params["adv_w"].T + params["adv_b"]
    val = h @ params["v_w"].T + params["v_b"]
    return val + adv - jnp.mean(adv, axis=1, keepdims=True)


def ref_forward_bf16(params, x):
    """Same math as PyTorch forward, but bf16 matmul operands / f32 accumulation
    (mirrors the kernel's MXU precision) -> tight-tolerance layout check."""
    dn = ("NCHW", "OIHW", "NCHW")
    bf = jnp.bfloat16
    y = lax.conv_general_dilated(x.astype(bf), params["conv1_w"].astype(bf),
                                 (11, 11), "VALID", dimension_numbers=dn,
                                 preferred_element_type=jnp.float32)
    y = y + params["conv1_b"][None, :, None, None]
    y = jnp.maximum(_bn_train_nchw(y, params["bn1_g"], params["bn1_b"]), 0.0)
    y = lax.conv_general_dilated(y.astype(bf), params["conv2_w"].astype(bf),
                                 (2, 2), "VALID", dimension_numbers=dn,
                                 preferred_element_type=jnp.float32)
    y = y + params["conv2_b"][None, :, None, None]
    y = jnp.maximum(_bn_train_nchw(y, params["bn2_g"], params["bn2_b"]), 0.0)
    flat = y.reshape(y.shape[0], -1)
    h = jnp.maximum(jnp.dot(flat.astype(bf), params["fc1_w"].T.astype(bf),
                            preferred_element_type=jnp.float32) + params["fc1_b"], 0.0)
    adv = jnp.dot(h.astype(bf), params["adv_w"].T.astype(bf),
                  preferred_element_type=jnp.float32) + params["adv_b"]
    val = jnp.dot(h.astype(bf), params["v_w"].T.astype(bf),
                  preferred_element_type=jnp.float32) + params["v_b"]
    return val + adv - jnp.mean(adv, axis=1, keepdims=True)


if __name__ == "__main__":
    key = jax.random.PRNGKey(0)
    pkey, xkey = jax.random.split(key)
    params = init_params(pkey, action_size=4)
    kparams = prep_params(params)

    # Smallest input consistent with the module (fc1 expects 2048 features).
    x = jax.random.normal(xkey, (2, 12, 84, 84), jnp.float32)

    out = jax.jit(ddqn_forward)(kparams, x)
    out = jax.block_until_ready(out)

    ref_q = ref_forward_bf16(params, x)   # tight check (layout/permutation bugs)
    ref_f = ref_forward_f32(params, x)    # semantic check vs exact f32 torch math
    if not bool(jnp.allclose(out, ref_q, rtol=2e-3, atol=2e-3)):
        raise SystemExit("Pallas output does not match bf16-matmul reference")
    if not bool(jnp.allclose(out, ref_f, rtol=3e-2, atol=3e-2)):
        raise SystemExit("Pallas output does not match f32 reference")

    print("KERNEL_OK")
</pallas_src>

<mosaic_0001>
module attributes {stable_mosaic.version = 11 : i64} {
  func.func @ddqn_fused_kernel(%arg0: memref<128x640xbf16, #tpu.memory_space<vmem>>, %arg1: memref<640x128xbf16, #tpu.memory_space<vmem>>, %arg2: memref<1x128xf32, #tpu.memory_space<vmem>>, %arg3: memref<1x128xf32, #tpu.memory_space<vmem>>, %arg4: memref<4x128x128xbf16, #tpu.memory_space<vmem>>, %arg5: memref<1x128xf32, #tpu.memory_space<vmem>>, %arg6: memref<1x128xf32, #tpu.memory_space<vmem>>, %arg7: memref<16x128x256xbf16, #tpu.memory_space<vmem>>, %arg8: memref<1x256xf32, #tpu.memory_space<vmem>>, %arg9: memref<256x5xbf16, #tpu.memory_space<vmem>>, %arg10: memref<1x5xf32, #tpu.memory_space<vmem>>, %arg11: memref<2x4xf32, #tpu.memory_space<vmem>>, %arg12: memref<32x128xf32, #tpu.memory_space<vmem>>) attributes {dimension_semantics = [], scalar_prefetch = 0 : i64, scratch_operands = 1 : i64, tpu.core_type = #tpu.core_type<tc>} {
    %c0 = arith.constant 0 : index
    %c0_0 = arith.constant 0 : index
    %0 = vector.load %arg0[%c0, %c0_0] : memref<128x640xbf16, #tpu.memory_space<vmem>>, vector<128x640xbf16>
    %c0_1 = arith.constant 0 : index
    %c0_2 = arith.constant 0 : index
    %1 = vector.load %arg1[%c0_1, %c0_2] : memref<640x128xbf16, #tpu.memory_space<vmem>>, vector<640x128xbf16>
    %cst = arith.constant dense<0.000000e+00> : vector<128x128xf32>
    %2 = tpu.matmul %0, %1, %cst {dimension_numbers = #tpu.dot_dimension_numbers<[1], [0], [0], [1], [0, 0, 1, 1], [], []>} : vector<128x640xbf16>, vector<640x128xbf16>, vector<128x128xf32> -> vector<128x128xf32>
    %c0_3 = arith.constant 0 : index
    %c0_4 = arith.constant 0 : index
    %3 = vector.load %arg2[%c0_3, %c0_4] : memref<1x128xf32, #tpu.memory_space<vmem>>, vector<1x128xf32>
    %c0_5 = arith.constant 0 : index
    %c0_6 = arith.constant 0 : index
    %4 = vector.load %arg3[%c0_5, %c0_6] : memref<1x128xf32, #tpu.memory_space<vmem>>, vector<1x128xf32>
    %cst_7 = arith.constant dense<0.000000e+00> : vector<128xf32>
    %5 = vector.multi_reduction <add>, %2, %cst_7 [0] : vector<128x128xf32> to vector<128xf32>
    %6 = vector.shape_cast %5 : vector<128xf32> to vector<1x128xf32>
    %7 = arith.mulf %2, %2 : vector<128x128xf32>
    %cst_8 = arith.constant dense<0.000000e+00> : vector<128xf32>
    %8 = vector.multi_reduction <add>, %7, %cst_8 [0] : vector<128x128xf32> to vector<128xf32>
    %9 = vector.shape_cast %8 : vector<128xf32> to vector<1x128xf32>
    %cst_9 = arith.constant 7.812500e-03 : f32
    %10 = vector.broadcast %cst_9 : f32 to vector<1x128xf32>
    %11 = arith.mulf %6, %10 : vector<1x128xf32>
    %cst_10 = arith.constant 7.812500e-03 : f32
    %12 = vector.broadcast %cst_10 : f32 to vector<1x128xf32>
    %13 = arith.mulf %9, %12 : vector<1x128xf32>
    %14 = arith.mulf %11, %11 : vector<1x128xf32>
    %15 = arith.subf %13, %14 : vector<1x128xf32>
    %cst_11 = arith.constant 0.000000e+00 : f32
    %16 = vector.broadcast %cst_11 : f32 to vector<1x128xf32>
    %17 = arith.maximumf %15, %16 : vector<1x128xf32>
    %cst_12 = arith.constant 9.99999974E-6 : f32
    %18 = vector.broadcast %cst_12 : f32 to vector<1x128xf32>
    %19 = arith.addf %17, %18 : vector<1x128xf32>
    %20 = math.rsqrt %19 : vector<1x128xf32>
    %21 = arith.mulf %20, %3 : vector<1x128xf32>
    %22 = arith.mulf %11, %21 : vector<1x128xf32>
    %23 = arith.subf %4, %22 : vector<1x128xf32>
    %24 = vector.broadcast %21 : vector<1x128xf32> to vector<128x128xf32>
    %25 = arith.mulf %2, %24 : vector<128x128xf32>
    %26 = vector.broadcast %23 : vector<1x128xf32> to vector<128x128xf32>
    %27 = arith.addf %25, %26 : vector<128x128xf32>
    %cst_13 = arith.constant 0.000000e+00 : f32
    %28 = vector.broadcast %cst_13 : f32 to vector<128x128xf32>
    %29 = arith.maximumf %27, %28 : vector<128x128xf32>
    %30 = vector.extract_strided_slice %29 {offsets = [0, 0], sizes = [32, 128], strides = [1, 1]} : vector<128x128xf32> to vector<32x128xf32>
    %31 = arith.truncf %30 : vector<32x128xf32> to vector<32x128xbf16>
    %c0_14 = arith.constant 0 : index
    %c0_15 = arith.constant 0 : index
    %c0_16 = arith.constant 0 : index
    %32 = vector.load %arg4[%c0_14, %c0_15, %c0_16] : memref<4x128x128xbf16, #tpu.memory_space<vmem>>, vector<1x128x128xbf16>
    %33 = vector.shape_cast %32 : vector<1x128x128xbf16> to vector<128x128xbf16>
    %cst_17 = arith.constant dense<0.000000e+00> : vector<32x128xf32>
    %34 = tpu.matmul %31, %33, %cst_17 {dimension_numbers = #tpu.dot_dimension_numbers<[1], [0], [0], [1], [0, 0, 1, 1], [], []>} : vector<32x128xbf16>, vector<128x128xbf16>, vector<32x128xf32> -> vector<32x128xf32>
    %35 = vector.extract_strided_slice %29 {offsets = [32, 0], sizes = [32, 128], strides = [1, 1]} : vector<128x128xf32> to vector<32x128xf32>
    %36 = arith.truncf %35 : vector<32x128xf32> to vector<32x128xbf16>
    %c1 = arith.constant 1 : index
    %c0_18 = arith.constant 0 : index
    %c0_19 = arith.constant 0 : index
    %37 = vector.load %arg4[%c1, %c0_18, %c0_19] : memref<4x128x128xbf16, #tpu.memory_space<vmem>>, vector<1x128x128xbf16>
    %38 = vector.shape_cast %37 : vector<1x128x128xbf16> to vector<128x128xbf16>
    %cst_20 = arith.constant dense<0.000000e+00> : vector<32x128xf32>
    %39 = tpu.matmul %36, %38, %cst_20 {dimension_numbers = #tpu.dot_dimension_numbers<[1], [0], [0], [1], [0, 0, 1, 1], [], []>} : vector<32x128xbf16>, vector<128x128xbf16>, vector<32x128xf32> -> vector<32x128xf32>
    %40 = arith.addf %34, %39 : vector<32x128xf32>
    %41 = vector.extract_strided_slice %29 {offsets = [64, 0], sizes = [32, 128], strides = [1, 1]} : vector<128x128xf32> to vector<32x128xf32>
    %42 = arith.truncf %41 : vector<32x128xf32> to vector<32x128xbf16>
    %c2 = arith.constant 2 : index
    %c0_21 = arith.constant 0 : index
    %c0_22 = arith.constant 0 : index
    %43 = vector.load %arg4[%c2, %c0_21, %c0_22] : memref<4x128x128xbf16, #tpu.memory_space<vmem>>, vector<1x128x128xbf16>
    %44 = vector.shape_cast %43 : vector<1x128x128xbf16> to vector<128x128xbf16>
    %cst_23 = arith.constant dense<0.000000e+00> : vector<32x128xf32>
    %45 = tpu.matmul %42, %44, %cst_23 {dimension_numbers = #tpu.dot_dimension_numbers<[1], [0], [0], [1], [0, 0, 1, 1], [], []>} : vector<32x128xbf16>, vector<128x128xbf16>, vector<32x128xf32> -> vector<32x128xf32>
    %46 = arith.addf %40, %45 : vector<32x128xf32>
    %47 = vector.extract_strided_slice %29 {offsets = [96, 0], sizes = [32, 128], strides = [1, 1]} : vector<128x128xf32> to vector<32x128xf32>
    %48 = arith.truncf %47 : vector<32x128xf32> to vector<32x128xbf16>
    %c3 = arith.constant 3 : index
    %c0_24 = arith.constant 0 : index
    %c0_25 = arith.constant 0 : index
    %49 = vector.load %arg4[%c3, %c0_24, %c0_25] : memref<4x128x128xbf16, #tpu.memory_space<vmem>>, vector<1x128x128xbf16>
    %50 = vector.shape_cast %49 : vector<1x128x128xbf16> to vector<128x128xbf16>
    %cst_26 = arith.constant dense<0.000000e+00> : vector<32x128xf32>
    %51 = tpu.matmul %48, %50, %cst_26 {dimension_numbers = #tpu.dot_dimension_numbers<[1], [0], [0], [1], [0, 0, 1, 1], [], []>} : vector<32x128xbf16>, vector<128x128xbf16>, vector<32x128xf32> -> vector<32x128xf32>
    %52 = arith.addf %46, %51 : vector<32x128xf32>
    %c0_27 = arith.constant 0 : index
    %c0_28 = arith.constant 0 : index
    %53 = vector.load %arg5[%c0_27, %c0_28] : memref<1x128xf32, #tpu.memory_space<vmem>>, vector<1x128xf32>
    %c0_29 = arith.constant 0 : index
    %c0_30 = arith.constant 0 : index
    %54 = vector.load %arg6[%c0_29, %c0_30] : memref<1x128xf32, #tpu.memory_space<vmem>>, vector<1x128xf32>
    %cst_31 = arith.constant dense<0.000000e+00> : vector<128xf32>
    %55 = vector.multi_reduction <add>, %52, %cst_31 [0] : vector<32x128xf32> to vector<128xf32>
    %56 = vector.shape_cast %55 : vector<128xf32> to vector<1x128xf32>
    %57 = arith.mulf %52, %52 : vector<32x128xf32>
    %cst_32 = arith.constant dense<0.000000e+00> : vector<128xf32>
    %58 = vector.multi_reduction <add>, %57, %cst_32 [0] : vector<32x128xf32> to vector<128xf32>
    %59 = vector.shape_cast %58 : vector<128xf32> to vector<1x128xf32>
    %cst_33 = arith.constant 3.125000e-02 : f32
    %60 = vector.broadcast %cst_33 : f32 to vector<1x128xf32>
    %61 = arith.mulf %56, %60 : vector<1x128xf32>
    %cst_34 = arith.constant 3.125000e-02 : f32
    %62 = vector.broadcast %cst_34 : f32 to vector<1x128xf32>
    %63 = arith.mulf %59, %62 : vector<1x128xf32>
    %64 = arith.mulf %61, %61 : vector<1x128xf32>
    %65 = arith.subf %63, %64 : vector<1x128xf32>
    %cst_35 = arith.constant 0.000000e+00 : f32
    %66 = vector.broadcast %cst_35 : f32 to vector<1x128xf32>
    %67 = arith.maximumf %65, %66 : vector<1x128xf32>
    %cst_36 = arith.constant 9.99999974E-6 : f32
    %68 = vector.broadcast %cst_36 : f32 to vector<1x128xf32>
    %69 = arith.addf %67, %68 : vector<1x128xf32>
    %70 = math.rsqrt %69 : vector<1x128xf32>
    %71 = arith.mulf %70, %53 : vector<1x128xf32>
    %72 = arith.mulf %61, %71 : vector<1x128xf32>
    %73 = arith.subf %54, %72 : vector<1x128xf32>
    %74 = vector.broadcast %71 : vector<1x128xf32> to vector<32x128xf32>
    %75 = arith.mulf %52, %74 : vector<32x128xf32>
    %76 = vector.broadcast %73 : vector<1x128xf32> to vector<32x128xf32>
    %77 = arith.addf %75, %76 : vector<32x128xf32>
    %cst_37 = arith.constant 0.000000e+00 : f32
    %78 = vector.broadcast %cst_37 : f32 to vector<32x128xf32>
    %79 = arith.maximumf %77, %78 : vector<32x128xf32>
    %c0_38 = arith.constant 0 : index
    %c0_39 = arith.constant 0 : index
    %80 = vector.load %arg12[%c0_38, %c0_39] : memref<32x128xf32, #tpu.memory_space<vmem>>, vector<32x128xf32>
    tpu.vector_store %arg12[%c0_38, %c0_39], %79 {strides = array<i32>} : memref<32x128xf32, #tpu.memory_space<vmem>>, vector<32x128xf32>,
    %c0_40 = arith.constant 0 : index
    %c0_41 = arith.constant 0 : index
    %81 = vector.load %arg12[%c0_40, %c0_41] : memref<32x128xf32, #tpu.memory_space<vmem>>, vector<2x128xf32>
    %82 = arith.truncf %81 : vector<2x128xf32> to vector<2x128xbf16>
    %c0_42 = arith.constant 0 : index
    %c0_43 = arith.constant 0 : index
    %c0_44 = arith.constant 0 : index
    %83 = vector.load %arg7[%c0_42, %c0_43, %c0_44] : memref<16x128x256xbf16, #tpu.memory_space<vmem>>, vector<1x128x256xbf16>
    %84 = vector.shape_cast %83 : vector<1x128x256xbf16> to vector<128x256xbf16>
    %cst_45 = arith.constant dense<0.000000e+00> : vector<2x256xf32>
    %85 = tpu.matmul %82, %84, %cst_45 {dimension_numbers = #tpu.dot_dimension_numbers<[1], [0], [0], [1], [0, 0, 1, 1], [], []>} : vector<2x128xbf16>, vector<128x256xbf16>, vector<2x256xf32> -> vector<2x256xf32>
    %c2_46 = arith.constant 2 : index
    %c0_47 = arith.constant 0 : index
    %86 = vector.load %arg12[%c2_46, %c0_47] : memref<32x128xf32, #tpu.memory_space<vmem>>, vector<2x128xf32>
    %87 = arith.truncf %86 : vector<2x128xf32> to vector<2x128xbf16>
    %c1_48 = arith.constant 1 : index
    %c0_49 = arith.constant 0 : index
    %c0_50 = arith.constant 0 : index
    %88 = vector.load %arg7[%c1_48, %c0_49, %c0_50] : memref<16x128x256xbf16, #tpu.memory_space<vmem>>, vector<1x128x256xbf16>
    %89 = vector.shape_cast %88 : vector<1x128x256xbf16> to vector<128x256xbf16>
    %cst_51 = arith.constant dense<0.000000e+00> : vector<2x256xf32>
    %90 = tpu.matmul %87, %89, %cst_51 {dimension_numbers = #tpu.dot_dimension_numbers<[1], [0], [0], [1], [0, 0, 1, 1], [], []>} : vector<2x128xbf16>, vector<128x256xbf16>, vector<2x256xf32> -> vector<2x256xf32>
    %91 = arith.addf %85, %90 : vector<2x256xf32>
    %c4 = arith.constant 4 : index
    %c0_52 = arith.constant 0 : index
    %92 = vector.load %arg12[%c4, %c0_52] : memref<32x128xf32, #tpu.memory_space<vmem>>, vector<2x128xf32>
    %93 = arith.truncf %92 : vector<2x128xf32> to vector<2x128xbf16>
    %c2_53 = arith.constant 2 : index
    %c0_54 = arith.constant 0 : index
    %c0_55 = arith.constant 0 : index
    %94 = vector.load %arg7[%c2_53, %c0_54, %c0_55] : memref<16x128x256xbf16, #tpu.memory_space<vmem>>, vector<1x128x256xbf16>
    %95 = vector.shape_cast %94 : vector<1x128x256xbf16> to vector<128x256xbf16>
    %cst_56 = arith.constant dense<0.000000e+00> : vector<2x256xf32>
    %96 = tpu.matmul %93, %95, %cst_56 {dimension_numbers = #tpu.dot_dimension_numbers<[1], [0], [0], [1], [0, 0, 1, 1], [], []>} : vector<2x128xbf16>, vector<128x256xbf16>, vector<2x256xf32> -> vector<2x256xf32>
    %97 = arith.addf %91, %96 : vector<2x256xf32>
    %c6 = arith.constant 6 : index
    %c0_57 = arith.constant 0 : index
    %98 = vector.load %arg12[%c6, %c0_57] : memref<32x128xf32, #tpu.memory_space<vmem>>, vector<2x128xf32>
    %99 = arith.truncf %98 : vector<2x128xf32> to vector<2x128xbf16>
    %c3_58 = arith.constant 3 : index
    %c0_59 = arith.constant 0 : index
    %c0_60 = arith.constant 0 : index
    %100 = vector.load %arg7[%c3_58, %c0_59, %c0_60] : memref<16x128x256xbf16, #tpu.memory_space<vmem>>, vector<1x128x256xbf16>
    %101 = vector.shape_cast %100 : vector<1x128x256xbf16> to vector<128x256xbf16>
    %cst_61 = arith.constant dense<0.000000e+00> : vector<2x256xf32>
    %102 = tpu.matmul %99, %101, %cst_61 {dimension_numbers = #tpu.dot_dimension_numbers<[1], [0], [0], [1], [0, 0, 1, 1], [], []>} : vector<2x128xbf16>, vector<128x256xbf16>, vector<2x256xf32> -> vector<2x256xf32>
    %103 = arith.addf %97, %102 : vector<2x256xf32>
    %c8 = arith.constant 8 : index
    %c0_62 = arith.constant 0 : index
    %104 = vector.load %arg12[%c8, %c0_62] : memref<32x128xf32, #tpu.memory_space<vmem>>, vector<2x128xf32>
    %105 = arith.truncf %104 : vector<2x128xf32> to vector<2x128xbf16>
    %c4_63 = arith.constant 4 : index
    %c0_64 = arith.constant 0 : index
    %c0_65 = arith.constant 0 : index
    %106 = vector.load %arg7[%c4_63, %c0_64, %c0_65] : memref<16x128x256xbf16, #tpu.memory_space<vmem>>, vector<1x128x256xbf16>
    %107 = vector.shape_cast %106 : vector<1x128x256xbf16> to vector<128x256xbf16>
    %cst_66 = arith.constant dense<0.000000e+00> : vector<2x256xf32>
    %108 = tpu.matmul %105, %107, %cst_66 {dimension_numbers = #tpu.dot_dimension_numbers<[1], [0], [0], [1], [0, 0, 1, 1], [], []>} : vector<2x128xbf16>, vector<128x256xbf16>, vector<2x256xf32> -> vector<2x256xf32>
    %109 = arith.addf %103, %108 : vector<2x256xf32>
    %c10 = arith.constant 10 : index
    %c0_67 = arith.constant 0 : index
    %110 = vector.load %arg12[%c10, %c0_67] : memref<32x128xf32, #tpu.memory_space<vmem>>, vector<2x128xf32>
    %111 = arith.truncf %110 : vector<2x128xf32> to vector<2x128xbf16>
    %c5 = arith.constant 5 : index
    %c0_68 = arith.constant 0 : index
    %c0_69 = arith.constant 0 : index
    %112 = vector.load %arg7[%c5, %c0_68, %c0_69] : memref<16x128x256xbf16, #tpu.memory_space<vmem>>, vector<1x128x256xbf16>
    %113 = vector.shape_cast %112 : vector<1x128x256xbf16> to vector<128x256xbf16>
    %cst_70 = arith.constant dense<0.000000e+00> : vector<2x256xf32>
    %114 = tpu.matmul %111, %113, %cst_70 {dimension_numbers = #tpu.dot_dimension_numbers<[1], [0], [0], [1], [0, 0, 1, 1], [], []>} : vector<2x128xbf16>, vector<128x256xbf16>, vector<2x256xf32> -> vector<2x256xf32>
    %115 = arith.addf %109, %114 : vector<2x256xf32>
    %c12 = arith.constant 12 : index
    %c0_71 = arith.constant 0 : index
    %116 = vector.load %arg12[%c12, %c0_71] : memref<32x128xf32, #tpu.memory_space<vmem>>, vector<2x128xf32>
    %117 = arith.truncf %116 : vector<2x128xf32> to vector<2x128xbf16>
    %c6_72 = arith.constant 6 : index
    %c0_73 = arith.constant 0 : index
    %c0_74 = arith.constant 0 : index
    %118 = vector.load %arg7[%c6_72, %c0_73, %c0_74] : memref<16x128x256xbf16, #tpu.memory_space<vmem>>, vector<1x128x256xbf16>
    %119 = vector.shape_cast %118 : vector<1x128x256xbf16> to vector<128x256xbf16>
    %cst_75 = arith.constant dense<0.000000e+00> : vector<2x256xf32>
    %120 = tpu.matmul %117, %119, %cst_75 {dimension_numbers = #tpu.dot_dimension_numbers<[1], [0], [0], [1], [0, 0, 1, 1], [], []>} : vector<2x128xbf16>, vector<128x256xbf16>, vector<2x256xf32> -> vector<2x256xf32>
    %121 = arith.addf %115, %120 : vector<2x256xf32>
    %c14 = arith.constant 14 : index
    %c0_76 = arith.constant 0 : index
    %122 = vector.load %arg12[%c14, %c0_76] : memref<32x128xf32, #tpu.memory_space<vmem>>, vector<2x128xf32>
    %123 = arith.truncf %122 : vector<2x128xf32> to vector<2x128xbf16>
    %c7 = arith.constant 7 : index
    %c0_77 = arith.constant 0 : index
    %c0_78 = arith.constant 0 : index
    %124 = vector.load %arg7[%c7, %c0_77, %c0_78] : memref<16x128x256xbf16, #tpu.memory_space<vmem>>, vector<1x128x256xbf16>
    %125 = vector.shape_cast %124 : vector<1x128x256xbf16> to vector<128x256xbf16>
    %cst_79 = arith.constant dense<0.000000e+00> : vector<2x256xf32>
    %126 = tpu.matmul %123, %125, %cst_79 {dimension_numbers = #tpu.dot_dimension_numbers<[1], [0], [0], [1], [0, 0, 1, 1], [], []>} : vector<2x128xbf16>, vector<128x256xbf16>, vector<2x256xf32> -> vector<2x256xf32>
    %127 = arith.addf %121, %126 : vector<2x256xf32>
    %c16 = arith.constant 16 : index
    %c0_80 = arith.constant 0 : index
    %128 = vector.load %arg12[%c16, %c0_80] : memref<32x128xf32, #tpu.memory_space<vmem>>, vector<2x128xf32>
    %129 = arith.truncf %128 : vector<2x128xf32> to vector<2x128xbf16>
    %c8_81 = arith.constant 8 : index
    %c0_82 = arith.constant 0 : index
    %c0_83 = arith.constant 0 : index
    %130 = vector.load %arg7[%c8_81, %c0_82, %c0_83] : memref<16x128x256xbf16, #tpu.memory_space<vmem>>, vector<1x128x256xbf16>
    %131 = vector.shape_cast %130 : vector<1x128x256xbf16> to vector<128x256xbf16>
    %cst_84 = arith.constant dense<0.000000e+00> : vector<2x256xf32>
    %132 = tpu.matmul %129, %131, %cst_84 {dimension_numbers = #tpu.dot_dimension_numbers<[1], [0], [0], [1], [0, 0, 1, 1], [], []>} : vector<2x128xbf16>, vector<128x256xbf16>, vector<2x256xf32> -> vector<2x256xf32>
    %133 = arith.addf %127, %132 : vector<2x256xf32>
    %c18 = arith.constant 18 : index
    %c0_85 = arith.constant 0 : index
    %134 = vector.load %arg12[%c18, %c0_85] : memref<32x128xf32, #tpu.memory_space<vmem>>, vector<2x128xf32>
    %135 = arith.truncf %134 : vector<2x128xf32> to vector<2x128xbf16>
    %c9 = arith.constant 9 : index
    %c0_86 = arith.constant 0 : index
    %c0_87 = arith.constant 0 : index
    %136 = vector.load %arg7[%c9, %c0_86, %c0_87] : memref<16x128x256xbf16, #tpu.memory_space<vmem>>, vector<1x128x256xbf16>
    %137 = vector.shape_cast %136 : vector<1x128x256xbf16> to vector<128x256xbf16>
    %cst_88 = arith.constant dense<0.000000e+00> : vector<2x256xf32>
    %138 = tpu.matmul %135, %137, %cst_88 {dimension_numbers = #tpu.dot_dimension_numbers<[1], [0], [0], [1], [0, 0, 1, 1], [], []>} : vector<2x128xbf16>, vector<128x256xbf16>, vector<2x256xf32> -> vector<2x256xf32>
    %139 = arith.addf %133, %138 : vector<2x256xf32>
    %c20 = arith.constant 20 : index
    %c0_89 = arith.constant 0 : index
    %140 = vector.load %arg12[%c20, %c0_89] : memref<32x128xf32, #tpu.memory_space<vmem>>, vector<2x128xf32>
    %141 = arith.truncf %140 : vector<2x128xf32> to vector<2x128xbf16>
    %c10_90 = arith.constant 10 : index
    %c0_91 = arith.constant 0 : index
    %c0_92 = arith.constant 0 : index
    %142 = vector.load %arg7[%c10_90, %c0_91, %c0_92] : memref<16x128x256xbf16, #tpu.memory_space<vmem>>, vector<1x128x256xbf16>
    %143 = vector.shape_cast %142 : vector<1x128x256xbf16> to vector<128x256xbf16>
    %cst_93 = arith.constant dense<0.000000e+00> : vector<2x256xf32>
    %144 = tpu.matmul %141, %143, %cst_93 {dimension_numbers = #tpu.dot_dimension_numbers<[1], [0], [0], [1], [0, 0, 1, 1], [], []>} : vector<2x128xbf16>, vector<128x256xbf16>, vector<2x256xf32> -> vector<2x256xf32>
    %145 = arith.addf %139, %144 : vector<2x256xf32>
    %c22 = arith.constant 22 : index
    %c0_94 = arith.constant 0 : index
    %146 = vector.load %arg12[%c22, %c0_94] : memref<32x128xf32, #tpu.memory_space<vmem>>, vector<2x128xf32>
    %147 = arith.truncf %146 : vector<2x128xf32> to vector<2x128xbf16>
    %c11 = arith.constant 11 : index
    %c0_95 = arith.constant 0 : index
    %c0_96 = arith.constant 0 : index
    %148 = vector.load %arg7[%c11, %c0_95, %c0_96] : memref<16x128x256xbf16, #tpu.memory_space<vmem>>, vector<1x128x256xbf16>
    %149 = vector.shape_cast %148 : vector<1x128x256xbf16> to vector<128x256xbf16>
    %cst_97 = arith.constant dense<0.000000e+00> : vector<2x256xf32>
    %150 = tpu.matmul %147, %149, %cst_97 {dimension_numbers = #tpu.dot_dimension_numbers<[1], [0], [0], [1], [0, 0, 1, 1], [], []>} : vector<2x128xbf16>, vector<128x256xbf16>, vector<2x256xf32> -> vector<2x256xf32>
    %151 = arith.addf %145, %150 : vector<2x256xf32>
    %c24 = arith.constant 24 : index
    %c0_98 = arith.constant 0 : index
    %152 = vector.load %arg12[%c24, %c0_98] : memref<32x128xf32, #tpu.memory_space<vmem>>, vector<2x128xf32>
    %153 = arith.truncf %152 : vector<2x128xf32> to vector<2x128xbf16>
    %c12_99 = arith.constant 12 : index
    %c0_100 = arith.constant 0 : index
    %c0_101 = arith.constant 0 : index
    %154 = vector.load %arg7[%c12_99, %c0_100, %c0_101] : memref<16x128x256xbf16, #tpu.memory_space<vmem>>, vector<1x128x256xbf16>
    %155 = vector.shape_cast %154 : vector<1x128x256xbf16> to vector<128x256xbf16>
    %cst_102 = arith.constant dense<0.000000e+00> : vector<2x256xf32>
    %156 = tpu.matmul %153, %155, %cst_102 {dimension_numbers = #tpu.dot_dimension_numbers<[1], [0], [0], [1], [0, 0, 1, 1], [], []>} : vector<2x128xbf16>, vector<128x256xbf16>, vector<2x256xf32> -> vector<2x256xf32>
    %157 = arith.addf %151, %156 : vector<2x256xf32>
    %c26 = arith.constant 26 : index
    %c0_103 = arith.constant 0 : index
    %158 = vector.load %arg12[%c26, %c0_103] : memref<32x128xf32, #tpu.memory_space<vmem>>, vector<2x128xf32>
    %159 = arith.truncf %158 : vector<2x128xf32> to vector<2x128xbf16>
    %c13 = arith.constant 13 : index
    %c0_104 = arith.constant 0 : index
    %c0_105 = arith.constant 0 : index
    %160 = vector.load %arg7[%c13, %c0_104, %c0_105] : memref<16x128x256xbf16, #tpu.memory_space<vmem>>, vector<1x128x256xbf16>
    %161 = vector.shape_cast %160 : vector<1x128x256xbf16> to vector<128x256xbf16>
    %cst_106 = arith.constant dense<0.000000e+00> : vector<2x256xf32>
    %162 = tpu.matmul %159, %161, %cst_106 {dimension_numbers = #tpu.dot_dimension_numbers<[1], [0], [0], [1], [0, 0, 1, 1], [], []>} : vector<2x128xbf16>, vector<128x256xbf16>, vector<2x256xf32> -> vector<2x256xf32>
    %163 = arith.addf %157, %162 : vector<2x256xf32>
    %c28 = arith.constant 28 : index
    %c0_107 = arith.constant 0 : index
    %164 = vector.load %arg12[%c28, %c0_107] : memref<32x128xf32, #tpu.memory_space<vmem>>, vector<2x128xf32>
    %165 = arith.truncf %164 : vector<2x128xf32> to vector<2x128xbf16>
    %c14_108 = arith.constant 14 : index
    %c0_109 = arith.constant 0 : index
    %c0_110 = arith.constant 0 : index
    %166 = vector.load %arg7[%c14_108, %c0_109, %c0_110] : memref<16x128x256xbf16, #tpu.memory_space<vmem>>, vector<1x128x256xbf16>
    %167 = vector.shape_cast %166 : vector<1x128x256xbf16> to vector<128x256xbf16>
    %cst_111 = arith.constant dense<0.000000e+00> : vector<2x256xf32>
    %168 = tpu.matmul %165, %167, %cst_111 {dimension_numbers = #tpu.dot_dimension_numbers<[1], [0], [0], [1], [0, 0, 1, 1], [], []>} : vector<2x128xbf16>, vector<128x256xbf16>, vector<2x256xf32> -> vector<2x256xf32>
    %169 = arith.addf %163, %168 : vector<2x256xf32>
    %c30 = arith.constant 30 : index
    %c0_112 = arith.constant 0 : index
    %170 = vector.load %arg12[%c30, %c0_112] : memref<32x128xf32, #tpu.memory_space<vmem>>, vector<2x128xf32>
    %171 = arith.truncf %170 : vector<2x128xf32> to vector<2x128xbf16>
    %c15 = arith.constant 15 : index
    %c0_113 = arith.constant 0 : index
    %c0_114 = arith.constant 0 : index
    %172 = vector.load %arg7[%c15, %c0_113, %c0_114] : memref<16x128x256xbf16, #tpu.memory_space<vmem>>, vector<1x128x256xbf16>
    %173 = vector.shape_cast %172 : vector<1x128x256xbf16> to vector<128x256xbf16>
    %cst_115 = arith.constant dense<0.000000e+00> : vector<2x256xf32>
    %174 = tpu.matmul %171, %173, %cst_115 {dimension_numbers = #tpu.dot_dimension_numbers<[1], [0], [0], [1], [0, 0, 1, 1], [], []>} : vector<2x128xbf16>, vector<128x256xbf16>, vector<2x256xf32> -> vector<2x256xf32>
    %175 = arith.addf %169, %174 : vector<2x256xf32>
    %c0_116 = arith.constant 0 : index
    %c0_117 = arith.constant 0 : index
    %176 = vector.load %arg8[%c0_116, %c0_117] : memref<1x256xf32, #tpu.memory_space<vmem>>, vector<1x256xf32>
    %177 = vector.broadcast %176 : vector<1x256xf32> to vector<2x256xf32>
    %178 = arith.addf %175, %177 : vector<2x256xf32>
    %cst_118 = arith.constant 0.000000e+00 : f32
    %179 = vector.broadcast %cst_118 : f32 to vector<2x256xf32>
    %180 = arith.maximumf %178, %179 : vector<2x256xf32>
    %181 = arith.truncf %180 : vector<2x256xf32> to vector<2x256xbf16>
    %c0_119 = arith.constant 0 : index
    %c0_120 = arith.constant 0 : index
    %182 = vector.load %arg9[%c0_119, %c0_120] : memref<256x5xbf16, #tpu.memory_space<vmem>>, vector<256x5xbf16>
    %cst_121 = arith.constant dense<0.000000e+00> : vector<2x5xf32>
    %183 = tpu.matmul %181, %182, %cst_121 {dimension_numbers = #tpu.dot_dimension_numbers<[1], [0], [0], [1], [0, 0, 1, 1], [], []>} : vector<2x256xbf16>, vector<256x5xbf16>, vector<2x5xf32> -> vector<2x5xf32>
    %c0_122 = arith.constant 0 : index
    %c0_123 = arith.constant 0 : index
    %184 = vector.load %arg10[%c0_122, %c0_123] : memref<1x5xf32, #tpu.memory_space<vmem>>, vector<1x5xf32>
    %185 = vector.broadcast %184 : vector<1x5xf32> to vector<2x5xf32>
    %186 = arith.addf %183, %185 : vector<2x5xf32>
    %187 = tpu.iota {dimensions = array<i32: 1>} : vector<2x5xi32>
    %c4_i32 = arith.constant 4 : i32
    %188 = vector.broadcast %c4_i32 : i32 to vector<2x5xi32>
    %189 = arith.cmpi eq, %187, %188 : vector<2x5xi32>
    %cst_124 = arith.constant 0.000000e+00 : f32
    %190 = vector.broadcast %cst_124 : f32 to vector<2x5xf32>
    %191 = arith.select %189, %186, %190 : vector<2x5xi1>, vector<2x5xf32>
    %cst_125 = arith.constant dense<0.000000e+00> : vector<2xf32>
    %192 = vector.multi_reduction <add>, %191, %cst_125 [1] : vector<2x5xf32> to vector<2xf32>
    %193 = vector.shape_cast %192 : vector<2xf32> to vector<2x1xf32>
    %cst_126 = arith.constant 0.000000e+00 : f32
    %194 = vector.broadcast %cst_126 : f32 to vector<2x5xf32>
    %195 = arith.select %189, %194, %186 : vector<2x5xi1>, vector<2x5xf32>
    %cst_127 = arith.constant dense<0.000000e+00> : vector<2xf32>
    %196 = vector.multi_reduction <add>, %195, %cst_127 [1] : vector<2x5xf32> to vector<2xf32>
    %197 = vector.shape_cast %196 : vector<2xf32> to vector<2x1xf32>
    %cst_128 = arith.constant 2.500000e-01 : f32
    %198 = vector.broadcast %cst_128 : f32 to vector<2x1xf32>
    %199 = arith.mulf %197, %198 : vector<2x1xf32>
    %200 = vector.extract_strided_slice %186 {offsets = [0, 0], sizes = [2, 4], strides = [1, 1]} : vector<2x5xf32> to vector<2x4xf32>
    %201 = vector.broadcast %193 : vector<2x1xf32> to vector<2x4xf32>
    %202 = arith.addf %200, %201 : vector<2x4xf32>
    %203 = vector.broadcast %199 : vector<2x1xf32> to vector<2x4xf32>
    %204 = arith.subf %202, %203 : vector<2x4xf32>
    %c0_129 = arith.constant 0 : index
    %c0_130 = arith.constant 0 : index
    %205 = vector.load %arg11[%c0_129, %c0_130] : memref<2x4xf32, #tpu.memory_space<vmem>>, vector<2x4xf32>
    tpu.vector_store %arg11[%c0_129, %c0_130], %204 {strides = array<i32>} : memref<2x4xf32, #tpu.memory_space<vmem>>, vector<2x4xf32>,
    return
  }
}

</mosaic_0001>

<llo_original>
// kernel: ddqn_forward.1
$region0: #{ddqn_forward.1}
  #allocation0 [shape = 'u32[]', space=smem, size = 0x4, offset = 0x4, fixed_abs, tag = 'smem constant byte address 0x4 - core index']
  #allocation1 [shape = 'u32[144,128]{1,0:T(1,128)}', space=vmem, size = 0x12000, scoped, tag = 'internal scratch']
  #allocation2 [shape = 'f32[32,128]{1,0:T(8,128)}', space=vmem, size = 0x4000, scoped, tag = 'scratch operand']
  %s0 = inlined_call_operand.vmem [shape: bf16[128,640], index: 0, kind: input, shape index: {}]
  %s1 = inlined_call_operand.vmem [shape: bf16[640,128], index: 1, kind: input, shape index: {}]
  %s2 = inlined_call_operand.vmem [shape: f32[1,128], index: 2, kind: input, shape index: {}]
  %s3 = inlined_call_operand.vmem [shape: f32[1,128], index: 3, kind: input, shape index: {}]
  %s4 = inlined_call_operand.vmem [shape: bf16[4,128,128], index: 4, kind: input, shape index: {}]
  %s5 = inlined_call_operand.vmem [shape: f32[1,128], index: 5, kind: input, shape index: {}]
  %s6 = inlined_call_operand.vmem [shape: f32[1,128], index: 6, kind: input, shape index: {}]
  %s7 = inlined_call_operand.vmem [shape: bf16[16,128,256], index: 7, kind: input, shape index: {}]
  %s8 = inlined_call_operand.vmem [shape: f32[1,256], index: 8, kind: input, shape index: {}]
  %s9 = inlined_call_operand.vmem [shape: bf16[256,5], index: 9, kind: input, shape index: {}]
  %s10 = inlined_call_operand.vmem [shape: f32[1,5], index: 10, kind: input, shape index: {}]
  %s11 = inlined_call_operand.hbm [shape: f32[2,4], index: 11, kind: output, shape index: {}]
  %s12 = sld [smem:[#allocation0]]
  $region54: #{ddqn_forward.1} parent=0
    _
  %s14 = ssub.s32 1, %s12
  %s15 = scalar_select 0, %s14, %s12
  $region1: #{ddqn_forward.1} parent=0
    #allocation3 [shape = 'u8[1024]{0}', space=vmem, size = 0x400, scoped, tag = 'output window, operand 0, single buffered']
    #allocation4 [shape = 's32[1]{0}', space=sflag, size = 0x4, scoped, tag = 'scoped memory for ddqn_forward.1']
    %16 = vsyncpa [#allocation4], 0
    // Predicated region
    $region2: #{ddqn_forward.1} parent=1 // pred_check
      _
    $region3: #{ddqn_forward.1} parent=1 // pred_check_branch
      %18 = sbr.rel (0) target = $region5
    $region4: #{ddqn_forward.1} parent=1 // pred_region
      _
    $region5: #{ddqn_forward.1} parent=1 // pred_fallthru
      _
    // Predicated region
    $region6: #{ddqn_forward.1} parent=1 // pred_check
      _
    $region7: #{ddqn_forward.1} parent=1 // pred_check_branch
      %20 = sbr.rel (0) target = $region9
    $region8: #{ddqn_forward.1} parent=1 // pred_region
      _
    $region9: #{ddqn_forward.1} parent=1 // pred_fallthru
      _
    // Predicated region
    $region10: #{ddqn_forward.1} parent=1 // pred_check
      _
    $region11: #{ddqn_forward.1} parent=1 // pred_check_branch
      %22 = sbr.rel (0) target = $region13
    $region12: #{ddqn_forward.1} parent=1 // pred_region
      _
    $region13: #{ddqn_forward.1} parent=1 // pred_fallthru
      _
    // Predicated region
    $region14: #{ddqn_forward.1} parent=1 // pred_check
      _
    $region15: #{ddqn_forward.1} parent=1 // pred_check_branch
      %24 = sbr.rel (0) target = $region17
    $region16: #{ddqn_forward.1} parent=1 // pred_region
      _
    $region17: #{ddqn_forward.1} parent=1 // pred_fallthru
      _
    // Predicated region
    $region18: #{ddqn_forward.1} parent=1 // pred_check
      _
    $region19: #{ddqn_forward.1} parent=1 // pred_check_branch
      %26 = sbr.rel (0) target = $region21
    $region20: #{ddqn_forward.1} parent=1 // pred_region
      _
    $region21: #{ddqn_forward.1} parent=1 // pred_fallthru
      _
    // Predicated region
    $region22: #{ddqn_forward.1} parent=1 // pred_check
      _
    $region23: #{ddqn_forward.1} parent=1 // pred_check_branch
      %28 = sbr.rel (0) target = $region25
    $region24: #{ddqn_forward.1} parent=1 // pred_region
      _
    $region25: #{ddqn_forward.1} parent=1 // pred_fallthru
      _
    // Predicated region
    $region26: #{ddqn_forward.1} parent=1 // pred_check
      _
    $region27: #{ddqn_forward.1} parent=1 // pred_check_branch
      %30 = sbr.rel (0) target = $region29
    $region28: #{ddqn_forward.1} parent=1 // pred_region
      _
    $region29: #{ddqn_forward.1} parent=1 // pred_fallthru
      _
    // Predicated region
    $region30: #{ddqn_forward.1} parent=1 // pred_check
      _
    $region31: #{ddqn_forward.1} parent=1 // pred_check_branch
      %32 = sbr.rel (0) target = $region33
    $region32: #{ddqn_forward.1} parent=1 // pred_region
      _
    $region33: #{ddqn_forward.1} parent=1 // pred_fallthru
      _
    // Predicated region
    $region34: #{ddqn_forward.1} parent=1 // pred_check
      _
    $region35: #{ddqn_forward.1} parent=1 // pred_check_branch
      %34 = sbr.rel (0) target = $region37
    $region36: #{ddqn_forward.1} parent=1 // pred_region
      _
    $region37: #{ddqn_forward.1} parent=1 // pred_fallthru
      _
    // Predicated region
    $region38: #{ddqn_forward.1} parent=1 // pred_check
      _
    $region39: #{ddqn_forward.1} parent=1 // pred_check_branch
      %36 = sbr.rel (0) target = $region41
    $region40: #{ddqn_forward.1} parent=1 // pred_region
      _
    $region41: #{ddqn_forward.1} parent=1 // pred_fallthru
      _
    // Predicated region
    $region42: #{ddqn_forward.1} parent=1 // pred_check
      _
    $region43: #{ddqn_forward.1} parent=1 // pred_check_branch
      %38 = sbr.rel (0) target = $region45
    $region44: #{ddqn_forward.1} parent=1 // pred_region
      _
    $region45: #{ddqn_forward.1} parent=1 // pred_fallthru
      _
    %v40 = vld [vmem:[%s0] sm:$0xff]
    %v41 = vld [vmem:[%s0 + $0x8] sm:$0xff]
    %v42 = vld [vmem:[%s0 + $0x10] sm:$0xf]
    %v43 = vld [vmem:[%s0 + $0x14] sm:$0xff]
    %v44 = vld [vmem:[%s0 + $0x1c] sm:$0xff]
    %v45 = vld [vmem:[%s0 + $0x24] sm:$0xf]
    %v46 = vld [vmem:[%s0 + $0x28] sm:$0xff]
    %v47 = vld [vmem:[%s0 + $0x30] sm:$0xff]
    %v48 = vld [vmem:[%s0 + $0x38] sm:$0xf]
    %v49 = vld [vmem:[%s0 + $0x3c] sm:$0xff]
    %v50 = vld [vmem:[%s0 + $0x44] sm:$0xff]
    %v51 = vld [vmem:[%s0 + $0x4c] sm:$0xf]
    %v52 = vld [vmem:[%s0 + $0x50] sm:$0xff]
    %v53 = vld [vmem:[%s0 + $0x58] sm:$0xff]
    %v54 = vld [vmem:[%s0 + $0x60] sm:$0xf]
    %v55 = vld [vmem:[%s0 + $0x64] sm:$0xff]
    %v56 = vld [vmem:[%s0 + $0x6c] sm:$0xff]
    %v57 = vld [vmem:[%s0 + $0x74] sm:$0xf]
    %v58 = vld [vmem:[%s0 + $0x78] sm:$0xff]
    %v59 = vld [vmem:[%s0 + $0x80] sm:$0xff]
    %v60 = vld [vmem:[%s0 + $0x88] sm:$0xf]
    %v61 = vld [vmem:[%s0 + $0x8c] sm:$0xff]
    %v62 = vld [vmem:[%s0 + $0x94] sm:$0xff]
    %v63 = vld [vmem:[%s0 + $0x9c] sm:$0xf]
    %v64 = vld [vmem:[%s0 + $0xa0] sm:$0xff]
    %v65 = vld [vmem:[%s0 + $0xa8] sm:$0xff]
    %v66 = vld [vmem:[%s0 + $0xb0] sm:$0xf]
    %v67 = vld [vmem:[%s0 + $0xb4] sm:$0xff]
    %v68 = vld [vmem:[%s0 + $0xbc] sm:$0xff]
    %v69 = vld [vmem:[%s0 + $0xc4] sm:$0xf]
    %v70 = vld [vmem:[%s0 + $0xc8] sm:$0xff]
    %v71 = vld [vmem:[%s0 + $0xd0] sm:$0xff]
    %v72 = vld [vmem:[%s0 + $0xd8] sm:$0xf]
    %v73 = vld [vmem:[%s0 + $0xdc] sm:$0xff]
    %v74 = vld [vmem:[%s0 + $0xe4] sm:$0xff]
    %v75 = vld [vmem:[%s0 + $0xec] sm:$0xf]
    %v76 = vld [vmem:[%s0 + $0xf0] sm:$0xff]
    %v77 = vld [vmem:[%s0 + $0xf8] sm:$0xff]
    %v78 = vld [vmem:[%s0 + $0x100] sm:$0xf]
    %v79 = vld [vmem:[%s0 + $0x104] sm:$0xff]
    %v80 = vld [vmem:[%s0 + $0x10c] sm:$0xff]
    %v81 = vld [vmem:[%s0 + $0x114] sm:$0xf]
    %v82 = vld [vmem:[%s0 + $0x118] sm:$0xff]
    %v83 = vld [vmem:[%s0 + $0x120] sm:$0xff]
    %v84 = vld [vmem:[%s0 + $0x128] sm:$0xf]
    %v85 = vld [vmem:[%s0 + $0x12c] sm:$0xff]
    %v86 = vld [vmem:[%s0 + $0x134] sm:$0xff]
    %v87 = vld [vmem:[%s0 + $0x13c] sm:$0xf]
    %v88 = vld [vmem:[%s1] sm:$0xf]
    %v89 = vld [vmem:[%s1 + $0x4] sm:$0xf]
    %v90 = vld [vmem:[%s1 + $0x8] sm:$0xf]
    %v91 = vld [vmem:[%s1 + $0xc] sm:$0xf]
    %v92 = vld [vmem:[%s1 + $0x10] sm:$0xf]
    %v93 = vld [vmem:[%s1 + $0x14] sm:$0xf]
    %v94 = vld [vmem:[%s1 + $0x18] sm:$0xf]
    %v95 = vld [vmem:[%s1 + $0x1c] sm:$0xf]
    %v96 = vld [vmem:[%s1 + $0x20] sm:$0xf]
    %v97 = vld [vmem:[%s1 + $0x24] sm:$0xf]
    %v98 = vld [vmem:[%s1 + $0x28] sm:$0xf]
    %v99 = vld [vmem:[%s1 + $0x2c] sm:$0xf]
    %v100 = vld [vmem:[%s1 + $0x30] sm:$0xf]
    %v101 = vld [vmem:[%s1 + $0x34] sm:$0xf]
    %v102 = vld [vmem:[%s1 + $0x38] sm:$0xf]
    %v103 = vld [vmem:[%s1 + $0x3c] sm:$0xf]
    %v104 = vld [vmem:[%s1 + $0x40] sm:$0xf]
    %v105 = vld [vmem:[%s1 + $0x44] sm:$0xf]
    %v106 = vld [vmem:[%s1 + $0x48] sm:$0xf]
    %v107 = vld [vmem:[%s1 + $0x4c] sm:$0xf]
    %v108 = vld [vmem:[%s1 + $0x50] sm:$0xf]
    %v109 = vld [vmem:[%s1 + $0x54] sm:$0xf]
    %v110 = vld [vmem:[%s1 + $0x58] sm:$0xf]
    %v111 = vld [vmem:[%s1 + $0x5c] sm:$0xf]
    %v112 = vld [vmem:[%s1 + $0x60] sm:$0xf]
    %v113 = vld [vmem:[%s1 + $0x64] sm:$0xf]
    %v114 = vld [vmem:[%s1 + $0x68] sm:$0xf]
    %v115 = vld [vmem:[%s1 + $0x6c] sm:$0xf]
    %v116 = vld [vmem:[%s1 + $0x70] sm:$0xf]
    %v117 = vld [vmem:[%s1 + $0x74] sm:$0xf]
    %v118 = vld [vmem:[%s1 + $0x78] sm:$0xf]
    %v119 = vld [vmem:[%s1 + $0x7c] sm:$0xf]
    %v120 = vld [vmem:[%s1 + $0x80] sm:$0xf]
    %v121 = vld [vmem:[%s1 + $0x84] sm:$0xf]
    %v122 = vld [vmem:[%s1 + $0x88] sm:$0xf]
    %v123 = vld [vmem:[%s1 + $0x8c] sm:$0xf]
    %v124 = vld [vmem:[%s1 + $0x90] sm:$0xf]
    %v125 = vld [vmem:[%s1 + $0x94] sm:$0xf]
    %v126 = vld [vmem:[%s1 + $0x98] sm:$0xf]
    %v127 = vld [vmem:[%s1 + $0x9c] sm:$0xf]
    %v128 = vld [vmem:[%s1 + $0xa0] sm:$0xf]
    %v129 = vld [vmem:[%s1 + $0xa4] sm:$0xf]
    %v130 = vld [vmem:[%s1 + $0xa8] sm:$0xf]
    %v131 = vld [vmem:[%s1 + $0xac] sm:$0xf]
    %v132 = vld [vmem:[%s1 + $0xb0] sm:$0xf]
    %v133 = vld [vmem:[%s1 + $0xb4] sm:$0xf]
    %v134 = vld [vmem:[%s1 + $0xb8] sm:$0xf]
    %v135 = vld [vmem:[%s1 + $0xbc] sm:$0xf]
    %v136 = vld [vmem:[%s1 + $0xc0] sm:$0xf]
    %v137 = vld [vmem:[%s1 + $0xc4] sm:$0xf]
    %v138 = vld [vmem:[%s1 + $0xc8] sm:$0xf]
    %v139 = vld [vmem:[%s1 + $0xcc] sm:$0xf]
    %v140 = vld [vmem:[%s1 + $0xd0] sm:$0xf]
    %v141 = vld [vmem:[%s1 + $0xd4] sm:$0xf]
    %v142 = vld [vmem:[%s1 + $0xd8] sm:$0xf]
    %v143 = vld [vmem:[%s1 + $0xdc] sm:$0xf]
    %v144 = vld [vmem:[%s1 + $0xe0] sm:$0xf]
    %v145 = vld [vmem:[%s1 + $0xe4] sm:$0xf]
    %v146 = vld [vmem:[%s1 + $0xe8] sm:$0xf]
    %v147 = vld [vmem:[%s1 + $0xec] sm:$0xf]
    %v148 = vld [vmem:[%s1 + $0xf0] sm:$0xf]
    %v149 = vld [vmem:[%s1 + $0xf4] sm:$0xf]
    %v150 = vld [vmem:[%s1 + $0xf8] sm:$0xf]
    %v151 = vld [vmem:[%s1 + $0xfc] sm:$0xf]
    %v152 = vld [vmem:[%s1 + $0x100] sm:$0xf]
    %v153 = vld [vmem:[%s1 + $0x104] sm:$0xf]
    %v154 = vld [vmem:[%s1 + $0x108] sm:$0xf]
    %v155 = vld [vmem:[%s1 + $0x10c] sm:$0xf]
    %v156 = vld [vmem:[%s1 + $0x110] sm:$0xf]
    %v157 = vld [vmem:[%s1 + $0x114] sm:$0xf]
    %v158 = vld [vmem:[%s1 + $0x118] sm:$0xf]
    %v159 = vld [vmem:[%s1 + $0x11c] sm:$0xf]
    %v160 = vld [vmem:[%s1 + $0x120] sm:$0xf]
    %v161 = vld [vmem:[%s1 + $0x124] sm:$0xf]
    %v162 = vld [vmem:[%s1 + $0x128] sm:$0xf]
    %v163 = vld [vmem:[%s1 + $0x12c] sm:$0xf]
    %v164 = vld [vmem:[%s1 + $0x130] sm:$0xf]
    %v165 = vld [vmem:[%s1 + $0x134] sm:$0xf]
    %v166 = vld [vmem:[%s1 + $0x138] sm:$0xf]
    %v167 = vld [vmem:[%s1 + $0x13c] sm:$0xf]
    %v216 = vunpack.c.l.b16 %v40
    %v217 = vunpack.c.h.b16 %v40
    %v218 = vunpack.c.l.b16 %v41
    %v219 = vunpack.c.h.b16 %v41
    %v220 = vunpack.c.l.b16 %v42
    %v221 = vunpack.c.l.b16 %v43
    %v222 = vunpack.c.h.b16 %v43
    %v223 = vunpack.c.l.b16 %v44
    %v224 = vunpack.c.h.b16 %v44
    %v225 = vunpack.c.l.b16 %v45
    %v226 = vunpack.c.l.b16 %v46
    %v227 = vunpack.c.h.b16 %v46
    %v228 = vunpack.c.l.b16 %v47
    %v229 = vunpack.c.h.b16 %v47
    %v230 = vunpack.c.l.b16 %v48
    %v231 = vunpack.c.l.b16 %v49
    %v232 = vunpack.c.h.b16 %v49
    %v233 = vunpack.c.l.b16 %v50
    %v234 = vunpack.c.h.b16 %v50
    %v235 = vunpack.c.l.b16 %v51
    %v236 = vunpack.c.l.b16 %v52
    %v237 = vunpack.c.h.b16 %v52
    %v238 = vunpack.c.l.b16 %v53
    %v239 = vunpack.c.h.b16 %v53
    %v240 = vunpack.c.l.b16 %v54
    %v241 = vunpack.c.l.b16 %v55
    %v242 = vunpack.c.h.b16 %v55
    %v243 = vunpack.c.l.b16 %v56
    %v244 = vunpack.c.h.b16 %v56
    %v245 = vunpack.c.l.b16 %v57
    %v246 = vunpack.c.l.b16 %v58
    %v247 = vunpack.c.h.b16 %v58
    %v248 = vunpack.c.l.b16 %v59
    %v249 = vunpack.c.h.b16 %v59
    %v250 = vunpack.c.l.b16 %v60
    %v251 = vunpack.c.l.b16 %v61
    %v252 = vunpack.c.h.b16 %v61
    %v253 = vunpack.c.l.b16 %v62
    %v254 = vunpack.c.h.b16 %v62
    %v255 = vunpack.c.l.b16 %v63
    %v256 = vunpack.c.l.b16 %v64
    %v257 = vunpack.c.h.b16 %v64
    %v258 = vunpack.c.l.b16 %v65
    %v259 = vunpack.c.h.b16 %v65
    %v260 = vunpack.c.l.b16 %v66
    %v261 = vunpack.c.l.b16 %v67
    %v262 = vunpack.c.h.b16 %v67
    %v263 = vunpack.c.l.b16 %v68
    %v264 = vunpack.c.h.b16 %v68
    %v265 = vunpack.c.l.b16 %v69
    %v266 = vunpack.c.l.b16 %v70
    %v267 = vunpack.c.h.b16 %v70
    %v268 = vunpack.c.l.b16 %v71
    %v269 = vunpack.c.h.b16 %v71
    %v270 = vunpack.c.l.b16 %v72
    %v271 = vunpack.c.l.b16 %v73
    %v272 = vunpack.c.h.b16 %v73
    %v273 = vunpack.c.l.b16 %v74
    %v274 = vunpack.c.h.b16 %v74
    %v275 = vunpack.c.l.b16 %v75
    %v276 = vunpack.c.l.b16 %v76
    %v277 = vunpack.c.h.b16 %v76
    %v278 = vunpack.c.l.b16 %v77
    %v279 = vunpack.c.h.b16 %v77
    %v280 = vunpack.c.l.b16 %v78
    %v281 = vunpack.c.l.b16 %v79
    %v282 = vunpack.c.h.b16 %v79
    %v283 = vunpack.c.l.b16 %v80
    %v284 = vunpack.c.h.b16 %v80
    %v285 = vunpack.c.l.b16 %v81
    %v286 = vunpack.c.l.b16 %v82
    %v287 = vunpack.c.h.b16 %v82
    %v288 = vunpack.c.l.b16 %v83
    %v289 = vunpack.c.h.b16 %v83
    %v290 = vunpack.c.l.b16 %v84
    %v291 = vunpack.c.l.b16 %v85
    %v292 = vunpack.c.h.b16 %v85
    %v293 = vunpack.c.l.b16 %v86
    %v294 = vunpack.c.h.b16 %v86
    %v295 = vunpack.c.l.b16 %v87
    %v296 = vpack.c.b16 %v221, %v216
    %v297 = vpack.c.b16 %v222, %v217
    %v298 = vpack.c.b16 %v223, %v218
    %v299 = vpack.c.b16 %v224, %v219
    %v300 = vpack.c.b16 %v225, %v220
    %v301 = vpack.c.b16 %v231, %v226
    %v302 = vpack.c.b16 %v232, %v227
    %v303 = vpack.c.b16 %v233, %v228
    %v304 = vpack.c.b16 %v234, %v229
    %v305 = vpack.c.b16 %v235, %v230
    %v306 = vpack.c.b16 %v241, %v236
    %v307 = vpack.c.b16 %v242, %v237
    %v308 = vpack.c.b16 %v243, %v238
    %v309 = vpack.c.b16 %v244, %v239
    %v310 = vpack.c.b16 %v245, %v240
    %v311 = vpack.c.b16 %v251, %v246
    %v312 = vpack.c.b16 %v252, %v247
    %v313 = vpack.c.b16 %v253, %v248
    %v314 = vpack.c.b16 %v254, %v249
    %v315 = vpack.c.b16 %v255, %v250
    %v316 = vpack.c.b16 %v261, %v256
    %v317 = vpack.c.b16 %v262, %v257
    %v318 = vpack.c.b16 %v263, %v258
    %v319 = vpack.c.b16 %v264, %v259
    %v320 = vpack.c.b16 %v265, %v260
    %v321 = vpack.c.b16 %v271, %v266
    %v322 = vpack.c.b16 %v272, %v267
    %v323 = vpack.c.b16 %v273, %v268
    %v324 = vpack.c.b16 %v274, %v269
    %v325 = vpack.c.b16 %v275, %v270
    %v326 = vpack.c.b16 %v281, %v276
    %v327 = vpack.c.b16 %v282, %v277
    %v328 = vpack.c.b16 %v283, %v278
    %v329 = vpack.c.b16 %v284, %v279
    %v330 = vpack.c.b16 %v285, %v280
    %v331 = vpack.c.b16 %v291, %v286
    %v332 = vpack.c.b16 %v292, %v287
    %v333 = vpack.c.b16 %v293, %v288
    %v334 = vpack.c.b16 %v294, %v289
    %v335 = vpack.c.b16 %v295, %v290
    %v456 = vunpack.c.l.b16 %v88
    %v457 = vunpack.c.l.b16 %v89
    %v458 = vunpack.c.l.b16 %v90
    %v459 = vunpack.c.l.b16 %v91
    %v460 = vunpack.c.l.b16 %v92
    %v461 = vunpack.c.l.b16 %v93
    %v462 = vunpack.c.l.b16 %v94
    %v463 = vunpack.c.l.b16 %v95
    %v464 = vunpack.c.l.b16 %v96
    %v465 = vunpack.c.l.b16 %v97
    %v466 = vunpack.c.l.b16 %v98
    %v467 = vunpack.c.l.b16 %v99
    %v468 = vunpack.c.l.b16 %v100
    %v469 = vunpack.c.l.b16 %v101
    %v470 = vunpack.c.l.b16 %v102
    %v471 = vunpack.c.l.b16 %v103
    %v472 = vunpack.c.l.b16 %v104
    %v473 = vunpack.c.l.b16 %v105
    %v474 = vunpack.c.l.b16 %v106
    %v475 = vunpack.c.l.b16 %v107
    %v476 = vunpack.c.l.b16 %v108
    %v477 = vunpack.c.l.b16 %v109
    %v478 = vunpack.c.l.b16 %v110
    %v479 = vunpack.c.l.b16 %v111
    %v480 = vunpack.c.l.b16 %v112
    %v481 = vunpack.c.l.b16 %v113
    %v482 = vunpack.c.l.b16 %v114
    %v483 = vunpack.c.l.b16 %v115
    %v484 = vunpack.c.l.b16 %v116
    %v485 = vunpack.c.l.b16 %v117
    %v486 = vunpack.c.l.b16 %v118
    %v487 = vunpack.c.l.b16 %v119
    %v488 = vunpack.c.l.b16 %v120
    %v489 = vunpack.c.l.b16 %v121
    %v490 = vunpack.c.l.b16 %v122
    %v491 = vunpack.c.l.b16 %v123
    %v492 = vunpack.c.l.b16 %v124
    %v493 = vunpack.c.l.b16 %v125
    %v494 = vunpack.c.l.b16 %v126
    %v495 = vunpack.c.l.b16 %v127
    %v496 = vunpack.c.l.b16 %v128
    %v497 = vunpack.c.l.b16 %v129
    %v498 = vunpack.c.l.b16 %v130
    %v499 = vunpack.c.l.b16 %v131
    %v500 = vunpack.c.l.b16 %v132
    %v501 = vunpack.c.l.b16 %v133
    %v502 = vunpack.c.l.b16 %v134
    %v503 = vunpack.c.l.b16 %v135
    %v504 = vunpack.c.l.b16 %v136
    %v505 = vunpack.c.l.b16 %v137
    %v506 = vunpack.c.l.b16 %v138
    %v507 = vunpack.c.l.b16 %v139
    %v508 = vunpack.c.l.b16 %v140
    %v509 = vunpack.c.l.b16 %v141
    %v510 = vunpack.c.l.b16 %v142
    %v511 = vunpack.c.l.b16 %v143
    %v512 = vunpack.c.l.b16 %v144
    %v513 = vunpack.c.l.b16 %v145
    %v514 = vunpack.c.l.b16 %v146
    %v515 = vunpack.c.l.b16 %v147
    %v516 = vunpack.c.l.b16 %v148
    %v517 = vunpack.c.l.b16 %v149
    %v518 = vunpack.c.l.b16 %v150
    %v519 = vunpack.c.l.b16 %v151
    %v520 = vunpack.c.l.b16 %v152
    %v521 = vunpack.c.l.b16 %v153
    %v522 = vunpack.c.l.b16 %v154
    %v523 = vunpack.c.l.b16 %v155
    %v524 = vunpack.c.l.b16 %v156
    %v525 = vunpack.c.l.b16 %v157
    %v526 = vunpack.c.l.b16 %v158
    %v527 = vunpack.c.l.b16 %v159
    %v528 = vunpack.c.l.b16 %v160
    %v529 = vunpack.c.l.b16 %v161
    %v530 = vunpack.c.l.b16 %v162
    %v531 = vunpack.c.l.b16 %v163
    %v532 = vunpack.c.l.b16 %v164
    %v533 = vunpack.c.l.b16 %v165
    %v534 = vunpack.c.l.b16 %v166
    %v535 = vunpack.c.l.b16 %v167
    %v536 = vpack.c.b16 %v457, %v456
    %v537 = vpack.c.b16 %v459, %v458
    %v538 = vpack.c.b16 %v461, %v460
    %v539 = vpack.c.b16 %v463, %v462
    %v540 = vpack.c.b16 %v465, %v464
    %v541 = vpack.c.b16 %v467, %v466
    %v542 = vpack.c.b16 %v469, %v468
    %v543 = vpack.c.b16 %v471, %v470
    %v544 = vpack.c.b16 %v473, %v472
    %v545 = vpack.c.b16 %v475, %v474
    %v546 = vpack.c.b16 %v477, %v476
    %v547 = vpack.c.b16 %v479, %v478
    %v548 = vpack.c.b16 %v481, %v480
    %v549 = vpack.c.b16 %v483, %v482
    %v550 = vpack.c.b16 %v485, %v484
    %v551 = vpack.c.b16 %v487, %v486
    %v552 = vpack.c.b16 %v489, %v488
    %v553 = vpack.c.b16 %v491, %v490
    %v554 = vpack.c.b16 %v493, %v492
    %v555 = vpack.c.b16 %v495, %v494
    %v556 = vpack.c.b16 %v497, %v496
    %v557 = vpack.c.b16 %v499, %v498
    %v558 = vpack.c.b16 %v501, %v500
    %v559 = vpack.c.b16 %v503, %v502
    %v560 = vpack.c.b16 %v505, %v504
    %v561 = vpack.c.b16 %v507, %v506
    %v562 = vpack.c.b16 %v509, %v508
    %v563 = vpack.c.b16 %v511, %v510
    %v564 = vpack.c.b16 %v513, %v512
    %v565 = vpack.c.b16 %v515, %v514
    %v566 = vpack.c.b16 %v517, %v516
    %v567 = vpack.c.b16 %v519, %v518
    %v568 = vpack.c.b16 %v521, %v520
    %v569 = vpack.c.b16 %v523, %v522
    %v570 = vpack.c.b16 %v525, %v524
    %v571 = vpack.c.b16 %v527, %v526
    %v572 = vpack.c.b16 %v529, %v528
    %v573 = vpack.c.b16 %v531, %v530
    %v574 = vpack.c.b16 %v533, %v532
    %v575 = vpack.c.b16 %v535, %v534
    %616 = vmatprep.subr.bf16.mxu0 0
    %617 = vmatpush1.bf16.msra.mxu0 %v543
    %618 = vmatprep.subr.bf16.mxu0 0
    %619 = vmatpush1.bf16.msra.mxu0 %v542
    %620 = vmatprep.subr.bf16.mxu0 0
    %621 = vmatpush1.bf16.msra.mxu0 %v541
    %622 = vmatprep.subr.bf16.mxu0 0
    %623 = vmatpush1.bf16.msra.mxu0 %v540
    %624 = vmatprep.subr.bf16.mxu0 0
    %625 = vmatpush1.bf16.msra.mxu0 %v539
    %626 = vmatprep.subr.bf16.mxu0 0
    %627 = vmatpush1.bf16.msra.mxu0 %v538
    %628 = vmatprep.subr.bf16.mxu0 0
    %629 = vmatpush1.bf16.msra.mxu0 %v537
    %630 = vmatprep.subr.bf16.mxu0 0
    %631 = vmatpush1.bf16.msra.mxu0 %v536
    %632 = vmatprep.subr.bf16.mxu0 0
    %633 = vmatpush2.bf16.msra.mxu0 %v551
    %634 = vmatprep.subr.bf16.mxu0 0
    %635 = vmatpush2.bf16.msra.mxu0 %v550
    %636 = vmatprep.subr.bf16.mxu0 0
    %637 = vmatpush2.bf16.msra.mxu0 %v549
    %638 = vmatprep.subr.bf16.mxu0 0
    %639 = vmatpush2.bf16.msra.mxu0 %v548
    %640 = vmatprep.subr.bf16.mxu0 0
    %641 = vmatpush2.bf16.msra.mxu0 %v547
    %642 = vmatprep.subr.bf16.mxu0 0
    %643 = vmatpush2.bf16.msra.mxu0 %v546
    %644 = vmatprep.subr.bf16.mxu0 0
    %645 = vmatpush2.bf16.msra.mxu0 %v545
    %646 = vmatprep.subr.bf16.mxu0 0
    %647 = vmatpush2.bf16.msra.mxu0 %v544
    %648 = vmatprep.mubr.bf16.mxu0 %v297
    %649 = vmatmul.mubr.bf16.gmra.mxu0 %v296
    %v650 = vpop.f32.mrf.mxu0
    %v651 = vadd.f32 0.0, %v650
    %v652 = vpop.f32.mrf.mxu0
    %v653 = vpop.f32.mrf.mxu0
    %v654 = vadd.f32 0.0, %v653
    %v655 = vpop.f32.mrf.mxu0
    %656 = vmatprep.mubr.bf16.mxu0 %v302
    %657 = vmatmul.mubr.bf16.gmra.mxu0 %v301
    %v658 = vpop.f32.mrf.mxu0
    %v659 = vadd.f32 0.0, %v658
    %v660 = vpop.f32.mrf.mxu0
    %v661 = vpop.f32.mrf.mxu0
    %v662 = vadd.f32 0.0, %v661
    %v663 = vpop.f32.mrf.mxu0
    %664 = vmatprep.mubr.bf16.mxu0 %v307
    %665 = vmatmul.mubr.bf16.gmra.mxu0 %v306
    %v666 = vpop.f32.mrf.mxu0
    %v667 = vadd.f32 0.0, %v666
    %v668 = vpop.f32.mrf.mxu0
    %v669 = vpop.f32.mrf.mxu0
    %v670 = vadd.f32 0.0, %v669
    %v671 = vpop.f32.mrf.mxu0
    %672 = vmatprep.mubr.bf16.mxu0 %v312
    %673 = vmatmul.mubr.bf16.gmra.mxu0 %v311
    %v674 = vpop.f32.mrf.mxu0
    %v675 = vadd.f32 0.0, %v674
    %v676 = vpop.f32.mrf.mxu0
    %v677 = vpop.f32.mrf.mxu0
    %v678 = vadd.f32 0.0, %v677
    %v679 = vpop.f32.mrf.mxu0
    %680 = vmatprep.mubr.bf16.mxu0 %v317
    %681 = vmatmul.mubr.bf16.gmra.mxu0 %v316
    %v682 = vpop.f32.mrf.mxu0
    %v683 = vadd.f32 0.0, %v682
    %v684 = vpop.f32.mrf.mxu0
    %v685 = vpop.f32.mrf.mxu0
    %v686 = vadd.f32 0.0, %v685
    %v687 = vpop.f32.mrf.mxu0
    %688 = vmatprep.mubr.bf16.mxu0 %v322
    %689 = vmatmul.mubr.bf16.gmra.mxu0 %v321
    %v690 = vpop.f32.mrf.mxu0
    %v691 = vadd.f32 0.0, %v690
    %v692 = vpop.f32.mrf.mxu0
    %v693 = vpop.f32.mrf.mxu0
    %v694 = vadd.f32 0.0, %v693
    %v695 = vpop.f32.mrf.mxu0
    %696 = vmatprep.mubr.bf16.mxu0 %v327
    %697 = vmatmul.mubr.bf16.gmra.mxu0 %v326
    %v698 = vpop.f32.mrf.mxu0
    %v699 = vadd.f32 0.0, %v698
    %v700 = vpop.f32.mrf.mxu0
    %v701 = vpop.f32.mrf.mxu0
    %v702 = vadd.f32 0.0, %v701
    %v703 = vpop.f32.mrf.mxu0
    %704 = vmatprep.mubr.bf16.mxu0 %v332
    %705 = vmatmul.mubr.bf16.gmra.mxu0 %v331
    %v706 = vpop.f32.mrf.mxu0
    %v707 = vadd.f32 0.0, %v706
    %v708 = vpop.f32.mrf.mxu0
    %v709 = vpop.f32.mrf.mxu0
    %v710 = vadd.f32 0.0, %v709
    %v711 = vpop.f32.mrf.mxu0
    %712 = vdwg.mxu0
    %713 = vmatprep.subr.bf16.mxu0 0
    %714 = vmatpush1.bf16.msra.mxu0 %v559
    %715 = vmatprep.subr.bf16.mxu0 0
    %716 = vmatpush1.bf16.msra.mxu0 %v558
    %717 = vmatprep.subr.bf16.mxu0 0
    %718 = vmatpush1.bf16.msra.mxu0 %v557
    %719 = vmatprep.subr.bf16.mxu0 0
    %720 = vmatpush1.bf16.msra.mxu0 %v556
    %721 = vmatprep.subr.bf16.mxu0 0
    %722 = vmatpush1.bf16.msra.mxu0 %v555
    %723 = vmatprep.subr.bf16.mxu0 0
    %724 = vmatpush1.bf16.msra.mxu0 %v554
    %725 = vmatprep.subr.bf16.mxu0 0
    %726 = vmatpush1.bf16.msra.mxu0 %v553
    %727 = vmatprep.subr.bf16.mxu0 0
    %728 = vmatpush1.bf16.msra.mxu0 %v552
    %729 = vmatprep.subr.bf16.mxu0 0
    %730 = vmatpush2.bf16.msra.mxu0 %v567
    %731 = vmatprep.subr.bf16.mxu0 0
    %732 = vmatpush2.bf16.msra.mxu0 %v566
    %733 = vmatprep.subr.bf16.mxu0 0
    %734 = vmatpush2.bf16.msra.mxu0 %v565
    %735 = vmatprep.subr.bf16.mxu0 0
    %736 = vmatpush2.bf16.msra.mxu0 %v564
    %737 = vmatprep.subr.bf16.mxu0 0
    %738 = vmatpush2.bf16.msra.mxu0 %v563
    %739 = vmatprep.subr.bf16.mxu0 0
    %740 = vmatpush2.bf16.msra.mxu0 %v562
    %741 = vmatprep.subr.bf16.mxu0 0
    %742 = vmatpush2.bf16.msra.mxu0 %v561
    %743 = vmatprep.subr.bf16.mxu0 0
    %744 = vmatpush2.bf16.msra.mxu0 %v560
    %745 = vmatprep.mubr.bf16.mxu0 %v299
    %746 = vmatmul.mubr.bf16.gmra.mxu0 %v298
    %v747 = vpop.f32.mrf.mxu0
    %v748 = vadd.f32 %v651, %v747
    %v749 = vpop.f32.mrf.mxu0
    %v750 = vpop.f32.mrf.mxu0
    %v751 = vadd.f32 %v654, %v750
    %v752 = vpop.f32.mrf.mxu0
    %753 = vmatprep.mubr.bf16.mxu0 %v304
    %754 = vmatmul.mubr.bf16.gmra.mxu0 %v303
    %v755 = vpop.f32.mrf.mxu0
    %v756 = vadd.f32 %v659, %v755
    %v757 = vpop.f32.mrf.mxu0
    %v758 = vpop.f32.mrf.mxu0
    %v759 = vadd.f32 %v662, %v758
    %v760 = vpop.f32.mrf.mxu0
    %761 = vmatprep.mubr.bf16.mxu0 %v309
    %762 = vmatmul.mubr.bf16.gmra.mxu0 %v308
    %v763 = vpop.f32.mrf.mxu0
    %v764 = vadd.f32 %v667, %v763
    %v765 = vpop.f32.mrf.mxu0
    %v766 = vpop.f32.mrf.mxu0
    %v767 = vadd.f32 %v670, %v766
    %v768 = vpop.f32.mrf.mxu0
    %769 = vmatprep.mubr.bf16.mxu0 %v314
    %770 = vmatmul.mubr.bf16.gmra.mxu0 %v313
    %v771 = vpop.f32.mrf.mxu0
    %v772 = vadd.f32 %v675, %v771
    %v773 = vpop.f32.mrf.mxu0
    %v774 = vpop.f32.mrf.mxu0
    %v775 = vadd.f32 %v678, %v774
    %v776 = vpop.f32.mrf.mxu0
    %777 = vmatprep.mubr.bf16.mxu0 %v319
    %778 = vmatmul.mubr.bf16.gmra.mxu0 %v318
    %v779 = vpop.f32.mrf.mxu0
    %v780 = vadd.f32 %v683, %v779
    %v781 = vpop.f32.mrf.mxu0
    %v782 = vpop.f32.mrf.mxu0
    %v783 = vadd.f32 %v686, %v782
    %v784 = vpop.f32.mrf.mxu0
    %785 = vmatprep.mubr.bf16.mxu0 %v324
    %786 = vmatmul.mubr.bf16.gmra.mxu0 %v323
    %v787 = vpop.f32.mrf.mxu0
    %v788 = vadd.f32 %v691, %v787
    %v789 = vpop.f32.mrf.mxu0
    %v790 = vpop.f32.mrf.mxu0
    %v791 = vadd.f32 %v694, %v790
    %v792 = vpop.f32.mrf.mxu0
    %793 = vmatprep.mubr.bf16.mxu0 %v329
    %794 = vmatmul.mubr.bf16.gmra.mxu0 %v328
    %v795 = vpop.f32.mrf.mxu0
    %v796 = vadd.f32 %v699, %v795
    %v797 = vpop.f32.mrf.mxu0
    %v798 = vpop.f32.mrf.mxu0
    %v799 = vadd.f32 %v702, %v798
    %v800 = vpop.f32.mrf.mxu0
    %801 = vmatprep.mubr.bf16.mxu0 %v334
    %802 = vmatmul.mubr.bf16.gmra.mxu0 %v333
    %v803 = vpop.f32.mrf.mxu0
    %v804 = vadd.f32 %v707, %v803
    %v805 = vpop.f32.mrf.mxu0
    %v806 = vpop.f32.mrf.mxu0
    %v807 = vadd.f32 %v710, %v806
    %v808 = vpop.f32.mrf.mxu0
    %809 = vdwg.mxu0
    %810 = vmatprep.subr.bf16.mxu0 0
    %811 = vmatpush1.bf16.msra.mxu0 %v575
    %812 = vmatprep.subr.bf16.mxu0 0
    %813 = vmatpush1.bf16.msra.mxu0 %v574
    %814 = vmatprep.subr.bf16.mxu0 0
    %815 = vmatpush1.bf16.msra.mxu0 %v573
    %816 = vmatprep.subr.bf16.mxu0 0
    %817 = vmatpush1.bf16.msra.mxu0 %v572
    %818 = vmatprep.subr.bf16.mxu0 0
    %819 = vmatpush1.bf16.msra.mxu0 %v571
    %820 = vmatprep.subr.bf16.mxu0 0
    %821 = vmatpush1.bf16.msra.mxu0 %v570
    %822 = vmatprep.subr.bf16.mxu0 0
    %823 = vmatpush1.bf16.msra.mxu0 %v569
    %824 = vmatprep.subr.bf16.mxu0 0
    %825 = vmatpush1.bf16.msra.mxu0 %v568
    %826 = vmatprep.subr.bf16.mxu0 0
    %827 = vmatpush2.bf16.msra.mxu0 0
    %828 = vmatprep.subr.bf16.mxu0 0
    %829 = vmatpush2.bf16.msra.mxu0 0
    %830 = vmatprep.subr.bf16.mxu0 0
    %831 = vmatpush2.bf16.msra.mxu0 0
    %832 = vmatprep.subr.bf16.mxu0 0
    %833 = vmatpush2.bf16.msra.mxu0 0
    %834 = vmatprep.subr.bf16.mxu0 0
    %835 = vmatpush2.bf16.msra.mxu0 0
    %836 = vmatprep.subr.bf16.mxu0 0
    %837 = vmatpush2.bf16.msra.mxu0 0
    %838 = vmatprep.subr.bf16.mxu0 0
    %839 = vmatpush2.bf16.msra.mxu0 0
    %840 = vmatprep.subr.bf16.mxu0 0
    %841 = vmatpush2.bf16.msra.mxu0 0
    %842 = vmatprep.mubr.bf16.mxu0 0
    %843 = vmatmul.mubr.bf16.gmra.mxu0 %v300
    %v844 = vpop.f32.mrf.mxu0
    %v845 = vadd.f32 %v748, %v844
    %v846 = vpop.f32.mrf.mxu0
    %v847 = vpop.f32.mrf.mxu0
    %v848 = vadd.f32 %v751, %v847
    %v849 = vpop.f32.mrf.mxu0
    %850 = vmatprep.mubr.bf16.mxu0 0
    %851 = vmatmul.mubr.bf16.gmra.mxu0 %v305
    %v852 = vpop.f32.mrf.mxu0
    %v853 = vadd.f32 %v756, %v852
    %v854 = vpop.f32.mrf.mxu0
    %v855 = vpop.f32.mrf.mxu0
    %v856 = vadd.f32 %v759, %v855
    %v857 = vpop.f32.mrf.mxu0
    %858 = vmatprep.mubr.bf16.mxu0 0
    %859 = vmatmul.mubr.bf16.gmra.mxu0 %v310
    %v860 = vpop.f32.mrf.mxu0
    %v861 = vadd.f32 %v764, %v860
    %v862 = vpop.f32.mrf.mxu0
    %v863 = vpop.f32.mrf.mxu0
    %v864 = vadd.f32 %v767, %v863
    %v865 = vpop.f32.mrf.mxu0
    %866 = vmatprep.mubr.bf16.mxu0 0
    %867 = vmatmul.mubr.bf16.gmra.mxu0 %v315
    %v868 = vpop.f32.mrf.mxu0
    %v869 = vadd.f32 %v772, %v868
    %v870 = vpop.f32.mrf.mxu0
    %v871 = vpop.f32.mrf.mxu0
    %v872 = vadd.f32 %v775, %v871
    %v873 = vpop.f32.mrf.mxu0
    %874 = vmatprep.mubr.bf16.mxu0 0
    %875 = vmatmul.mubr.bf16.gmra.mxu0 %v320
    %v876 = vpop.f32.mrf.mxu0
    %v877 = vadd.f32 %v780, %v876
    %v878 = vpop.f32.mrf.mxu0
    %v879 = vpop.f32.mrf.mxu0
    %v880 = vadd.f32 %v783, %v879
    %v881 = vpop.f32.mrf.mxu0
    %882 = vmatprep.mubr.bf16.mxu0 0
    %883 = vmatmul.mubr.bf16.gmra.mxu0 %v325
    %v884 = vpop.f32.mrf.mxu0
    %v885 = vadd.f32 %v788, %v884
    %v886 = vpop.f32.mrf.mxu0
    %v887 = vpop.f32.mrf.mxu0
    %v888 = vadd.f32 %v791, %v887
    %v889 = vpop.f32.mrf.mxu0
    %890 = vmatprep.mubr.bf16.mxu0 0
    %891 = vmatmul.mubr.bf16.gmra.mxu0 %v330
    %v892 = vpop.f32.mrf.mxu0
    %v893 = vadd.f32 %v796, %v892
    %v894 = vpop.f32.mrf.mxu0
    %v895 = vpop.f32.mrf.mxu0
    %v896 = vadd.f32 %v799, %v895
    %v897 = vpop.f32.mrf.mxu0
    %898 = vmatprep.mubr.bf16.mxu0 0
    %899 = vmatmul.mubr.bf16.gmra.mxu0 %v335
    %v900 = vpop.f32.mrf.mxu0
    %v901 = vadd.f32 %v804, %v900
    %v902 = vpop.f32.mrf.mxu0
    %v903 = vpop.f32.mrf.mxu0
    %v904 = vadd.f32 %v807, %v903
    %v905 = vpop.f32.mrf.mxu0
    %906 = vdwg.mxu0
    %v907 = vld [vmem:[%s2] sm:$0x1]
    %v908 = vld [vmem:[%s3] sm:$0x1]
    %v909 = vadd.f32 %v845, %v848
    %v910 = vadd.f32 %v909, %v853
    %v911 = vadd.f32 %v910, %v856
    %v912 = vadd.f32 %v911, %v861
    %v913 = vadd.f32 %v912, %v864
    %v914 = vadd.f32 %v913, %v869
    %v915 = vadd.f32 %v914, %v872
    %v916 = vadd.f32 %v915, %v877
    %v917 = vadd.f32 %v916, %v880
    %v918 = vadd.f32 %v917, %v885
    %v919 = vadd.f32 %v918, %v888
    %v920 = vadd.f32 %v919, %v893
    %v921 = vadd.f32 %v920, %v896
    %v922 = vadd.f32 %v921, %v901
    %v923 = vadd.f32 %v922, %v904
    %v924 = vrot.slane %v923, 4
    %v925 = vadd.f32 %v923, %v924
    %v926 = vrot.slane %v925, 2
    %v927 = vadd.f32 %v925, %v926
    %v928 = vrot.slane %v927, 1
    %v929 = vadd.f32 %v927, %v928
    %v930 = vmul.f32 %v845, %v845
    %v931 = vmul.f32 %v848, %v848
    %v932 = vmul.f32 %v853, %v853
    %v933 = vmul.f32 %v856, %v856
    %v934 = vmul.f32 %v861, %v861
    %v935 = vmul.f32 %v864, %v864
    %v936 = vmul.f32 %v869, %v869
    %v937 = vmul.f32 %v872, %v872
    %v938 = vmul.f32 %v877, %v877
    %v939 = vmul.f32 %v880, %v880
    %v940 = vmul.f32 %v885, %v885
    %v941 = vmul.f32 %v888, %v888
    %v942 = vmul.f32 %v893, %v893
    %v943 = vmul.f32 %v896, %v896
    %v944 = vmul.f32 %v901, %v901
    %v945 = vmul.f32 %v904, %v904
    %v946 = vadd.f32 %v930, %v931
    %v947 = vadd.f32 %v946, %v932
    %v948 = vadd.f32 %v947, %v933
    %v949 = vadd.f32 %v948, %v934
    %v950 = vadd.f32 %v949, %v935
    %v951 = vadd.f32 %v950, %v936
    %v952 = vadd.f32 %v951, %v937
    %v953 = vadd.f32 %v952, %v938
    %v954 = vadd.f32 %v953, %v939
    %v955 = vadd.f32 %v954, %v940
    %v956 = vadd.f32 %v955, %v941
    %v957 = vadd.f32 %v956, %v942
    %v958 = vadd.f32 %v957, %v943
    %v959 = vadd.f32 %v958, %v944
    %v960 = vadd.f32 %v959, %v945
    %v961 = vrot.slane %v960, 4
    %v962 = vadd.f32 %v960, %v961
    %v963 = vrot.slane %v962, 2
    %v964 = vadd.f32 %v962, %v963
    %v965 = vrot.slane %v964, 1
    %v966 = vadd.f32 %v964, %v965
    %v967 = vmul.f32 %v929, 0.0078125
    %v968 = vmul.f32 %v966, 0.0078125
    %v969 = vmul.f32 %v967, %v967
    %v970 = vsub.f32 %v968, %v969
    %v971 = vmax.f32 %v970, 0.0
    %v972 = vadd.f32 %v971, 1e-05
    %v973 = vrsqrt.pop %v972
    %v974 = vmul.f32 %v973, %v907
    %v975 = vmul.f32 %v967, %v974
    %v976 = vsub.f32 %v908, %v975
    %v977 = vlaneseq
    %v978 = vshrl.u32 %v977, 7
    %v979 = vsub.s32 0, %v978
    %v980 = vrot.slane %v974, %v979
    %v981 = vmul.f32 %v845, %v980
    %v982 = vmul.f32 %v848, %v980
    %v983 = vmul.f32 %v853, %v980
    %v984 = vmul.f32 %v856, %v980
    %v985 = vmul.f32 %v861, %v980
    %v986 = vmul.f32 %v864, %v980
    %v987 = vmul.f32 %v869, %v980
    %v988 = vmul.f32 %v872, %v980
    %v989 = vmul.f32 %v877, %v980
    %v990 = vmul.f32 %v880, %v980
    %v991 = vmul.f32 %v885, %v980
    %v992 = vmul.f32 %v888, %v980
    %v993 = vmul.f32 %v893, %v980
    %v994 = vmul.f32 %v896, %v980
    %v995 = vmul.f32 %v901, %v980
    %v996 = vmul.f32 %v904, %v980
    %v998 = vlaneseq
    %v999 = vshrl.u32 %v998, 7
    %v1000 = vsub.s32 0, %v999
    %v1001 = vrot.slane %v976, %v1000
    %v1003 = vadd.f32 %v981, %v1001
    %v1004 = vadd.f32 %v982, %v1001
    %v1005 = vadd.f32 %v983, %v1001
    %v1006 = vadd.f32 %v984, %v1001
    %v1007 = vadd.f32 %v985, %v1001
    %v1008 = vadd.f32 %v986, %v1001
    %v1009 = vadd.f32 %v987, %v1001
    %v1010 = vadd.f32 %v988, %v1001
    %v1011 = vadd.f32 %v989, %v1001
    %v1012 = vadd.f32 %v990, %v1001
    %v1013 = vadd.f32 %v991, %v1001
    %v1014 = vadd.f32 %v992, %v1001
    %v1015 = vadd.f32 %v993, %v1001
    %v1016 = vadd.f32 %v994, %v1001
    %v1017 = vadd.f32 %v995, %v1001
    %v1018 = vadd.f32 %v996, %v1001
    %v1019 = vmax.f32 %v1003, 0.0
    %v1020 = vmax.f32 %v1004, 0.0
    %v1021 = vmax.f32 %v1005, 0.0
    %v1022 = vmax.f32 %v1006, 0.0
    %v1023 = vmax.f32 %v1007, 0.0
    %v1024 = vmax.f32 %v1008, 0.0
    %v1025 = vmax.f32 %v1009, 0.0
    %v1026 = vmax.f32 %v1010, 0.0
    %v1027 = vmax.f32 %v1011, 0.0
    %v1028 = vmax.f32 %v1012, 0.0
    %v1029 = vmax.f32 %v1013, 0.0
    %v1030 = vmax.f32 %v1014, 0.0
    %v1031 = vmax.f32 %v1015, 0.0
    %v1032 = vmax.f32 %v1016, 0.0
    %v1033 = vmax.f32 %v1017, 0.0
    %v1034 = vmax.f32 %v1018, 0.0
    %v1035 = vpack.c.bf16 %v1020, %v1019
    %v1036 = vpack.c.bf16 %v1022, %v1021
    %v1037 = vld [vmem:[%s4] sm:$0xf]
    %v1038 = vld [vmem:[%s4 + $0x4] sm:$0xf]
    %v1039 = vld [vmem:[%s4 + $0x8] sm:$0xf]
    %v1040 = vld [vmem:[%s4 + $0xc] sm:$0xf]
    %v1041 = vld [vmem:[%s4 + $0x10] sm:$0xf]
    %v1042 = vld [vmem:[%s4 + $0x14] sm:$0xf]
    %v1043 = vld [vmem:[%s4 + $0x18] sm:$0xf]
    %v1044 = vld [vmem:[%s4 + $0x1c] sm:$0xf]
    %v1045 = vld [vmem:[%s4 + $0x20] sm:$0xf]
    %v1046 = vld [vmem:[%s4 + $0x24] sm:$0xf]
    %v1047 = vld [vmem:[%s4 + $0x28] sm:$0xf]
    %v1048 = vld [vmem:[%s4 + $0x2c] sm:$0xf]
    %v1049 = vld [vmem:[%s4 + $0x30] sm:$0xf]
    %v1050 = vld [vmem:[%s4 + $0x34] sm:$0xf]
    %v1051 = vld [vmem:[%s4 + $0x38] sm:$0xf]
    %v1052 = vld [vmem:[%s4 + $0x3c] sm:$0xf]
    %v1053 = vpack.c.bf16 %v1024, %v1023
    %v1054 = vpack.c.bf16 %v1026, %v1025
    %s1055 = scalar_lea.vmem %s4, 64
    %v1056 = vld [vmem:[%s1055] sm:$0xf]
    %v1057 = vld [vmem:[%s1055 + $0x4] sm:$0xf]
    %v1058 = vld [vmem:[%s1055 + $0x8] sm:$0xf]
    %v1059 = vld [vmem:[%s1055 + $0xc] sm:$0xf]
    %v1060 = vld [vmem:[%s1055 + $0x10] sm:$0xf]
    %v1061 = vld [vmem:[%s1055 + $0x14] sm:$0xf]
    %v1062 = vld [vmem:[%s1055 + $0x18] sm:$0xf]
    %v1063 = vld [vmem:[%s1055 + $0x1c] sm:$0xf]
    %v1064 = vld [vmem:[%s1055 + $0x20] sm:$0xf]
    %v1065 = vld [vmem:[%s1055 + $0x24] sm:$0xf]
    %v1066 = vld [vmem:[%s1055 + $0x28] sm:$0xf]
    %v1067 = vld [vmem:[%s1055 + $0x2c] sm:$0xf]
    %v1068 = vld [vmem:[%s1055 + $0x30] sm:$0xf]
    %v1069 = vld [vmem:[%s1055 + $0x34] sm:$0xf]
    %v1070 = vld [vmem:[%s1055 + $0x38] sm:$0xf]
    %v1071 = vld [vmem:[%s1055 + $0x3c] sm:$0xf]
    %v1088 = vunpack.c.l.b16 %v1056
    %v1089 = vunpack.c.l.b16 %v1057
    %v1090 = vunpack.c.l.b16 %v1058
    %v1091 = vunpack.c.l.b16 %v1059
    %v1092 = vunpack.c.l.b16 %v1060
    %v1093 = vunpack.c.l.b16 %v1061
    %v1094 = vunpack.c.l.b16 %v1062
    %v1095 = vunpack.c.l.b16 %v1063
    %v1096 = vunpack.c.l.b16 %v1064
    %v1097 = vunpack.c.l.b16 %v1065
    %v1098 = vunpack.c.l.b16 %v1066
    %v1099 = vunpack.c.l.b16 %v1067
    %v1100 = vunpack.c.l.b16 %v1068
    %v1101 = vunpack.c.l.b16 %v1069
    %v1102 = vunpack.c.l.b16 %v1070
    %v1103 = vunpack.c.l.b16 %v1071
    %v1104 = vpack.c.b16 %v1089, %v1088
    %v1105 = vpack.c.b16 %v1091, %v1090
    %v1106 = vpack.c.b16 %v1093, %v1092
    %v1107 = vpack.c.b16 %v1095, %v1094
    %v1108 = vpack.c.b16 %v1097, %v1096
    %v1109 = vpack.c.b16 %v1099, %v1098
    %v1110 = vpack.c.b16 %v1101, %v1100
    %v1111 = vpack.c.b16 %v1103, %v1102
    %1120 = vmatprep.subr.bf16.mxu0 0
    %1121 = vmatpush1.bf16.msra.mxu0 %v1111
    %1122 = vmatprep.subr.bf16.mxu0 0
    %1123 = vmatpush1.bf16.msra.mxu0 %v1110
    %1124 = vmatprep.subr.bf16.mxu0 0
    %1125 = vmatpush1.bf16.msra.mxu0 %v1109
    %1126 = vmatprep.subr.bf16.mxu0 0
    %1127 = vmatpush1.bf16.msra.mxu0 %v1108
    %1128 = vmatprep.subr.bf16.mxu0 0
    %1129 = vmatpush1.bf16.msra.mxu0 %v1107
    %1130 = vmatprep.subr.bf16.mxu0 0
    %1131 = vmatpush1.bf16.msra.mxu0 %v1106
    %1132 = vmatprep.subr.bf16.mxu0 0
    %1133 = vmatpush1.bf16.msra.mxu0 %v1105
    %1134 = vmatprep.subr.bf16.mxu0 0
    %1135 = vmatpush1.bf16.msra.mxu0 %v1104
    %1136 = vmatprep.subr.bf16.mxu0 0
    %1137 = vmatpush2.bf16.msra.mxu0 0
    %1138 = vmatprep.subr.bf16.mxu0 0
    %1139 = vmatpush2.bf16.msra.mxu0 0
    %1140 = vmatprep.subr.bf16.mxu0 0
    %1141 = vmatpush2.bf16.msra.mxu0 0
    %1142 = vmatprep.subr.bf16.mxu0 0
    %1143 = vmatpush2.bf16.msra.mxu0 0
    %1144 = vmatprep.subr.bf16.mxu0 0
    %1145 = vmatpush2.bf16.msra.mxu0 0
    %1146 = vmatprep.subr.bf16.mxu0 0
    %1147 = vmatpush2.bf16.msra.mxu0 0
    %1148 = vmatprep.subr.bf16.mxu0 0
    %1149 = vmatpush2.bf16.msra.mxu0 0
    %1150 = vmatprep.subr.bf16.mxu0 0
    %1151 = vmatpush2.bf16.msra.mxu0 0
    %1152 = vmatprep.mubr.bf16.mxu0 0
    %1153 = vmatmul.mubr.bf16.gmra.mxu0 %v1053
    %v1154 = vpop.f32.mrf.mxu0
    %v1155 = vadd.f32 0.0, %v1154
    %v1156 = vpop.f32.mrf.mxu0
    %v1157 = vpop.f32.mrf.mxu0
    %v1158 = vadd.f32 0.0, %v1157
    %v1159 = vpop.f32.mrf.mxu0
    %1160 = vmatprep.mubr.bf16.mxu0 0
    %1161 = vmatmul.mubr.bf16.gmra.mxu0 %v1054
    %v1162 = vpop.f32.mrf.mxu0
    %v1163 = vadd.f32 0.0, %v1162
    %v1164 = vpop.f32.mrf.mxu0
    %v1165 = vpop.f32.mrf.mxu0
    %v1166 = vadd.f32 0.0, %v1165
    %v1167 = vpop.f32.mrf.mxu0
    %1168 = vdwg.mxu0
    %v1185 = vunpack.c.l.b16 %v1037
    %v1186 = vunpack.c.l.b16 %v1038
    %v1187 = vunpack.c.l.b16 %v1039
    %v1188 = vunpack.c.l.b16 %v1040
    %v1189 = vunpack.c.l.b16 %v1041
    %v1190 = vunpack.c.l.b16 %v1042
    %v1191 = vunpack.c.l.b16 %v1043
    %v1192 = vunpack.c.l.b16 %v1044
    %v1193 = vunpack.c.l.b16 %v1045
    %v1194 = vunpack.c.l.b16 %v1046
    %v1195 = vunpack.c.l.b16 %v1047
    %v1196 = vunpack.c.l.b16 %v1048
    %v1197 = vunpack.c.l.b16 %v1049
    %v1198 = vunpack.c.l.b16 %v1050
    %v1199 = vunpack.c.l.b16 %v1051
    %v1200 = vunpack.c.l.b16 %v1052
    %v1201 = vpack.c.b16 %v1186, %v1185
    %v1202 = vpack.c.b16 %v1188, %v1187
    %v1203 = vpack.c.b16 %v1190, %v1189
    %v1204 = vpack.c.b16 %v1192, %v1191
    %v1205 = vpack.c.b16 %v1194, %v1193
    %v1206 = vpack.c.b16 %v1196, %v1195
    %v1207 = vpack.c.b16 %v1198, %v1197
    %v1208 = vpack.c.b16 %v1200, %v1199
    %1217 = vmatprep.subr.bf16.mxu0 0
    %1218 = vmatpush1.bf16.msra.mxu0 %v1208
    %1219 = vmatprep.subr.bf16.mxu0 0
    %1220 = vmatpush1.bf16.msra.mxu0 %v1207
    %1221 = vmatprep.subr.bf16.mxu0 0
    %1222 = vmatpush1.bf16.msra.mxu0 %v1206
    %1223 = vmatprep.subr.bf16.mxu0 0
    %1224 = vmatpush1.bf16.msra.mxu0 %v1205
    %1225 = vmatprep.subr.bf16.mxu0 0
    %1226 = vmatpush1.bf16.msra.mxu0 %v1204
    %1227 = vmatprep.subr.bf16.mxu0 0
    %1228 = vmatpush1.bf16.msra.mxu0 %v1203
    %1229 = vmatprep.subr.bf16.mxu0 0
    %1230 = vmatpush1.bf16.msra.mxu0 %v1202
    %1231 = vmatprep.subr.bf16.mxu0 0
    %1232 = vmatpush1.bf16.msra.mxu0 %v1201
    %1233 = vmatprep.subr.bf16.mxu0 0
    %1234 = vmatpush2.bf16.msra.mxu0 0
    %1235 = vmatprep.subr.bf16.mxu0 0
    %1236 = vmatpush2.bf16.msra.mxu0 0
    %1237 = vmatprep.subr.bf16.mxu0 0
    %1238 = vmatpush2.bf16.msra.mxu0 0
    %1239 = vmatprep.subr.bf16.mxu0 0
    %1240 = vmatpush2.bf16.msra.mxu0 0
    %1241 = vmatprep.subr.bf16.mxu0 0
    %1242 = vmatpush2.bf16.msra.mxu0 0
    %1243 = vmatprep.subr.bf16.mxu0 0
    %1244 = vmatpush2.bf16.msra.mxu0 0
    %1245 = vmatprep.subr.bf16.mxu0 0
    %1246 = vmatpush2.bf16.msra.mxu0 0
    %1247 = vmatprep.subr.bf16.mxu0 0
    %1248 = vmatpush2.bf16.msra.mxu0 0
    %1249 = vmatprep.mubr.bf16.mxu0 0
    %1250 = vmatmul.mubr.bf16.gmra.mxu0 %v1035
    %v1251 = vpop.f32.mrf.mxu0
    %v1252 = vadd.f32 %v1155, %v1251
    %v1253 = vpop.f32.mrf.mxu0
    %v1254 = vpop.f32.mrf.mxu0
    %v1255 = vadd.f32 %v1158, %v1254
    %v1256 = vpop.f32.mrf.mxu0
    %1257 = vmatprep.mubr.bf16.mxu0 0
    %1258 = vmatmul.mubr.bf16.gmra.mxu0 %v1036
    %v1259 = vpop.f32.mrf.mxu0
    %v1260 = vadd.f32 %v1163, %v1259
    %v1261 = vpop.f32.mrf.mxu0
    %v1262 = vpop.f32.mrf.mxu0
    %v1263 = vadd.f32 %v1166, %v1262
    %v1264 = vpop.f32.mrf.mxu0
    %1265 = vdwg.mxu0
    %v1266 = vpack.c.bf16 %v1028, %v1027
    %v1267 = vpack.c.bf16 %v1030, %v1029
    %s1268 = scalar_lea.vmem %s4, 128
    %v1269 = vld [vmem:[%s1268] sm:$0xf]
    %v1270 = vld [vmem:[%s1268 + $0x4] sm:$0xf]
    %v1271 = vld [vmem:[%s1268 + $0x8] sm:$0xf]
    %v1272 = vld [vmem:[%s1268 + $0xc] sm:$0xf]
    %v1273 = vld [vmem:[%s1268 + $0x10] sm:$0xf]
    %v1274 = vld [vmem:[%s1268 + $0x14] sm:$0xf]
    %v1275 = vld [vmem:[%s1268 + $0x18] sm:$0xf]
    %v1276 = vld [vmem:[%s1268 + $0x1c] sm:$0xf]
    %v1277 = vld [vmem:[%s1268 + $0x20] sm:$0xf]
    %v1278 = vld [vmem:[%s1268 + $0x24] sm:$0xf]
    %v1279 = vld [vmem:[%s1268 + $0x28] sm:$0xf]
    %v1280 = vld [vmem:[%s1268 + $0x2c] sm:$0xf]
    %v1281 = vld [vmem:[%s1268 + $0x30] sm:$0xf]
    %v1282 = vld [vmem:[%s1268 + $0x34] sm:$0xf]
    %v1283 = vld [vmem:[%s1268 + $0x38] sm:$0xf]
    %v1284 = vld [vmem:[%s1268 + $0x3c] sm:$0xf]
    %v1301 = vunpack.c.l.b16 %v1269
    %v1302 = vunpack.c.l.b16 %v1270
    %v1303 = vunpack.c.l.b16 %v1271
    %v1304 = vunpack.c.l.b16 %v1272
    %v1305 = vunpack.c.l.b16 %v1273
    %v1306 = vunpack.c.l.b16 %v1274
    %v1307 = vunpack.c.l.b16 %v1275
    %v1308 = vunpack.c.l.b16 %v1276
    %v1309 = vunpack.c.l.b16 %v1277
    %v1310 = vunpack.c.l.b16 %v1278
    %v1311 = vunpack.c.l.b16 %v1279
    %v1312 = vunpack.c.l.b16 %v1280
    %v1313 = vunpack.c.l.b16 %v1281
    %v1314 = vunpack.c.l.b16 %v1282
    %v1315 = vunpack.c.l.b16 %v1283
    %v1316 = vunpack.c.l.b16 %v1284
    %v1317 = vpack.c.b16 %v1302, %v1301
    %v1318 = vpack.c.b16 %v1304, %v1303
    %v1319 = vpack.c.b16 %v1306, %v1305
    %v1320 = vpack.c.b16 %v1308, %v1307
    %v1321 = vpack.c.b16 %v1310, %v1309
    %v1322 = vpack.c.b16 %v1312, %v1311
    %v1323 = vpack.c.b16 %v1314, %v1313
    %v1324 = vpack.c.b16 %v1316, %v1315
    %1333 = vmatprep.subr.bf16.mxu0 0
    %1334 = vmatpush1.bf16.msra.mxu0 %v1324
    %1335 = vmatprep.subr.bf16.mxu0 0
    %1336 = vmatpush1.bf16.msra.mxu0 %v1323
    %1337 = vmatprep.subr.bf16.mxu0 0
    %1338 = vmatpush1.bf16.msra.mxu0 %v1322
    %1339 = vmatprep.subr.bf16.mxu0 0
    %1340 = vmatpush1.bf16.msra.mxu0 %v1321
    %1341 = vmatprep.subr.bf16.mxu0 0
    %1342 = vmatpush1.bf16.msra.mxu0 %v1320
    %1343 = vmatprep.subr.bf16.mxu0 0
    %1344 = vmatpush1.bf16.msra.mxu0 %v1319
    %1345 = vmatprep.subr.bf16.mxu0 0
    %1346 = vmatpush1.bf16.msra.mxu0 %v1318
    %1347 = vmatprep.subr.bf16.mxu0 0
    %1348 = vmatpush1.bf16.msra.mxu0 %v1317
    %1349 = vmatprep.subr.bf16.mxu0 0
    %1350 = vmatpush2.bf16.msra.mxu0 0
    %1351 = vmatprep.subr.bf16.mxu0 0
    %1352 = vmatpush2.bf16.msra.mxu0 0
    %1353 = vmatprep.subr.bf16.mxu0 0
    %1354 = vmatpush2.bf16.msra.mxu0 0
    %1355 = vmatprep.subr.bf16.mxu0 0
    %1356 = vmatpush2.bf16.msra.mxu0 0
    %1357 = vmatprep.subr.bf16.mxu0 0
    %1358 = vmatpush2.bf16.msra.mxu0 0
    %1359 = vmatprep.subr.bf16.mxu0 0
    %1360 = vmatpush2.bf16.msra.mxu0 0
    %1361 = vmatprep.subr.bf16.mxu0 0
    %1362 = vmatpush2.bf16.msra.mxu0 0
    %1363 = vmatprep.subr.bf16.mxu0 0
    %1364 = vmatpush2.bf16.msra.mxu0 0
    %1365 = vmatprep.mubr.bf16.mxu0 0
    %1366 = vmatmul.mubr.bf16.gmra.mxu0 %v1266
    %v1367 = vpop.f32.mrf.mxu0
    %v1368 = vadd.f32 0.0, %v1367
    %v1369 = vpop.f32.mrf.mxu0
    %v1370 = vpop.f32.mrf.mxu0
    %v1371 = vadd.f32 0.0, %v1370
    %v1372 = vpop.f32.mrf.mxu0
    %1373 = vmatprep.mubr.bf16.mxu0 0
    %1374 = vmatmul.mubr.bf16.gmra.mxu0 %v1267
    %v1375 = vpop.f32.mrf.mxu0
    %v1376 = vadd.f32 0.0, %v1375
    %v1377 = vpop.f32.mrf.mxu0
    %v1378 = vpop.f32.mrf.mxu0
    %v1379 = vadd.f32 0.0, %v1378
    %v1380 = vpop.f32.mrf.mxu0
    %1381 = vdwg.mxu0
    %v1382 = vadd.f32 %v1252, %v1368
    %v1383 = vadd.f32 %v1255, %v1371
    %v1384 = vadd.f32 %v1260, %v1376
    %v1385 = vadd.f32 %v1263, %v1379
    %v1386 = vpack.c.bf16 %v1032, %v1031
    %v1387 = vpack.c.bf16 %v1034, %v1033
    %s1388 = scalar_lea.vmem %s4, 192
    %v1389 = vld [vmem:[%s1388] sm:$0xf]
    %v1390 = vld [vmem:[%s1388 + $0x4] sm:$0xf]
    %v1391 = vld [vmem:[%s1388 + $0x8] sm:$0xf]
    %v1392 = vld [vmem:[%s1388 + $0xc] sm:$0xf]
    %v1393 = vld [vmem:[%s1388 + $0x10] sm:$0xf]
    %v1394 = vld [vmem:[%s1388 + $0x14] sm:$0xf]
    %v1395 = vld [vmem:[%s1388 + $0x18] sm:$0xf]
    %v1396 = vld [vmem:[%s1388 + $0x1c] sm:$0xf]
    %v1397 = vld [vmem:[%s1388 + $0x20] sm:$0xf]
    %v1398 = vld [vmem:[%s1388 + $0x24] sm:$0xf]
    %v1399 = vld [vmem:[%s1388 + $0x28] sm:$0xf]
    %v1400 = vld [vmem:[%s1388 + $0x2c] sm:$0xf]
    %v1401 = vld [vmem:[%s1388 + $0x30] sm:$0xf]
    %v1402 = vld [vmem:[%s1388 + $0x34] sm:$0xf]
    %v1403 = vld [vmem:[%s1388 + $0x38] sm:$0xf]
    %v1404 = vld [vmem:[%s1388 + $0x3c] sm:$0xf]
    %v1421 = vunpack.c.l.b16 %v1389
    %v1422 = vunpack.c.l.b16 %v1390
    %v1423 = vunpack.c.l.b16 %v1391
    %v1424 = vunpack.c.l.b16 %v1392
    %v1425 = vunpack.c.l.b16 %v1393
    %v1426 = vunpack.c.l.b16 %v1394
    %v1427 = vunpack.c.l.b16 %v1395
    %v1428 = vunpack.c.l.b16 %v1396
    %v1429 = vunpack.c.l.b16 %v1397
    %v1430 = vunpack.c.l.b16 %v1398
    %v1431 = vunpack.c.l.b16 %v1399
    %v1432 = vunpack.c.l.b16 %v1400
    %v1433 = vunpack.c.l.b16 %v1401
    %v1434 = vunpack.c.l.b16 %v1402
    %v1435 = vunpack.c.l.b16 %v1403
    %v1436 = vunpack.c.l.b16 %v1404
    %v1437 = vpack.c.b16 %v1422, %v1421
    %v1438 = vpack.c.b16 %v1424, %v1423
    %v1439 = vpack.c.b16 %v1426, %v1425
    %v1440 = vpack.c.b16 %v1428, %v1427
    %v1441 = vpack.c.b16 %v1430, %v1429
    %v1442 = vpack.c.b16 %v1432, %v1431
    %v1443 = vpack.c.b16 %v1434, %v1433
    %v1444 = vpack.c.b16 %v1436, %v1435
    %1453 = vmatprep.subr.bf16.mxu0 0
    %1454 = vmatpush1.bf16.msra.mxu0 %v1444
    %1455 = vmatprep.subr.bf16.mxu0 0
    %1456 = vmatpush1.bf16.msra.mxu0 %v1443
    %1457 = vmatprep.subr.bf16.mxu0 0
    %1458 = vmatpush1.bf16.msra.mxu0 %v1442
    %1459 = vmatprep.subr.bf16.mxu0 0
    %1460 = vmatpush1.bf16.msra.mxu0 %v1441
    %1461 = vmatprep.subr.bf16.mxu0 0
    %1462 = vmatpush1.bf16.msra.mxu0 %v1440
    %1463 = vmatprep.subr.bf16.mxu0 0
    %1464 = vmatpush1.bf16.msra.mxu0 %v1439
    %1465 = vmatprep.subr.bf16.mxu0 0
    %1466 = vmatpush1.bf16.msra.mxu0 %v1438
    %1467 = vmatprep.subr.bf16.mxu0 0
    %1468 = vmatpush1.bf16.msra.mxu0 %v1437
    %1469 = vmatprep.subr.bf16.mxu0 0
    %1470 = vmatpush2.bf16.msra.mxu0 0
    %1471 = vmatprep.subr.bf16.mxu0 0
    %1472 = vmatpush2.bf16.msra.mxu0 0
    %1473 = vmatprep.subr.bf16.mxu0 0
    %1474 = vmatpush2.bf16.msra.mxu0 0
    %1475 = vmatprep.subr.bf16.mxu0 0
    %1476 = vmatpush2.bf16.msra.mxu0 0
    %1477 = vmatprep.subr.bf16.mxu0 0
    %1478 = vmatpush2.bf16.msra.mxu0 0
    %1479 = vmatprep.subr.bf16.mxu0 0
    %1480 = vmatpush2.bf16.msra.mxu0 0
    %1481 = vmatprep.subr.bf16.mxu0 0
    %1482 = vmatpush2.bf16.msra.mxu0 0
    %1483 = vmatprep.subr.bf16.mxu0 0
    %1484 = vmatpush2.bf16.msra.mxu0 0
    %1485 = vmatprep.mubr.bf16.mxu0 0
    %1486 = vmatmul.mubr.bf16.gmra.mxu0 %v1386
    %v1487 = vpop.f32.mrf.mxu0
    %v1488 = vadd.f32 0.0, %v1487
    %v1489 = vpop.f32.mrf.mxu0
    %v1490 = vpop.f32.mrf.mxu0
    %v1491 = vadd.f32 0.0, %v1490
    %v1492 = vpop.f32.mrf.mxu0
    %1493 = vmatprep.mubr.bf16.mxu0 0
    %1494 = vmatmul.mubr.bf16.gmra.mxu0 %v1387
    %v1495 = vpop.f32.mrf.mxu0
    %v1496 = vadd.f32 0.0, %v1495
    %v1497 = vpop.f32.mrf.mxu0
    %v1498 = vpop.f32.mrf.mxu0
    %v1499 = vadd.f32 0.0, %v1498
    %v1500 = vpop.f32.mrf.mxu0
    %1501 = vdwg.mxu0
    %v1502 = vadd.f32 %v1382, %v1488
    %v1503 = vadd.f32 %v1383, %v1491
    %v1504 = vadd.f32 %v1384, %v1496
    %v1505 = vadd.f32 %v1385, %v1499
    %v1506 = vld [vmem:[%s5] sm:$0x1]
    %v1507 = vld [vmem:[%s6] sm:$0x1]
    %v1508 = vadd.f32 %v1502, %v1503
    %v1509 = vadd.f32 %v1508, %v1504
    %v1510 = vadd.f32 %v1509, %v1505
    %v1511 = vrot.slane %v1510, 4
    %v1512 = vadd.f32 %v1510, %v1511
    %v1513 = vrot.slane %v1512, 2
    %v1514 = vadd.f32 %v1512, %v1513
    %v1515 = vrot.slane %v1514, 1
    %v1516 = vadd.f32 %v1514, %v1515
    %v1517 = vmul.f32 %v1502, %v1502
    %v1518 = vmul.f32 %v1503, %v1503
    %v1519 = vmul.f32 %v1504, %v1504
    %v1520 = vmul.f32 %v1505, %v1505
    %v1521 = vadd.f32 %v1517, %v1518
    %v1522 = vadd.f32 %v1521, %v1519
    %v1523 = vadd.f32 %v1522, %v1520
    %v1524 = vrot.slane %v1523, 4
    %v1525 = vadd.f32 %v1523, %v1524
    %v1526 = vrot.slane %v1525, 2
    %v1527 = vadd.f32 %v1525, %v1526
    %v1528 = vrot.slane %v1527, 1
    %v1529 = vadd.f32 %v1527, %v1528
    %v1530 = vmul.f32 %v1516, 0.03125
    %v1531 = vmul.f32 %v1529, 0.03125
    %v1532 = vmul.f32 %v1530, %v1530
    %v1533 = vsub.f32 %v1531, %v1532
    %v1534 = vmax.f32 %v1533, 0.0
    %v1535 = vadd.f32 %v1534, 1e-05
    %v1536 = vrsqrt.pop %v1535
    %v1537 = vmul.f32 %v1536, %v1506
    %v1538 = vmul.f32 %v1530, %v1537
    %v1539 = vsub.f32 %v1507, %v1538
    %v1540 = vlaneseq
    %v1541 = vshrl.u32 %v1540, 7
    %v1542 = vsub.s32 0, %v1541
    %v1543 = vrot.slane %v1537, %v1542
    %v1544 = vmul.f32 %v1502, %v1543
    %v1545 = vmul.f32 %v1503, %v1543
    %v1546 = vmul.f32 %v1504, %v1543
    %v1547 = vmul.f32 %v1505, %v1543
    %v1549 = vlaneseq
    %v1550 = vshrl.u32 %v1549, 7
    %v1551 = vsub.s32 0, %v1550
    %v1552 = vrot.slane %v1539, %v1551
    %v1554 = vadd.f32 %v1544, %v1552
    %v1555 = vadd.f32 %v1545, %v1552
    %v1556 = vadd.f32 %v1546, %v1552
    %v1557 = vadd.f32 %v1547, %v1552
    %v1558 = vmax.f32 %v1554, 0.0
    %v1559 = vmax.f32 %v1555, 0.0
    %v1560 = vmax.f32 %v1556, 0.0
    %v1561 = vmax.f32 %v1557, 0.0
    %1562 = vst [vmem:[#allocation2] sm:$0xff] %v1558
    %1563 = vst [vmem:[#allocation2 + $0x8] sm:$0xff] %v1559
    %1564 = vst [vmem:[#allocation2 + $0x10] sm:$0xff] %v1560
    %1565 = vst [vmem:[#allocation2 + $0x18] sm:$0xff] %v1561
    %v1566 = vld [vmem:[#allocation2] sm:$0x3]
    %v1567 = vpack.c.bf16 %v1566, %v1566
    %v1568 = vld [vmem:[%s7] sm:$0xff]
    %v1569 = vld [vmem:[%s7 + $0x8] sm:$0xff]
    %v1570 = vld [vmem:[%s7 + $0x10] sm:$0xff]
    %v1571 = vld [vmem:[%s7 + $0x18] sm:$0xff]
    %v1572 = vld [vmem:[%s7 + $0x20] sm:$0xff]
    %v1573 = vld [vmem:[%s7 + $0x28] sm:$0xff]
    %v1574 = vld [vmem:[%s7 + $0x30] sm:$0xff]
    %v1575 = vld [vmem:[%s7 + $0x38] sm:$0xff]
    %v1576 = vld [vmem:[%s7 + $0x40] sm:$0xff]
    %v1577 = vld [vmem:[%s7 + $0x48] sm:$0xff]
    %v1578 = vld [vmem:[%s7 + $0x50] sm:$0xff]
    %v1579 = vld [vmem:[%s7 + $0x58] sm:$0xff]
    %v1580 = vld [vmem:[%s7 + $0x60] sm:$0xff]
    %v1581 = vld [vmem:[%s7 + $0x68] sm:$0xff]
    %v1582 = vld [vmem:[%s7 + $0x70] sm:$0xff]
    %v1583 = vld [vmem:[%s7 + $0x78] sm:$0xff]
    %v1584 = vld [vmem:[#allocation2 + $0x2] sm:$0x3]
    %v1585 = vpack.c.bf16 %v1584, %v1584
    %s1586 = scalar_lea.vmem %s7, 128
    %v1587 = vld [vmem:[%s1586] sm:$0xff]
    %v1588 = vld [vmem:[%s1586 + $0x8] sm:$0xff]
    %v1589 = vld [vmem:[%s1586 + $0x10] sm:$0xff]
    %v1590 = vld [vmem:[%s1586 + $0x18] sm:$0xff]
    %v1591 = vld [vmem:[%s1586 + $0x20] sm:$0xff]
    %v1592 = vld [vmem:[%s1586 + $0x28] sm:$0xff]
    %v1593 = vld [vmem:[%s1586 + $0x30] sm:$0xff]
    %v1594 = vld [vmem:[%s1586 + $0x38] sm:$0xff]
    %v1595 = vld [vmem:[%s1586 + $0x40] sm:$0xff]
    %v1596 = vld [vmem:[%s1586 + $0x48] sm:$0xff]
    %v1597 = vld [vmem:[%s1586 + $0x50] sm:$0xff]
    %v1598 = vld [vmem:[%s1586 + $0x58] sm:$0xff]
    %v1599 = vld [vmem:[%s1586 + $0x60] sm:$0xff]
    %v1600 = vld [vmem:[%s1586 + $0x68] sm:$0xff]
    %v1601 = vld [vmem:[%s1586 + $0x70] sm:$0xff]
    %v1602 = vld [vmem:[%s1586 + $0x78] sm:$0xff]
    %v1619 = vunpack.c.l.b16 %v1587
    %v1620 = vunpack.c.h.b16 %v1587
    %v1621 = vunpack.c.l.b16 %v1588
    %v1622 = vunpack.c.h.b16 %v1588
    %v1623 = vunpack.c.l.b16 %v1589
    %v1624 = vunpack.c.h.b16 %v1589
    %v1625 = vunpack.c.l.b16 %v1590
    %v1626 = vunpack.c.h.b16 %v1590
    %v1627 = vunpack.c.l.b16 %v1591
    %v1628 = vunpack.c.h.b16 %v1591
    %v1629 = vunpack.c.l.b16 %v1592
    %v1630 = vunpack.c.h.b16 %v1592
    %v1631 = vunpack.c.l.b16 %v1593
    %v1632 = vunpack.c.h.b16 %v1593
    %v1633 = vunpack.c.l.b16 %v1594
    %v1634 = vunpack.c.h.b16 %v1594
    %v1635 = vunpack.c.l.b16 %v1595
    %v1636 = vunpack.c.h.b16 %v1595
    %v1637 = vunpack.c.l.b16 %v1596
    %v1638 = vunpack.c.h.b16 %v1596
    %v1639 = vunpack.c.l.b16 %v1597
    %v1640 = vunpack.c.h.b16 %v1597
    %v1641 = vunpack.c.l.b16 %v1598
    %v1642 = vunpack.c.h.b16 %v1598
    %v1643 = vunpack.c.l.b16 %v1599
    %v1644 = vunpack.c.h.b16 %v1599
    %v1645 = vunpack.c.l.b16 %v1600
    %v1646 = vunpack.c.h.b16 %v1600
    %v1647 = vunpack.c.l.b16 %v1601
    %v1648 = vunpack.c.h.b16 %v1601
    %v1649 = vunpack.c.l.b16 %v1602
    %v1650 = vunpack.c.h.b16 %v1602
    %v1651 = vpack.c.b16 %v1621, %v1619
    %v1652 = vpack.c.b16 %v1622, %v1620
    %v1653 = vpack.c.b16 %v1625, %v1623
    %v1654 = vpack.c.b16 %v1626, %v1624
    %v1655 = vpack.c.b16 %v1629, %v1627
    %v1656 = vpack.c.b16 %v1630, %v1628
    %v1657 = vpack.c.b16 %v1633, %v1631
    %v1658 = vpack.c.b16 %v1634, %v1632
    %v1659 = vpack.c.b16 %v1637, %v1635
    %v1660 = vpack.c.b16 %v1638, %v1636
    %v1661 = vpack.c.b16 %v1641, %v1639
    %v1662 = vpack.c.b16 %v1642, %v1640
    %v1663 = vpack.c.b16 %v1645, %v1643
    %v1664 = vpack.c.b16 %v1646, %v1644
    %v1665 = vpack.c.b16 %v1649, %v1647
    %v1666 = vpack.c.b16 %v1650, %v1648
    %1683 = vmatprep.subr.bf16.mxu0 %v1666
    %1684 = vmatpush1.bf16.msra.mxu0 %v1665
    %1685 = vmatprep.subr.bf16.mxu0 %v1664
    %1686 = vmatpush1.bf16.msra.mxu0 %v1663
    %1687 = vmatprep.subr.bf16.mxu0 %v1662
    %1688 = vmatpush1.bf16.msra.mxu0 %v1661
    %1689 = vmatprep.subr.bf16.mxu0 %v1660
    %1690 = vmatpush1.bf16.msra.mxu0 %v1659
    %1691 = vmatprep.subr.bf16.mxu0 %v1658
    %1692 = vmatpush1.bf16.msra.mxu0 %v1657
    %1693 = vmatprep.subr.bf16.mxu0 %v1656
    %1694 = vmatpush1.bf16.msra.mxu0 %v1655
    %1695 = vmatprep.subr.bf16.mxu0 %v1654
    %1696 = vmatpush1.bf16.msra.mxu0 %v1653
    %1697 = vmatprep.subr.bf16.mxu0 %v1652
    %1698 = vmatpush1.bf16.msra.mxu0 %v1651
    %1699 = vmatprep.subr.bf16.mxu0 0
    %1700 = vmatpush2.bf16.msra.mxu0 0
    %1701 = vmatprep.subr.bf16.mxu0 0
    %1702 = vmatpush2.bf16.msra.mxu0 0
    %1703 = vmatprep.subr.bf16.mxu0 0
    %1704 = vmatpush2.bf16.msra.mxu0 0
    %1705 = vmatprep.subr.bf16.mxu0 0
    %1706 = vmatpush2.bf16.msra.mxu0 0
    %1707 = vmatprep.subr.bf16.mxu0 0
    %1708 = vmatpush2.bf16.msra.mxu0 0
    %1709 = vmatprep.subr.bf16.mxu0 0
    %1710 = vmatpush2.bf16.msra.mxu0 0
    %1711 = vmatprep.subr.bf16.mxu0 0
    %1712 = vmatpush2.bf16.msra.mxu0 0
    %1713 = vmatprep.subr.bf16.mxu0 0
    %1714 = vmatpush2.bf16.msra.mxu0 0
    %1715 = vmatprep.mubr.bf16.mxu0 0
    %1716 = vmatmul.mubr.bf16.gmra.mxu0 %v1585
    %v1717 = vpop.f32.mrf.mxu0
    %v1718 = vadd.f32 0.0, %v1717
    %v1719 = vpop.f32.mrf.mxu0
    %v1720 = vadd.f32 0.0, %v1719
    %v1721 = vpop.f32.mrf.mxu0
    %v1722 = vpop.f32.mrf.mxu0
    %1723 = vdwg.mxu0
    %v1740 = vunpack.c.l.b16 %v1568
    %v1741 = vunpack.c.h.b16 %v1568
    %v1742 = vunpack.c.l.b16 %v1569
    %v1743 = vunpack.c.h.b16 %v1569
    %v1744 = vunpack.c.l.b16 %v1570
    %v1745 = vunpack.c.h.b16 %v1570
    %v1746 = vunpack.c.l.b16 %v1571
    %v1747 = vunpack.c.h.b16 %v1571
    %v1748 = vunpack.c.l.b16 %v1572
    %v1749 = vunpack.c.h.b16 %v1572
    %v1750 = vunpack.c.l.b16 %v1573
    %v1751 = vunpack.c.h.b16 %v1573
    %v1752 = vunpack.c.l.b16 %v1574
    %v1753 = vunpack.c.h.b16 %v1574
    %v1754 = vunpack.c.l.b16 %v1575
    %v1755 = vunpack.c.h.b16 %v1575
    %v1756 = vunpack.c.l.b16 %v1576
    %v1757 = vunpack.c.h.b16 %v1576
    %v1758 = vunpack.c.l.b16 %v1577
    %v1759 = vunpack.c.h.b16 %v1577
    %v1760 = vunpack.c.l.b16 %v1578
    %v1761 = vunpack.c.h.b16 %v1578
    %v1762 = vunpack.c.l.b16 %v1579
    %v1763 = vunpack.c.h.b16 %v1579
    %v1764 = vunpack.c.l.b16 %v1580
    %v1765 = vunpack.c.h.b16 %v1580
    %v1766 = vunpack.c.l.b16 %v1581
    %v1767 = vunpack.c.h.b16 %v1581
    %v1768 = vunpack.c.l.b16 %v1582
    %v1769 = vunpack.c.h.b16 %v1582
    %v1770 = vunpack.c.l.b16 %v1583
    %v1771 = vunpack.c.h.b16 %v1583
    %v1772 = vpack.c.b16 %v1742, %v1740
    %v1773 = vpack.c.b16 %v1743, %v1741
    %v1774 = vpack.c.b16 %v1746, %v1744
    %v1775 = vpack.c.b16 %v1747, %v1745
    %v1776 = vpack.c.b16 %v1750, %v1748
    %v1777 = vpack.c.b16 %v1751, %v1749
    %v1778 = vpack.c.b16 %v1754, %v1752
    %v1779 = vpack.c.b16 %v1755, %v1753
    %v1780 = vpack.c.b16 %v1758, %v1756
    %v1781 = vpack.c.b16 %v1759, %v1757
    %v1782 = vpack.c.b16 %v1762, %v1760
    %v1783 = vpack.c.b16 %v1763, %v1761
    %v1784 = vpack.c.b16 %v1766, %v1764
    %v1785 = vpack.c.b16 %v1767, %v1765
    %v1786 = vpack.c.b16 %v1770, %v1768
    %v1787 = vpack.c.b16 %v1771, %v1769
    %1804 = vmatprep.subr.bf16.mxu0 %v1787
    %1805 = vmatpush1.bf16.msra.mxu0 %v1786
    %1806 = vmatprep.subr.bf16.mxu0 %v1785
    %1807 = vmatpush1.bf16.msra.mxu0 %v1784
    %1808 = vmatprep.subr.bf16.mxu0 %v1783
    %1809 = vmatpush1.bf16.msra.mxu0 %v1782
    %1810 = vmatprep.subr.bf16.mxu0 %v1781
    %1811 = vmatpush1.bf16.msra.mxu0 %v1780
    %1812 = vmatprep.subr.bf16.mxu0 %v1779
    %1813 = vmatpush1.bf16.msra.mxu0 %v1778
    %1814 = vmatprep.subr.bf16.mxu0 %v1777
    %1815 = vmatpush1.bf16.msra.mxu0 %v1776
    %1816 = vmatprep.subr.bf16.mxu0 %v1775
    %1817 = vmatpush1.bf16.msra.mxu0 %v1774
    %1818 = vmatprep.subr.bf16.mxu0 %v1773
    %1819 = vmatpush1.bf16.msra.mxu0 %v1772
    %1820 = vmatprep.subr.bf16.mxu0 0
    %1821 = vmatpush2.bf16.msra.mxu0 0
    %1822 = vmatprep.subr.bf16.mxu0 0
    %1823 = vmatpush2.bf16.msra.mxu0 0
    %1824 = vmatprep.subr.bf16.mxu0 0
    %1825 = vmatpush2.bf16.msra.mxu0 0
    %1826 = vmatprep.subr.bf16.mxu0 0
    %1827 = vmatpush2.bf16.msra.mxu0 0
    %1828 = vmatprep.subr.bf16.mxu0 0
    %1829 = vmatpush2.bf16.msra.mxu0 0
    %1830 = vmatprep.subr.bf16.mxu0 0
    %1831 = vmatpush2.bf16.msra.mxu0 0
    %1832 = vmatprep.subr.bf16.mxu0 0
    %1833 = vmatpush2.bf16.msra.mxu0 0
    %1834 = vmatprep.subr.bf16.mxu0 0
    %1835 = vmatpush2.bf16.msra.mxu0 0
    %1836 = vmatprep.mubr.bf16.mxu0 0
    %1837 = vmatmul.mubr.bf16.gmra.mxu0 %v1567
    %v1838 = vpop.f32.mrf.mxu0
    %v1839 = vadd.f32 %v1718, %v1838
    %v1840 = vpop.f32.mrf.mxu0
    %v1841 = vadd.f32 %v1720, %v1840
    %v1842 = vpop.f32.mrf.mxu0
    %v1843 = vpop.f32.mrf.mxu0
    %1844 = vdwg.mxu0
    %v1845 = vld [vmem:[#allocation2 + $0x4] sm:$0x3]
    %v1846 = vpack.c.bf16 %v1845, %v1845
    %s1847 = scalar_lea.vmem %s7, 256
    %v1848 = vld [vmem:[%s1847] sm:$0xff]
    %v1849 = vld [vmem:[%s1847 + $0x8] sm:$0xff]
    %v1850 = vld [vmem:[%s1847 + $0x10] sm:$0xff]
    %v1851 = vld [vmem:[%s1847 + $0x18] sm:$0xff]
    %v1852 = vld [vmem:[%s1847 + $0x20] sm:$0xff]
    %v1853 = vld [vmem:[%s1847 + $0x28] sm:$0xff]
    %v1854 = vld [vmem:[%s1847 + $0x30] sm:$0xff]
    %v1855 = vld [vmem:[%s1847 + $0x38] sm:$0xff]
    %v1856 = vld [vmem:[%s1847 + $0x40] sm:$0xff]
    %v1857 = vld [vmem:[%s1847 + $0x48] sm:$0xff]
    %v1858 = vld [vmem:[%s1847 + $0x50] sm:$0xff]
    %v1859 = vld [vmem:[%s1847 + $0x58] sm:$0xff]
    %v1860 = vld [vmem:[%s1847 + $0x60] sm:$0xff]
    %v1861 = vld [vmem:[%s1847 + $0x68] sm:$0xff]
    %v1862 = vld [vmem:[%s1847 + $0x70] sm:$0xff]
    %v1863 = vld [vmem:[%s1847 + $0x78] sm:$0xff]
    %v1880 = vunpack.c.l.b16 %v1848
    %v1881 = vunpack.c.h.b16 %v1848
    %v1882 = vunpack.c.l.b16 %v1849
    %v1883 = vunpack.c.h.b16 %v1849
    %v1884 = vunpack.c.l.b16 %v1850
    %v1885 = vunpack.c.h.b16 %v1850
    %v1886 = vunpack.c.l.b16 %v1851
    %v1887 = vunpack.c.h.b16 %v1851
    %v1888 = vunpack.c.l.b16 %v1852
    %v1889 = vunpack.c.h.b16 %v1852
    %v1890 = vunpack.c.l.b16 %v1853
    %v1891 = vunpack.c.h.b16 %v1853
    %v1892 = vunpack.c.l.b16 %v1854
    %v1893 = vunpack.c.h.b16 %v1854
    %v1894 = vunpack.c.l.b16 %v1855
    %v1895 = vunpack.c.h.b16 %v1855
    %v1896 = vunpack.c.l.b16 %v1856
    %v1897 = vunpack.c.h.b16 %v1856
    %v1898 = vunpack.c.l.b16 %v1857
    %v1899 = vunpack.c.h.b16 %v1857
    %v1900 = vunpack.c.l.b16 %v1858
    %v1901 = vunpack.c.h.b16 %v1858
    %v1902 = vunpack.c.l.b16 %v1859
    %v1903 = vunpack.c.h.b16 %v1859
    %v1904 = vunpack.c.l.b16 %v1860
    %v1905 = vunpack.c.h.b16 %v1860
    %v1906 = vunpack.c.l.b16 %v1861
    %v1907 = vunpack.c.h.b16 %v1861
    %v1908 = vunpack.c.l.b16 %v1862
    %v1909 = vunpack.c.h.b16 %v1862
    %v1910 = vunpack.c.l.b16 %v1863
    %v1911 = vunpack.c.h.b16 %v1863
    %v1912 = vpack.c.b16 %v1882, %v1880
    %v1913 = vpack.c.b16 %v1883, %v1881
    %v1914 = vpack.c.b16 %v1886, %v1884
    %v1915 = vpack.c.b16 %v1887, %v1885
    %v1916 = vpack.c.b16 %v1890, %v1888
    %v1917 = vpack.c.b16 %v1891, %v1889
    %v1918 = vpack.c.b16 %v1894, %v1892
    %v1919 = vpack.c.b16 %v1895, %v1893
    %v1920 = vpack.c.b16 %v1898, %v1896
    %v1921 = vpack.c.b16 %v1899, %v1897
    %v1922 = vpack.c.b16 %v1902, %v1900
    %v1923 = vpack.c.b16 %v1903, %v1901
    %v1924 = vpack.c.b16 %v1906, %v1904
    %v1925 = vpack.c.b16 %v1907, %v1905
    %v1926 = vpack.c.b16 %v1910, %v1908
    %v1927 = vpack.c.b16 %v1911, %v1909
    %1944 = vmatprep.subr.bf16.mxu0 %v1927
    %1945 = vmatpush1.bf16.msra.mxu0 %v1926
    %1946 = vmatprep.subr.bf16.mxu0 %v1925
    %1947 = vmatpush1.bf16.msra.mxu0 %v1924
    %1948 = vmatprep.subr.bf16.mxu0 %v1923
    %1949 = vmatpush1.bf16.msra.mxu0 %v1922
    %1950 = vmatprep.subr.bf16.mxu0 %v1921
    %1951 = vmatpush1.bf16.msra.mxu0 %v1920
    %1952 = vmatprep.subr.bf16.mxu0 %v1919
    %1953 = vmatpush1.bf16.msra.mxu0 %v1918
    %1954 = vmatprep.subr.bf16.mxu0 %v1917
    %1955 = vmatpush1.bf16.msra.mxu0 %v1916
    %1956 = vmatprep.subr.bf16.mxu0 %v1915
    %1957 = vmatpush1.bf16.msra.mxu0 %v1914
    %1958 = vmatprep.subr.bf16.mxu0 %v1913
    %1959 = vmatpush1.bf16.msra.mxu0 %v1912
    %1960 = vmatprep.subr.bf16.mxu0 0
    %1961 = vmatpush2.bf16.msra.mxu0 0
    %1962 = vmatprep.subr.bf16.mxu0 0
    %1963 = vmatpush2.bf16.msra.mxu0 0
    %1964 = vmatprep.subr.bf16.mxu0 0
    %1965 = vmatpush2.bf16.msra.mxu0 0
    %1966 = vmatprep.subr.bf16.mxu0 0
    %1967 = vmatpush2.bf16.msra.mxu0 0
    %1968 = vmatprep.subr.bf16.mxu0 0
    %1969 = vmatpush2.bf16.msra.mxu0 0
    %1970 = vmatprep.subr.bf16.mxu0 0
    %1971 = vmatpush2.bf16.msra.mxu0 0
    %1972 = vmatprep.subr.bf16.mxu0 0
    %1973 = vmatpush2.bf16.msra.mxu0 0
    %1974 = vmatprep.subr.bf16.mxu0 0
    %1975 = vmatpush2.bf16.msra.mxu0 0
    %1976 = vmatprep.mubr.bf16.mxu0 0
    %1977 = vmatmul.mubr.bf16.gmra.mxu0 %v1846
    %v1978 = vpop.f32.mrf.mxu0
    %v1979 = vadd.f32 0.0, %v1978
    %v1980 = vpop.f32.mrf.mxu0
    %v1981 = vadd.f32 0.0, %v1980
    %v1982 = vpop.f32.mrf.mxu0
    %v1983 = vpop.f32.mrf.mxu0
    %1984 = vdwg.mxu0
    %v1985 = vadd.f32 %v1839, %v1979
    %v1986 = vadd.f32 %v1841, %v1981
    %v1987 = vld [vmem:[#allocation2 + $0x6] sm:$0x3]
    %v1988 = vpack.c.bf16 %v1987, %v1987
    %s1989 = scalar_lea.vmem %s7, 384
    %v1990 = vld [vmem:[%s1989] sm:$0xff]
    %v1991 = vld [vmem:[%s1989 + $0x8] sm:$0xff]
    %v1992 = vld [vmem:[%s1989 + $0x10] sm:$0xff]
    %v1993 = vld [vmem:[%s1989 + $0x18] sm:$0xff]
    %v1994 = vld [vmem:[%s1989 + $0x20] sm:$0xff]
    %v1995 = vld [vmem:[%s1989 + $0x28] sm:$0xff]
    %v1996 = vld [vmem:[%s1989 + $0x30] sm:$0xff]
    %v1997 = vld [vmem:[%s1989 + $0x38] sm:$0xff]
    %v1998 = vld [vmem:[%s1989 + $0x40] sm:$0xff]
    %v1999 = vld [vmem:[%s1989 + $0x48] sm:$0xff]
    %v2000 = vld [vmem:[%s1989 + $0x50] sm:$0xff]
    %v2001 = vld [vmem:[%s1989 + $0x58] sm:$0xff]
    %v2002 = vld [vmem:[%s1989 + $0x60] sm:$0xff]
    %v2003 = vld [vmem:[%s1989 + $0x68] sm:$0xff]
    %v2004 = vld [vmem:[%s1989 + $0x70] sm:$0xff]
    %v2005 = vld [vmem:[%s1989 + $0x78] sm:$0xff]
    %v2022 = vunpack.c.l.b16 %v1990
    %v2023 = vunpack.c.h.b16 %v1990
    %v2024 = vunpack.c.l.b16 %v1991
    %v2025 = vunpack.c.h.b16 %v1991
    %v2026 = vunpack.c.l.b16 %v1992
    %v2027 = vunpack.c.h.b16 %v1992
    %v2028 = vunpack.c.l.b16 %v1993
    %v2029 = vunpack.c.h.b16 %v1993
    %v2030 = vunpack.c.l.b16 %v1994
    %v2031 = vunpack.c.h.b16 %v1994
    %v2032 = vunpack.c.l.b16 %v1995
    %v2033 = vunpack.c.h.b16 %v1995
    %v2034 = vunpack.c.l.b16 %v1996
    %v2035 = vunpack.c.h.b16 %v1996
    %v2036 = vunpack.c.l.b16 %v1997
    %v2037 = vunpack.c.h.b16 %v1997
    %v2038 = vunpack.c.l.b16 %v1998
    %v2039 = vunpack.c.h.b16 %v1998
    %v2040 = vunpack.c.l.b16 %v1999
    %v2041 = vunpack.c.h.b16 %v1999
    %v2042 = vunpack.c.l.b16 %v2000
    %v2043 = vunpack.c.h.b16 %v2000
    %v2044 = vunpack.c.l.b16 %v2001
    %v2045 = vunpack.c.h.b16 %v2001
    %v2046 = vunpack.c.l.b16 %v2002
    %v2047 = vunpack.c.h.b16 %v2002
    %v2048 = vunpack.c.l.b16 %v2003
    %v2049 = vunpack.c.h.b16 %v2003
    %v2050 = vunpack.c.l.b16 %v2004
    %v2051 = vunpack.c.h.b16 %v2004
    %v2052 = vunpack.c.l.b16 %v2005
    %v2053 = vunpack.c.h.b16 %v2005
    %v2054 = vpack.c.b16 %v2024, %v2022
    %v2055 = vpack.c.b16 %v2025, %v2023
    %v2056 = vpack.c.b16 %v2028, %v2026
    %v2057 = vpack.c.b16 %v2029, %v2027
    %v2058 = vpack.c.b16 %v2032, %v2030
    %v2059 = vpack.c.b16 %v2033, %v2031
    %v2060 = vpack.c.b16 %v2036, %v2034
    %v2061 = vpack.c.b16 %v2037, %v2035
    %v2062 = vpack.c.b16 %v2040, %v2038
    %v2063 = vpack.c.b16 %v2041, %v2039
    %v2064 = vpack.c.b16 %v2044, %v2042
    %v2065 = vpack.c.b16 %v2045, %v2043
    %v2066 = vpack.c.b16 %v2048, %v2046
    %v2067 = vpack.c.b16 %v2049, %v2047
    %v2068 = vpack.c.b16 %v2052, %v2050
    %v2069 = vpack.c.b16 %v2053, %v2051
    %2086 = vmatprep.subr.bf16.mxu0 %v2069
    %2087 = vmatpush1.bf16.msra.mxu0 %v2068
    %2088 = vmatprep.subr.bf16.mxu0 %v2067
    %2089 = vmatpush1.bf16.msra.mxu0 %v2066
    %2090 = vmatprep.subr.bf16.mxu0 %v2065
    %2091 = vmatpush1.bf16.msra.mxu0 %v2064
    %2092 = vmatprep.subr.bf16.mxu0 %v2063
    %2093 = vmatpush1.bf16.msra.mxu0 %v2062
    %2094 = vmatprep.subr.bf16.mxu0 %v2061
    %2095 = vmatpush1.bf16.msra.mxu0 %v2060
    %2096 = vmatprep.subr.bf16.mxu0 %v2059
    %2097 = vmatpush1.bf16.msra.mxu0 %v2058
    %2098 = vmatprep.subr.bf16.mxu0 %v2057
    %2099 = vmatpush1.bf16.msra.mxu0 %v2056
    %2100 = vmatprep.subr.bf16.mxu0 %v2055
    %2101 = vmatpush1.bf16.msra.mxu0 %v2054
    %2102 = vmatprep.subr.bf16.mxu0 0
    %2103 = vmatpush2.bf16.msra.mxu0 0
    %2104 = vmatprep.subr.bf16.mxu0 0
    %2105 = vmatpush2.bf16.msra.mxu0 0
    %2106 = vmatprep.subr.bf16.mxu0 0
    %2107 = vmatpush2.bf16.msra.mxu0 0
    %2108 = vmatprep.subr.bf16.mxu0 0
    %2109 = vmatpush2.bf16.msra.mxu0 0
    %2110 = vmatprep.subr.bf16.mxu0 0
    %2111 = vmatpush2.bf16.msra.mxu0 0
    %2112 = vmatprep.subr.bf16.mxu0 0
    %2113 = vmatpush2.bf16.msra.mxu0 0
    %2114 = vmatprep.subr.bf16.mxu0 0
    %2115 = vmatpush2.bf16.msra.mxu0 0
    %2116 = vmatprep.subr.bf16.mxu0 0
    %2117 = vmatpush2.bf16.msra.mxu0 0
    %2118 = vmatprep.mubr.bf16.mxu0 0
    %2119 = vmatmul.mubr.bf16.gmra.mxu0 %v1988
    %v2120 = vpop.f32.mrf.mxu0
    %v2121 = vadd.f32 0.0, %v2120
    %v2122 = vpop.f32.mrf.mxu0
    %v2123 = vadd.f32 0.0, %v2122
    %v2124 = vpop.f32.mrf.mxu0
    %v2125 = vpop.f32.mrf.mxu0
    %2126 = vdwg.mxu0
    %v2127 = vadd.f32 %v1985, %v2121
    %v2128 = vadd.f32 %v1986, %v2123
    %v2129 = vld [vmem:[#allocation2 + $0x8] sm:$0x3]
    %v2130 = vpack.c.bf16 %v2129, %v2129
    %s2131 = scalar_lea.vmem %s7, 512
    %v2132 = vld [vmem:[%s2131] sm:$0xff]
    %v2133 = vld [vmem:[%s2131 + $0x8] sm:$0xff]
    %v2134 = vld [vmem:[%s2131 + $0x10] sm:$0xff]
    %v2135 = vld [vmem:[%s2131 + $0x18] sm:$0xff]
    %v2136 = vld [vmem:[%s2131 + $0x20] sm:$0xff]
    %v2137 = vld [vmem:[%s2131 + $0x28] sm:$0xff]
    %v2138 = vld [vmem:[%s2131 + $0x30] sm:$0xff]
    %v2139 = vld [vmem:[%s2131 + $0x38] sm:$0xff]
    %v2140 = vld [vmem:[%s2131 + $0x40] sm:$0xff]
    %v2141 = vld [vmem:[%s2131 + $0x48] sm:$0xff]
    %v2142 = vld [vmem:[%s2131 + $0x50] sm:$0xff]
    %v2143 = vld [vmem:[%s2131 + $0x58] sm:$0xff]
    %v2144 = vld [vmem:[%s2131 + $0x60] sm:$0xff]
    %v2145 = vld [vmem:[%s2131 + $0x68] sm:$0xff]
    %v2146 = vld [vmem:[%s2131 + $0x70] sm:$0xff]
    %v2147 = vld [vmem:[%s2131 + $0x78] sm:$0xff]
    %v2164 = vunpack.c.l.b16 %v2132
    %v2165 = vunpack.c.h.b16 %v2132
    %v2166 = vunpack.c.l.b16 %v2133
    %v2167 = vunpack.c.h.b16 %v2133
    %v2168 = vunpack.c.l.b16 %v2134
    %v2169 = vunpack.c.h.b16 %v2134
    %v2170 = vunpack.c.l.b16 %v2135
    %v2171 = vunpack.c.h.b16 %v2135
    %v2172 = vunpack.c.l.b16 %v2136
    %v2173 = vunpack.c.h.b16 %v2136
    %v2174 = vunpack.c.l.b16 %v2137
    %v2175 = vunpack.c.h.b16 %v2137
    %v2176 = vunpack.c.l.b16 %v2138
    %v2177 = vunpack.c.h.b16 %v2138
    %v2178 = vunpack.c.l.b16 %v2139
    %v2179 = vunpack.c.h.b16 %v2139
    %v2180 = vunpack.c.l.b16 %v2140
    %v2181 = vunpack.c.h.b16 %v2140
    %v2182 = vunpack.c.l.b16 %v2141
    %v2183 = vunpack.c.h.b16 %v2141
    %v2184 = vunpack.c.l.b16 %v2142
    %v2185 = vunpack.c.h.b16 %v2142
    %v2186 = vunpack.c.l.b16 %v2143
    %v2187 = vunpack.c.h.b16 %v2143
    %v2188 = vunpack.c.l.b16 %v2144
    %v2189 = vunpack.c.h.b16 %v2144
    %v2190 = vunpack.c.l.b16 %v2145
    %v2191 = vunpack.c.h.b16 %v2145
    %v2192 = vunpack.c.l.b16 %v2146
    %v2193 = vunpack.c.h.b16 %v2146
    %v2194 = vunpack.c.l.b16 %v2147
    %v2195 = vunpack.c.h.b16 %v2147
    %v2196 = vpack.c.b16 %v2166, %v2164
    %v2197 = vpack.c.b16 %v2167, %v2165
    %v2198 = vpack.c.b16 %v2170, %v2168
    %v2199 = vpack.c.b16 %v2171, %v2169
    %v2200 = vpack.c.b16 %v2174, %v2172
    %v2201 = vpack.c.b16 %v2175, %v2173
    %v2202 = vpack.c.b16 %v2178, %v2176
    %v2203 = vpack.c.b16 %v2179, %v2177
    %v2204 = vpack.c.b16 %v2182, %v2180
    %v2205 = vpack.c.b16 %v2183, %v2181
    %v2206 = vpack.c.b16 %v2186, %v2184
    %v2207 = vpack.c.b16 %v2187, %v2185
    %v2208 = vpack.c.b16 %v2190, %v2188
    %v2209 = vpack.c.b16 %v2191, %v2189
    %v2210 = vpack.c.b16 %v2194, %v2192
    %v2211 = vpack.c.b16 %v2195, %v2193
    %2228 = vmatprep.subr.bf16.mxu0 %v2211
    %2229 = vmatpush1.bf16.msra.mxu0 %v2210
    %2230 = vmatprep.subr.bf16.mxu0 %v2209
    %2231 = vmatpush1.bf16.msra.mxu0 %v2208
    %2232 = vmatprep.subr.bf16.mxu0 %v2207
    %2233 = vmatpush1.bf16.msra.mxu0 %v2206
    %2234 = vmatprep.subr.bf16.mxu0 %v2205
    %2235 = vmatpush1.bf16.msra.mxu0 %v2204
    %2236 = vmatprep.subr.bf16.mxu0 %v2203
    %2237 = vmatpush1.bf16.msra.mxu0 %v2202
    %2238 = vmatprep.subr.bf16.mxu0 %v2201
    %2239 = vmatpush1.bf16.msra.mxu0 %v2200
    %2240 = vmatprep.subr.bf16.mxu0 %v2199
    %2241 = vmatpush1.bf16.msra.mxu0 %v2198
    %2242 = vmatprep.subr.bf16.mxu0 %v2197
    %2243 = vmatpush1.bf16.msra.mxu0 %v2196
    %2244 = vmatprep.subr.bf16.mxu0 0
    %2245 = vmatpush2.bf16.msra.mxu0 0
    %2246 = vmatprep.subr.bf16.mxu0 0
    %2247 = vmatpush2.bf16.msra.mxu0 0
    %2248 = vmatprep.subr.bf16.mxu0 0
    %2249 = vmatpush2.bf16.msra.mxu0 0
    %2250 = vmatprep.subr.bf16.mxu0 0
    %2251 = vmatpush2.bf16.msra.mxu0 0
    %2252 = vmatprep.subr.bf16.mxu0 0
    %2253 = vmatpush2.bf16.msra.mxu0 0
    %2254 = vmatprep.subr.bf16.mxu0 0
    %2255 = vmatpush2.bf16.msra.mxu0 0
    %2256 = vmatprep.subr.bf16.mxu0 0
    %2257 = vmatpush2.bf16.msra.mxu0 0
    %2258 = vmatprep.subr.bf16.mxu0 0
    %2259 = vmatpush2.bf16.msra.mxu0 0
    %2260 = vmatprep.mubr.bf16.mxu0 0
    %2261 = vmatmul.mubr.bf16.gmra.mxu0 %v2130
    %v2262 = vpop.f32.mrf.mxu0
    %v2263 = vadd.f32 0.0, %v2262
    %v2264 = vpop.f32.mrf.mxu0
    %v2265 = vadd.f32 0.0, %v2264
    %v2266 = vpop.f32.mrf.mxu0
    %v2267 = vpop.f32.mrf.mxu0
    %2268 = vdwg.mxu0
    %v2269 = vadd.f32 %v2127, %v2263
    %v2270 = vadd.f32 %v2128, %v2265
    %v2271 = vld [vmem:[#allocation2 + $0xa] sm:$0x3]
    %v2272 = vpack.c.bf16 %v2271, %v2271
    %s2273 = scalar_lea.vmem %s7, 640
    %v2274 = vld [vmem:[%s2273] sm:$0xff]
    %v2275 = vld [vmem:[%s2273 + $0x8] sm:$0xff]
    %v2276 = vld [vmem:[%s2273 + $0x10] sm:$0xff]
    %v2277 = vld [vmem:[%s2273 + $0x18] sm:$0xff]
    %v2278 = vld [vmem:[%s2273 + $0x20] sm:$0xff]
    %v2279 = vld [vmem:[%s2273 + $0x28] sm:$0xff]
    %v2280 = vld [vmem:[%s2273 + $0x30] sm:$0xff]
    %v2281 = vld [vmem:[%s2273 + $0x38] sm:$0xff]
    %v2282 = vld [vmem:[%s2273 + $0x40] sm:$0xff]
    %v2283 = vld [vmem:[%s2273 + $0x48] sm:$0xff]
    %v2284 = vld [vmem:[%s2273 + $0x50] sm:$0xff]
    %v2285 = vld [vmem:[%s2273 + $0x58] sm:$0xff]
    %v2286 = vld [vmem:[%s2273 + $0x60] sm:$0xff]
    %v2287 = vld [vmem:[%s2273 + $0x68] sm:$0xff]
    %v2288 = vld [vmem:[%s2273 + $0x70] sm:$0xff]
    %v2289 = vld [vmem:[%s2273 + $0x78] sm:$0xff]
    %v2306 = vunpack.c.l.b16 %v2274
    %v2307 = vunpack.c.h.b16 %v2274
    %v2308 = vunpack.c.l.b16 %v2275
    %v2309 = vunpack.c.h.b16 %v2275
    %v2310 = vunpack.c.l.b16 %v2276
    %v2311 = vunpack.c.h.b16 %v2276
    %v2312 = vunpack.c.l.b16 %v2277
    %v2313 = vunpack.c.h.b16 %v2277
    %v2314 = vunpack.c.l.b16 %v2278
    %v2315 = vunpack.c.h.b16 %v2278
    %v2316 = vunpack.c.l.b16 %v2279
    %v2317 = vunpack.c.h.b16 %v2279
    %v2318 = vunpack.c.l.b16 %v2280
    %v2319 = vunpack.c.h.b16 %v2280
    %v2320 = vunpack.c.l.b16 %v2281
    %v2321 = vunpack.c.h.b16 %v2281
    %v2322 = vunpack.c.l.b16 %v2282
    %v2323 = vunpack.c.h.b16 %v2282
    %v2324 = vunpack.c.l.b16 %v2283
    %v2325 = vunpack.c.h.b16 %v2283
    %v2326 = vunpack.c.l.b16 %v2284
    %v2327 = vunpack.c.h.b16 %v2284
    %v2328 = vunpack.c.l.b16 %v2285
    %v2329 = vunpack.c.h.b16 %v2285
    %v2330 = vunpack.c.l.b16 %v2286
    %v2331 = vunpack.c.h.b16 %v2286
    %v2332 = vunpack.c.l.b16 %v2287
    %v2333 = vunpack.c.h.b16 %v2287
    %v2334 = vunpack.c.l.b16 %v2288
    %v2335 = vunpack.c.h.b16 %v2288
    %v2336 = vunpack.c.l.b16 %v2289
    %v2337 = vunpack.c.h.b16 %v2289
    %v2338 = vpack.c.b16 %v2308, %v2306
    %v2339 = vpack.c.b16 %v2309, %v2307
    %v2340 = vpack.c.b16 %v2312, %v2310
    %v2341 = vpack.c.b16 %v2313, %v2311
    %v2342 = vpack.c.b16 %v2316, %v2314
    %v2343 = vpack.c.b16 %v2317, %v2315
    %v2344 = vpack.c.b16 %v2320, %v2318
    %v2345 = vpack.c.b16 %v2321, %v2319
    %v2346 = vpack.c.b16 %v2324, %v2322
    %v2347 = vpack.c.b16 %v2325, %v2323
    %v2348 = vpack.c.b16 %v2328, %v2326
    %v2349 = vpack.c.b16 %v2329, %v2327
    %v2350 = vpack.c.b16 %v2332, %v2330
    %v2351 = vpack.c.b16 %v2333, %v2331
    %v2352 = vpack.c.b16 %v2336, %v2334
    %v2353 = vpack.c.b16 %v2337, %v2335
    %2370 = vmatprep.subr.bf16.mxu0 %v2353
    %2371 = vmatpush1.bf16.msra.mxu0 %v2352
    %2372 = vmatprep.subr.bf16.mxu0 %v2351
    %2373 = vmatpush1.bf16.msra.mxu0 %v2350
    %2374 = vmatprep.subr.bf16.mxu0 %v2349
    %2375 = vmatpush1.bf16.msra.mxu0 %v2348
    %2376 = vmatprep.subr.bf16.mxu0 %v2347
    %2377 = vmatpush1.bf16.msra.mxu0 %v2346
    %2378 = vmatprep.subr.bf16.mxu0 %v2345
    %2379 = vmatpush1.bf16.msra.mxu0 %v2344
    %2380 = vmatprep.subr.bf16.mxu0 %v2343
    %2381 = vmatpush1.bf16.msra.mxu0 %v2342
    %2382 = vmatprep.subr.bf16.mxu0 %v2341
    %2383 = vmatpush1.bf16.msra.mxu0 %v2340
    %2384 = vmatprep.subr.bf16.mxu0 %v2339
    %2385 = vmatpush1.bf16.msra.mxu0 %v2338
    %2386 = vmatprep.subr.bf16.mxu0 0
    %2387 = vmatpush2.bf16.msra.mxu0 0
    %2388 = vmatprep.subr.bf16.mxu0 0
    %2389 = vmatpush2.bf16.msra.mxu0 0
    %2390 = vmatprep.subr.bf16.mxu0 0
    %2391 = vmatpush2.bf16.msra.mxu0 0
    %2392 = vmatprep.subr.bf16.mxu0 0
    %2393 = vmatpush2.bf16.msra.mxu0 0
    %2394 = vmatprep.subr.bf16.mxu0 0
    %2395 = vmatpush2.bf16.msra.mxu0 0
    %2396 = vmatprep.subr.bf16.mxu0 0
    %2397 = vmatpush2.bf16.msra.mxu0 0
    %2398 = vmatprep.subr.bf16.mxu0 0
    %2399 = vmatpush2.bf16.msra.mxu0 0
    %2400 = vmatprep.subr.bf16.mxu0 0
    %2401 = vmatpush2.bf16.msra.mxu0 0
    %2402 = vmatprep.mubr.bf16.mxu0 0
    %2403 = vmatmul.mubr.bf16.gmra.mxu0 %v2272
    %v2404 = vpop.f32.mrf.mxu0
    %v2405 = vadd.f32 0.0, %v2404
    %v2406 = vpop.f32.mrf.mxu0
    %v2407 = vadd.f32 0.0, %v2406
    %v2408 = vpop.f32.mrf.mxu0
    %v2409 = vpop.f32.mrf.mxu0
    %2410 = vdwg.mxu0
    %v2411 = vadd.f32 %v2269, %v2405
    %v2412 = vadd.f32 %v2270, %v2407
    %v2413 = vld [vmem:[#allocation2 + $0xc] sm:$0x3]
    %v2414 = vpack.c.bf16 %v2413, %v2413
    %s2415 = scalar_lea.vmem %s7, 768
    %v2416 = vld [vmem:[%s2415] sm:$0xff]
    %v2417 = vld [vmem:[%s2415 + $0x8] sm:$0xff]
    %v2418 = vld [vmem:[%s2415 + $0x10] sm:$0xff]
    %v2419 = vld [vmem:[%s2415 + $0x18] sm:$0xff]
    %v2420 = vld [vmem:[%s2415 + $0x20] sm:$0xff]
    %v2421 = vld [vmem:[%s2415 + $0x28] sm:$0xff]
    %v2422 = vld [vmem:[%s2415 + $0x30] sm:$0xff]
    %v2423 = vld [vmem:[%s2415 + $0x38] sm:$0xff]
    %v2424 = vld [vmem:[%s2415 + $0x40] sm:$0xff]
    %v2425 = vld [vmem:[%s2415 + $0x48] sm:$0xff]
    %v2426 = vld [vmem:[%s2415 + $0x50] sm:$0xff]
    %v2427 = vld [vmem:[%s2415 + $0x58] sm:$0xff]
    %v2428 = vld [vmem:[%s2415 + $0x60] sm:$0xff]
    %v2429 = vld [vmem:[%s2415 + $0x68] sm:$0xff]
    %v2430 = vld [vmem:[%s2415 + $0x70] sm:$0xff]
    %v2431 = vld [vmem:[%s2415 + $0x78] sm:$0xff]
    %v2448 = vunpack.c.l.b16 %v2416
    %v2449 = vunpack.c.h.b16 %v2416
    %v2450 = vunpack.c.l.b16 %v2417
    %v2451 = vunpack.c.h.b16 %v2417
    %v2452 = vunpack.c.l.b16 %v2418
    %v2453 = vunpack.c.h.b16 %v2418
    %v2454 = vunpack.c.l.b16 %v2419
    %v2455 = vunpack.c.h.b16 %v2419
    %v2456 = vunpack.c.l.b16 %v2420
    %v2457 = vunpack.c.h.b16 %v2420
    %v2458 = vunpack.c.l.b16 %v2421
    %v2459 = vunpack.c.h.b16 %v2421
    %v2460 = vunpack.c.l.b16 %v2422
    %v2461 = vunpack.c.h.b16 %v2422
    %v2462 = vunpack.c.l.b16 %v2423
    %v2463 = vunpack.c.h.b16 %v2423
    %v2464 = vunpack.c.l.b16 %v2424
    %v2465 = vunpack.c.h.b16 %v2424
    %v2466 = vunpack.c.l.b16 %v2425
    %v2467 = vunpack.c.h.b16 %v2425
    %v2468 = vunpack.c.l.b16 %v2426
    %v2469 = vunpack.c.h.b16 %v2426
    %v2470 = vunpack.c.l.b16 %v2427
    %v2471 = vunpack.c.h.b16 %v2427
    %v2472 = vunpack.c.l.b16 %v2428
    %v2473 = vunpack.c.h.b16 %v2428
    %v2474 = vunpack.c.l.b16 %v2429
    %v2475 = vunpack.c.h.b16 %v2429
    %v2476 = vunpack.c.l.b16 %v2430
    %v2477 = vunpack.c.h.b16 %v2430
    %v2478 = vunpack.c.l.b16 %v2431
    %v2479 = vunpack.c.h.b16 %v2431
    %v2480 = vpack.c.b16 %v2450, %v2448
    %v2481 = vpack.c.b16 %v2451, %v2449
    %v2482 = vpack.c.b16 %v2454, %v2452
    %v2483 = vpack.c.b16 %v2455, %v2453
    %v2484 = vpack.c.b16 %v2458, %v2456
    %v2485 = vpack.c.b16 %v2459, %v2457
    %v2486 = vpack.c.b16 %v2462, %v2460
    %v2487 = vpack.c.b16 %v2463, %v2461
    %v2488 = vpack.c.b16 %v2466, %v2464
    %v2489 = vpack.c.b16 %v2467, %v2465
    %v2490 = vpack.c.b16 %v2470, %v2468
    %v2491 = vpack.c.b16 %v2471, %v2469
    %v2492 = vpack.c.b16 %v2474, %v2472
    %v2493 = vpack.c.b16 %v2475, %v2473
    %v2494 = vpack.c.b16 %v2478, %v2476
    %v2495 = vpack.c.b16 %v2479, %v2477
    %2512 = vmatprep.subr.bf16.mxu0 %v2495
    %2513 = vmatpush1.bf16.msra.mxu0 %v2494
    %2514 = vmatprep.subr.bf16.mxu0 %v2493
    %2515 = vmatpush1.bf16.msra.mxu0 %v2492
    %2516 = vmatprep.subr.bf16.mxu0 %v2491
    %2517 = vmatpush1.bf16.msra.mxu0 %v2490
    %2518 = vmatprep.subr.bf16.mxu0 %v2489
    %2519 = vmatpush1.bf16.msra.mxu0 %v2488
    %2520 = vmatprep.subr.bf16.mxu0 %v2487
    %2521 = vmatpush1.bf16.msra.mxu0 %v2486
    %2522 = vmatprep.subr.bf16.mxu0 %v2485
    %2523 = vmatpush1.bf16.msra.mxu0 %v2484
    %2524 = vmatprep.subr.bf16.mxu0 %v2483
    %2525 = vmatpush1.bf16.msra.mxu0 %v2482
    %2526 = vmatprep.subr.bf16.mxu0 %v2481
    %2527 = vmatpush1.bf16.msra.mxu0 %v2480
    %2528 = vmatprep.subr.bf16.mxu0 0
    %2529 = vmatpush2.bf16.msra.mxu0 0
    %2530 = vmatprep.subr.bf16.mxu0 0
    %2531 = vmatpush2.bf16.msra.mxu0 0
    %2532 = vmatprep.subr.bf16.mxu0 0
    %2533 = vmatpush2.bf16.msra.mxu0 0
    %2534 = vmatprep.subr.bf16.mxu0 0
    %2535 = vmatpush2.bf16.msra.mxu0 0
    %2536 = vmatprep.subr.bf16.mxu0 0
    %2537 = vmatpush2.bf16.msra.mxu0 0
    %2538 = vmatprep.subr.bf16.mxu0 0
    %2539 = vmatpush2.bf16.msra.mxu0 0
    %2540 = vmatprep.subr.bf16.mxu0 0
    %2541 = vmatpush2.bf16.msra.mxu0 0
    %2542 = vmatprep.subr.bf16.mxu0 0
    %2543 = vmatpush2.bf16.msra.mxu0 0
    %2544 = vmatprep.mubr.bf16.mxu0 0
    %2545 = vmatmul.mubr.bf16.gmra.mxu0 %v2414
    %v2546 = vpop.f32.mrf.mxu0
    %v2547 = vadd.f32 0.0, %v2546
    %v2548 = vpop.f32.mrf.mxu0
    %v2549 = vadd.f32 0.0, %v2548
    %v2550 = vpop.f32.mrf.mxu0
    %v2551 = vpop.f32.mrf.mxu0
    %2552 = vdwg.mxu0
    %v2553 = vadd.f32 %v2411, %v2547
    %v2554 = vadd.f32 %v2412, %v2549
    %v2555 = vld [vmem:[#allocation2 + $0xe] sm:$0x3]
    %v2556 = vpack.c.bf16 %v2555, %v2555
    %s2557 = scalar_lea.vmem %s7, 896
    %v2558 = vld [vmem:[%s2557] sm:$0xff]
    %v2559 = vld [vmem:[%s2557 + $0x8] sm:$0xff]
    %v2560 = vld [vmem:[%s2557 + $0x10] sm:$0xff]
    %v2561 = vld [vmem:[%s2557 + $0x18] sm:$0xff]
    %v2562 = vld [vmem:[%s2557 + $0x20] sm:$0xff]
    %v2563 = vld [vmem:[%s2557 + $0x28] sm:$0xff]
    %v2564 = vld [vmem:[%s2557 + $0x30] sm:$0xff]
    %v2565 = vld [vmem:[%s2557 + $0x38] sm:$0xff]
    %v2566 = vld [vmem:[%s2557 + $0x40] sm:$0xff]
    %v2567 = vld [vmem:[%s2557 + $0x48] sm:$0xff]
    %v2568 = vld [vmem:[%s2557 + $0x50] sm:$0xff]
    %v2569 = vld [vmem:[%s2557 + $0x58] sm:$0xff]
    %v2570 = vld [vmem:[%s2557 + $0x60] sm:$0xff]
    %v2571 = vld [vmem:[%s2557 + $0x68] sm:$0xff]
    %v2572 = vld [vmem:[%s2557 + $0x70] sm:$0xff]
    %v2573 = vld [vmem:[%s2557 + $0x78] sm:$0xff]
    %v2590 = vunpack.c.l.b16 %v2558
    %v2591 = vunpack.c.h.b16 %v2558
    %v2592 = vunpack.c.l.b16 %v2559
    %v2593 = vunpack.c.h.b16 %v2559
    %v2594 = vunpack.c.l.b16 %v2560
    %v2595 = vunpack.c.h.b16 %v2560
    %v2596 = vunpack.c.l.b16 %v2561
    %v2597 = vunpack.c.h.b16 %v2561
    %v2598 = vunpack.c.l.b16 %v2562
    %v2599 = vunpack.c.h.b16 %v2562
    %v2600 = vunpack.c.l.b16 %v2563
    %v2601 = vunpack.c.h.b16 %v2563
    %v2602 = vunpack.c.l.b16 %v2564
    %v2603 = vunpack.c.h.b16 %v2564
    %v2604 = vunpack.c.l.b16 %v2565
    %v2605 = vunpack.c.h.b16 %v2565
    %v2606 = vunpack.c.l.b16 %v2566
    %v2607 = vunpack.c.h.b16 %v2566
    %v2608 = vunpack.c.l.b16 %v2567
    %v2609 = vunpack.c.h.b16 %v2567
    %v2610 = vunpack.c.l.b16 %v2568
    %v2611 = vunpack.c.h.b16 %v2568
    %v2612 = vunpack.c.l.b16 %v2569
    %v2613 = vunpack.c.h.b16 %v2569
    %v2614 = vunpack.c.l.b16 %v2570
    %v2615 = vunpack.c.h.b16 %v2570
    %v2616 = vunpack.c.l.b16 %v2571
    %v2617 = vunpack.c.h.b16 %v2571
    %v2618 = vunpack.c.l.b16 %v2572
    %v2619 = vunpack.c.h.b16 %v2572
    %v2620 = vunpack.c.l.b16 %v2573
    %v2621 = vunpack.c.h.b16 %v2573
    %v2622 = vpack.c.b16 %v2592, %v2590
    %v2623 = vpack.c.b16 %v2593, %v2591
    %v2624 = vpack.c.b16 %v2596, %v2594
    %v2625 = vpack.c.b16 %v2597, %v2595
    %v2626 = vpack.c.b16 %v2600, %v2598
    %v2627 = vpack.c.b16 %v2601, %v2599
    %v2628 = vpack.c.b16 %v2604, %v2602
    %v2629 = vpack.c.b16 %v2605, %v2603
    %v2630 = vpack.c.b16 %v2608, %v2606
    %v2631 = vpack.c.b16 %v2609, %v2607
    %v2632 = vpack.c.b16 %v2612, %v2610
    %v2633 = vpack.c.b16 %v2613, %v2611
    %v2634 = vpack.c.b16 %v2616, %v2614
    %v2635 = vpack.c.b16 %v2617, %v2615
    %v2636 = vpack.c.b16 %v2620, %v2618
    %v2637 = vpack.c.b16 %v2621, %v2619
    %2654 = vmatprep.subr.bf16.mxu0 %v2637
    %2655 = vmatpush1.bf16.msra.mxu0 %v2636
    %2656 = vmatprep.subr.bf16.mxu0 %v2635
    %2657 = vmatpush1.bf16.msra.mxu0 %v2634
    %2658 = vmatprep.subr.bf16.mxu0 %v2633
    %2659 = vmatpush1.bf16.msra.mxu0 %v2632
    %2660 = vmatprep.subr.bf16.mxu0 %v2631
    %2661 = vmatpush1.bf16.msra.mxu0 %v2630
    %2662 = vmatprep.subr.bf16.mxu0 %v2629
    %2663 = vmatpush1.bf16.msra.mxu0 %v2628
    %2664 = vmatprep.subr.bf16.mxu0 %v2627
    %2665 = vmatpush1.bf16.msra.mxu0 %v2626
    %2666 = vmatprep.subr.bf16.mxu0 %v2625
    %2667 = vmatpush1.bf16.msra.mxu0 %v2624
    %2668 = vmatprep.subr.bf16.mxu0 %v2623
    %2669 = vmatpush1.bf16.msra.mxu0 %v2622
    %2670 = vmatprep.subr.bf16.mxu0 0
    %2671 = vmatpush2.bf16.msra.mxu0 0
    %2672 = vmatprep.subr.bf16.mxu0 0
    %2673 = vmatpush2.bf16.msra.mxu0 0
    %2674 = vmatprep.subr.bf16.mxu0 0
    %2675 = vmatpush2.bf16.msra.mxu0 0
    %2676 = vmatprep.subr.bf16.mxu0 0
    %2677 = vmatpush2.bf16.msra.mxu0 0
    %2678 = vmatprep.subr.bf16.mxu0 0
    %2679 = vmatpush2.bf16.msra.mxu0 0
    %2680 = vmatprep.subr.bf16.mxu0 0
    %2681 = vmatpush2.bf16.msra.mxu0 0
    %2682 = vmatprep.subr.bf16.mxu0 0
    %2683 = vmatpush2.bf16.msra.mxu0 0
    %2684 = vmatprep.subr.bf16.mxu0 0
    %2685 = vmatpush2.bf16.msra.mxu0 0
    %2686 = vmatprep.mubr.bf16.mxu0 0
    %2687 = vmatmul.mubr.bf16.gmra.mxu0 %v2556
    %v2688 = vpop.f32.mrf.mxu0
    %v2689 = vadd.f32 0.0, %v2688
    %v2690 = vpop.f32.mrf.mxu0
    %v2691 = vadd.f32 0.0, %v2690
    %v2692 = vpop.f32.mrf.mxu0
    %v2693 = vpop.f32.mrf.mxu0
    %2694 = vdwg.mxu0
    %v2695 = vadd.f32 %v2553, %v2689
    %v2696 = vadd.f32 %v2554, %v2691
    %v2697 = vld [vmem:[#allocation2 + $0x10] sm:$0x3]
    %v2698 = vpack.c.bf16 %v2697, %v2697
    %s2699 = scalar_lea.vmem %s7, 1024
    %v2700 = vld [vmem:[%s2699] sm:$0xff]
    %v2701 = vld [vmem:[%s2699 + $0x8] sm:$0xff]
    %v2702 = vld [vmem:[%s2699 + $0x10] sm:$0xff]
    %v2703 = vld [vmem:[%s2699 + $0x18] sm:$0xff]
    %v2704 = vld [vmem:[%s2699 + $0x20] sm:$0xff]
    %v2705 = vld [vmem:[%s2699 + $0x28] sm:$0xff]
    %v2706 = vld [vmem:[%s2699 + $0x30] sm:$0xff]
    %v2707 = vld [vmem:[%s2699 + $0x38] sm:$0xff]
    %v2708 = vld [vmem:[%s2699 + $0x40] sm:$0xff]
    %v2709 = vld [vmem:[%s2699 + $0x48] sm:$0xff]
    %v2710 = vld [vmem:[%s2699 + $0x50] sm:$0xff]
    %v2711 = vld [vmem:[%s2699 + $0x58] sm:$0xff]
    %v2712 = vld [vmem:[%s2699 + $0x60] sm:$0xff]
    %v2713 = vld [vmem:[%s2699 + $0x68] sm:$0xff]
    %v2714 = vld [vmem:[%s2699 + $0x70] sm:$0xff]
    %v2715 = vld [vmem:[%s2699 + $0x78] sm:$0xff]
    %v2732 = vunpack.c.l.b16 %v2700
    %v2733 = vunpack.c.h.b16 %v2700
    %v2734 = vunpack.c.l.b16 %v2701
    %v2735 = vunpack.c.h.b16 %v2701
    %v2736 = vunpack.c.l.b16 %v2702
    %v2737 = vunpack.c.h.b16 %v2702
    %v2738 = vunpack.c.l.b16 %v2703
    %v2739 = vunpack.c.h.b16 %v2703
    %v2740 = vunpack.c.l.b16 %v2704
    %v2741 = vunpack.c.h.b16 %v2704
    %v2742 = vunpack.c.l.b16 %v2705
    %v2743 = vunpack.c.h.b16 %v2705
    %v2744 = vunpack.c.l.b16 %v2706
    %v2745 = vunpack.c.h.b16 %v2706
    %v2746 = vunpack.c.l.b16 %v2707
    %v2747 = vunpack.c.h.b16 %v2707
    %v2748 = vunpack.c.l.b16 %v2708
    %v2749 = vunpack.c.h.b16 %v2708
    %v2750 = vunpack.c.l.b16 %v2709
    %v2751 = vunpack.c.h.b16 %v2709
    %v2752 = vunpack.c.l.b16 %v2710
    %v2753 = vunpack.c.h.b16 %v2710
    %v2754 = vunpack.c.l.b16 %v2711
    %v2755 = vunpack.c.h.b16 %v2711
    %v2756 = vunpack.c.l.b16 %v2712
    %v2757 = vunpack.c.h.b16 %v2712
    %v2758 = vunpack.c.l.b16 %v2713
    %v2759 = vunpack.c.h.b16 %v2713
    %v2760 = vunpack.c.l.b16 %v2714
    %v2761 = vunpack.c.h.b16 %v2714
    %v2762 = vunpack.c.l.b16 %v2715
    %v2763 = vunpack.c.h.b16 %v2715
    %v2764 = vpack.c.b16 %v2734, %v2732
    %v2765 = vpack.c.b16 %v2735, %v2733
    %v2766 = vpack.c.b16 %v2738, %v2736
    %v2767 = vpack.c.b16 %v2739, %v2737
    %v2768 = vpack.c.b16 %v2742, %v2740
    %v2769 = vpack.c.b16 %v2743, %v2741
    %v2770 = vpack.c.b16 %v2746, %v2744
    %v2771 = vpack.c.b16 %v2747, %v2745
    %v2772 = vpack.c.b16 %v2750, %v2748
    %v2773 = vpack.c.b16 %v2751, %v2749
    %v2774 = vpack.c.b16 %v2754, %v2752
    %v2775 = vpack.c.b16 %v2755, %v2753
    %v2776 = vpack.c.b16 %v2758, %v2756
    %v2777 = vpack.c.b16 %v2759, %v2757
    %v2778 = vpack.c.b16 %v2762, %v2760
    %v2779 = vpack.c.b16 %v2763, %v2761
    %2796 = vmatprep.subr.bf16.mxu0 %v2779
    %2797 = vmatpush1.bf16.msra.mxu0 %v2778
    %2798 = vmatprep.subr.bf16.mxu0 %v2777
    %2799 = vmatpush1.bf16.msra.mxu0 %v2776
    %2800 = vmatprep.subr.bf16.mxu0 %v2775
    %2801 = vmatpush1.bf16.msra.mxu0 %v2774
    %2802 = vmatprep.subr.bf16.mxu0 %v2773
    %2803 = vmatpush1.bf16.msra.mxu0 %v2772
    %2804 = vmatprep.subr.bf16.mxu0 %v2771
    %2805 = vmatpush1.bf16.msra.mxu0 %v2770
    %2806 = vmatprep.subr.bf16.mxu0 %v2769
    %2807 = vmatpush1.bf16.msra.mxu0 %v2768
    %2808 = vmatprep.subr.bf16.mxu0 %v2767
    %2809 = vmatpush1.bf16.msra.mxu0 %v2766
    %2810 = vmatprep.subr.bf16.mxu0 %v2765
    %2811 = vmatpush1.bf16.msra.mxu0 %v2764
    %2812 = vmatprep.subr.bf16.mxu0 0
    %2813 = vmatpush2.bf16.msra.mxu0 0
    %2814 = vmatprep.subr.bf16.mxu0 0
    %2815 = vmatpush2.bf16.msra.mxu0 0
    %2816 = vmatprep.subr.bf16.mxu0 0
    %2817 = vmatpush2.bf16.msra.mxu0 0
    %2818 = vmatprep.subr.bf16.mxu0 0
    %2819 = vmatpush2.bf16.msra.mxu0 0
    %2820 = vmatprep.subr.bf16.mxu0 0
    %2821 = vmatpush2.bf16.msra.mxu0 0
    %2822 = vmatprep.subr.bf16.mxu0 0
    %2823 = vmatpush2.bf16.msra.mxu0 0
    %2824 = vmatprep.subr.bf16.mxu0 0
    %2825 = vmatpush2.bf16.msra.mxu0 0
    %2826 = vmatprep.subr.bf16.mxu0 0
    %2827 = vmatpush2.bf16.msra.mxu0 0
    %2828 = vmatprep.mubr.bf16.mxu0 0
    %2829 = vmatmul.mubr.bf16.gmra.mxu0 %v2698
    %v2830 = vpop.f32.mrf.mxu0
    %v2831 = vadd.f32 0.0, %v2830
    %v2832 = vpop.f32.mrf.mxu0
    %v2833 = vadd.f32 0.0, %v2832
    %v2834 = vpop.f32.mrf.mxu0
    %v2835 = vpop.f32.mrf.mxu0
    %2836 = vdwg.mxu0
    %v2837 = vadd.f32 %v2695, %v2831
    %v2838 = vadd.f32 %v2696, %v2833
    %v2839 = vld [vmem:[#allocation2 + $0x12] sm:$0x3]
    %v2840 = vpack.c.bf16 %v2839, %v2839
    %s2841 = scalar_lea.vmem %s7, 1152
    %v2842 = vld [vmem:[%s2841] sm:$0xff]
    %v2843 = vld [vmem:[%s2841 + $0x8] sm:$0xff]
    %v2844 = vld [vmem:[%s2841 + $0x10] sm:$0xff]
    %v2845 = vld [vmem:[%s2841 + $0x18] sm:$0xff]
    %v2846 = vld [vmem:[%s2841 + $0x20] sm:$0xff]
    %v2847 = vld [vmem:[%s2841 + $0x28] sm:$0xff]
    %v2848 = vld [vmem:[%s2841 + $0x30] sm:$0xff]
    %v2849 = vld [vmem:[%s2841 + $0x38] sm:$0xff]
    %v2850 = vld [vmem:[%s2841 + $0x40] sm:$0xff]
    %v2851 = vld [vmem:[%s2841 + $0x48] sm:$0xff]
    %v2852 = vld [vmem:[%s2841 + $0x50] sm:$0xff]
    %v2853 = vld [vmem:[%s2841 + $0x58] sm:$0xff]
    %v2854 = vld [vmem:[%s2841 + $0x60] sm:$0xff]
    %v2855 = vld [vmem:[%s2841 + $0x68] sm:$0xff]
    %v2856 = vld [vmem:[%s2841 + $0x70] sm:$0xff]
    %v2857 = vld [vmem:[%s2841 + $0x78] sm:$0xff]
    %v2874 = vunpack.c.l.b16 %v2842
    %v2875 = vunpack.c.h.b16 %v2842
    %v2876 = vunpack.c.l.b16 %v2843
    %v2877 = vunpack.c.h.b16 %v2843
    %v2878 = vunpack.c.l.b16 %v2844
    %v2879 = vunpack.c.h.b16 %v2844
    %v2880 = vunpack.c.l.b16 %v2845
    %v2881 = vunpack.c.h.b16 %v2845
    %v2882 = vunpack.c.l.b16 %v2846
    %v2883 = vunpack.c.h.b16 %v2846
    %v2884 = vunpack.c.l.b16 %v2847
    %v2885 = vunpack.c.h.b16 %v2847
    %v2886 = vunpack.c.l.b16 %v2848
    %v2887 = vunpack.c.h.b16 %v2848
    %v2888 = vunpack.c.l.b16 %v2849
    %v2889 = vunpack.c.h.b16 %v2849
    %v2890 = vunpack.c.l.b16 %v2850
    %v2891 = vunpack.c.h.b16 %v2850
    %v2892 = vunpack.c.l.b16 %v2851
    %v2893 = vunpack.c.h.b16 %v2851
    %v2894 = vunpack.c.l.b16 %v2852
    %v2895 = vunpack.c.h.b16 %v2852
    %v2896 = vunpack.c.l.b16 %v2853
    %v2897 = vunpack.c.h.b16 %v2853
    %v2898 = vunpack.c.l.b16 %v2854
    %v2899 = vunpack.c.h.b16 %v2854
    %v2900 = vunpack.c.l.b16 %v2855
    %v2901 = vunpack.c.h.b16 %v2855
    %v2902 = vunpack.c.l.b16 %v2856
    %v2903 = vunpack.c.h.b16 %v2856
    %v2904 = vunpack.c.l.b16 %v2857
    %v2905 = vunpack.c.h.b16 %v2857
    %v2906 = vpack.c.b16 %v2876, %v2874
    %v2907 = vpack.c.b16 %v2877, %v2875
    %v2908 = vpack.c.b16 %v2880, %v2878
    %v2909 = vpack.c.b16 %v2881, %v2879
    %v2910 = vpack.c.b16 %v2884, %v2882
    %v2911 = vpack.c.b16 %v2885, %v2883
    %v2912 = vpack.c.b16 %v2888, %v2886
    %v2913 = vpack.c.b16 %v2889, %v2887
    %v2914 = vpack.c.b16 %v2892, %v2890
    %v2915 = vpack.c.b16 %v2893, %v2891
    %v2916 = vpack.c.b16 %v2896, %v2894
    %v2917 = vpack.c.b16 %v2897, %v2895
    %v2918 = vpack.c.b16 %v2900, %v2898
    %v2919 = vpack.c.b16 %v2901, %v2899
    %v2920 = vpack.c.b16 %v2904, %v2902
    %v2921 = vpack.c.b16 %v2905, %v2903
    %2938 = vmatprep.subr.bf16.mxu0 %v2921
    %2939 = vmatpush1.bf16.msra.mxu0 %v2920
    %2940 = vmatprep.subr.bf16.mxu0 %v2919
    %2941 = vmatpush1.bf16.msra.mxu0 %v2918
    %2942 = vmatprep.subr.bf16.mxu0 %v2917
    %2943 = vmatpush1.bf16.msra.mxu0 %v2916
    %2944 = vmatprep.subr.bf16.mxu0 %v2915
    %2945 = vmatpush1.bf16.msra.mxu0 %v2914
    %2946 = vmatprep.subr.bf16.mxu0 %v2913
    %2947 = vmatpush1.bf16.msra.mxu0 %v2912
    %2948 = vmatprep.subr.bf16.mxu0 %v2911
    %2949 = vmatpush1.bf16.msra.mxu0 %v2910
    %2950 = vmatprep.subr.bf16.mxu0 %v2909
    %2951 = vmatpush1.bf16.msra.mxu0 %v2908
    %2952 = vmatprep.subr.bf16.mxu0 %v2907
    %2953 = vmatpush1.bf16.msra.mxu0 %v2906
    %2954 = vmatprep.subr.bf16.mxu0 0
    %2955 = vmatpush2.bf16.msra.mxu0 0
    %2956 = vmatprep.subr.bf16.mxu0 0
    %2957 = vmatpush2.bf16.msra.mxu0 0
    %2958 = vmatprep.subr.bf16.mxu0 0
    %2959 = vmatpush2.bf16.msra.mxu0 0
    %2960 = vmatprep.subr.bf16.mxu0 0
    %2961 = vmatpush2.bf16.msra.mxu0 0
    %2962 = vmatprep.subr.bf16.mxu0 0
    %2963 = vmatpush2.bf16.msra.mxu0 0
    %2964 = vmatprep.subr.bf16.mxu0 0
    %2965 = vmatpush2.bf16.msra.mxu0 0
    %2966 = vmatprep.subr.bf16.mxu0 0
    %2967 = vmatpush2.bf16.msra.mxu0 0
    %2968 = vmatprep.subr.bf16.mxu0 0
    %2969 = vmatpush2.bf16.msra.mxu0 0
    %2970 = vmatprep.mubr.bf16.mxu0 0
    %2971 = vmatmul.mubr.bf16.gmra.mxu0 %v2840
    %v2972 = vpop.f32.mrf.mxu0
    %v2973 = vadd.f32 0.0, %v2972
    %v2974 = vpop.f32.mrf.mxu0
    %v2975 = vadd.f32 0.0, %v2974
    %v2976 = vpop.f32.mrf.mxu0
    %v2977 = vpop.f32.mrf.mxu0
    %2978 = vdwg.mxu0
    %v2979 = vadd.f32 %v2837, %v2973
    %v2980 = vadd.f32 %v2838, %v2975
    %v2981 = vld [vmem:[#allocation2 + $0x14] sm:$0x3]
    %v2982 = vpack.c.bf16 %v2981, %v2981
    %s2983 = scalar_lea.vmem %s7, 1280
    %v2984 = vld [vmem:[%s2983] sm:$0xff]
    %v2985 = vld [vmem:[%s2983 + $0x8] sm:$0xff]
    %v2986 = vld [vmem:[%s2983 + $0x10] sm:$0xff]
    %v2987 = vld [vmem:[%s2983 + $0x18] sm:$0xff]
    %v2988 = vld [vmem:[%s2983 + $0x20] sm:$0xff]
    %v2989 = vld [vmem:[%s2983 + $0x28] sm:$0xff]
    %v2990 = vld [vmem:[%s2983 + $0x30] sm:$0xff]
    %v2991 = vld [vmem:[%s2983 + $0x38] sm:$0xff]
    %v2992 = vld [vmem:[%s2983 + $0x40] sm:$0xff]
    %v2993 = vld [vmem:[%s2983 + $0x48] sm:$0xff]
    %v2994 = vld [vmem:[%s2983 + $0x50] sm:$0xff]
    %v2995 = vld [vmem:[%s2983 + $0x58] sm:$0xff]
    %v2996 = vld [vmem:[%s2983 + $0x60] sm:$0xff]
    %v2997 = vld [vmem:[%s2983 + $0x68] sm:$0xff]
    %v2998 = vld [vmem:[%s2983 + $0x70] sm:$0xff]
    %v2999 = vld [vmem:[%s2983 + $0x78] sm:$0xff]
    %v3016 = vunpack.c.l.b16 %v2984
    %v3017 = vunpack.c.h.b16 %v2984
    %v3018 = vunpack.c.l.b16 %v2985
    %v3019 = vunpack.c.h.b16 %v2985
    %v3020 = vunpack.c.l.b16 %v2986
    %v3021 = vunpack.c.h.b16 %v2986
    %v3022 = vunpack.c.l.b16 %v2987
    %v3023 = vunpack.c.h.b16 %v2987
    %v3024 = vunpack.c.l.b16 %v2988
    %v3025 = vunpack.c.h.b16 %v2988
    %v3026 = vunpack.c.l.b16 %v2989
    %v3027 = vunpack.c.h.b16 %v2989
    %v3028 = vunpack.c.l.b16 %v2990
    %v3029 = vunpack.c.h.b16 %v2990
    %v3030 = vunpack.c.l.b16 %v2991
    %v3031 = vunpack.c.h.b16 %v2991
    %v3032 = vunpack.c.l.b16 %v2992
    %v3033 = vunpack.c.h.b16 %v2992
    %v3034 = vunpack.c.l.b16 %v2993
    %v3035 = vunpack.c.h.b16 %v2993
    %v3036 = vunpack.c.l.b16 %v2994
    %v3037 = vunpack.c.h.b16 %v2994
    %v3038 = vunpack.c.l.b16 %v2995
    %v3039 = vunpack.c.h.b16 %v2995
    %v3040 = vunpack.c.l.b16 %v2996
    %v3041 = vunpack.c.h.b16 %v2996
    %v3042 = vunpack.c.l.b16 %v2997
    %v3043 = vunpack.c.h.b16 %v2997
    %v3044 = vunpack.c.l.b16 %v2998
    %v3045 = vunpack.c.h.b16 %v2998
    %v3046 = vunpack.c.l.b16 %v2999
    %v3047 = vunpack.c.h.b16 %v2999
    %v3048 = vpack.c.b16 %v3018, %v3016
    %v3049 = vpack.c.b16 %v3019, %v3017
    %v3050 = vpack.c.b16 %v3022, %v3020
    %v3051 = vpack.c.b16 %v3023, %v3021
    %v3052 = vpack.c.b16 %v3026, %v3024
    %v3053 = vpack.c.b16 %v3027, %v3025
    %v3054 = vpack.c.b16 %v3030, %v3028
    %v3055 = vpack.c.b16 %v3031, %v3029
    %v3056 = vpack.c.b16 %v3034, %v3032
    %v3057 = vpack.c.b16 %v3035, %v3033
    %v3058 = vpack.c.b16 %v3038, %v3036
    %v3059 = vpack.c.b16 %v3039, %v3037
    %v3060 = vpack.c.b16 %v3042, %v3040
    %v3061 = vpack.c.b16 %v3043, %v3041
    %v3062 = vpack.c.b16 %v3046, %v3044
    %v3063 = vpack.c.b16 %v3047, %v3045
    %3080 = vmatprep.subr.bf16.mxu0 %v3063
    %3081 = vmatpush1.bf16.msra.mxu0 %v3062
    %3082 = vmatprep.subr.bf16.mxu0 %v3061
    %3083 = vmatpush1.bf16.msra.mxu0 %v3060
    %3084 = vmatprep.subr.bf16.mxu0 %v3059
    %3085 = vmatpush1.bf16.msra.mxu0 %v3058
    %3086 = vmatprep.subr.bf16.mxu0 %v3057
    %3087 = vmatpush1.bf16.msra.mxu0 %v3056
    %3088 = vmatprep.subr.bf16.mxu0 %v3055
    %3089 = vmatpush1.bf16.msra.mxu0 %v3054
    %3090 = vmatprep.subr.bf16.mxu0 %v3053
    %3091 = vmatpush1.bf16.msra.mxu0 %v3052
    %3092 = vmatprep.subr.bf16.mxu0 %v3051
    %3093 = vmatpush1.bf16.msra.mxu0 %v3050
    %3094 = vmatprep.subr.bf16.mxu0 %v3049
    %3095 = vmatpush1.bf16.msra.mxu0 %v3048
    %3096 = vmatprep.subr.bf16.mxu0 0
    %3097 = vmatpush2.bf16.msra.mxu0 0
    %3098 = vmatprep.subr.bf16.mxu0 0
    %3099 = vmatpush2.bf16.msra.mxu0 0
    %3100 = vmatprep.subr.bf16.mxu0 0
    %3101 = vmatpush2.bf16.msra.mxu0 0
    %3102 = vmatprep.subr.bf16.mxu0 0
    %3103 = vmatpush2.bf16.msra.mxu0 0
    %3104 = vmatprep.subr.bf16.mxu0 0
    %3105 = vmatpush2.bf16.msra.mxu0 0
    %3106 = vmatprep.subr.bf16.mxu0 0
    %3107 = vmatpush2.bf16.msra.mxu0 0
    %3108 = vmatprep.subr.bf16.mxu0 0
    %3109 = vmatpush2.bf16.msra.mxu0 0
    %3110 = vmatprep.subr.bf16.mxu0 0
    %3111 = vmatpush2.bf16.msra.mxu0 0
    %3112 = vmatprep.mubr.bf16.mxu0 0
    %3113 = vmatmul.mubr.bf16.gmra.mxu0 %v2982
    %v3114 = vpop.f32.mrf.mxu0
    %v3115 = vadd.f32 0.0, %v3114
    %v3116 = vpop.f32.mrf.mxu0
    %v3117 = vadd.f32 0.0, %v3116
    %v3118 = vpop.f32.mrf.mxu0
    %v3119 = vpop.f32.mrf.mxu0
    %3120 = vdwg.mxu0
    %v3121 = vadd.f32 %v2979, %v3115
    %v3122 = vadd.f32 %v2980, %v3117
    %v3123 = vld [vmem:[#allocation2 + $0x16] sm:$0x3]
    %v3124 = vpack.c.bf16 %v3123, %v3123
    %s3125 = scalar_lea.vmem %s7, 1408
    %v3126 = vld [vmem:[%s3125] sm:$0xff]
    %v3127 = vld [vmem:[%s3125 + $0x8] sm:$0xff]
    %v3128 = vld [vmem:[%s3125 + $0x10] sm:$0xff]
    %v3129 = vld [vmem:[%s3125 + $0x18] sm:$0xff]
    %v3130 = vld [vmem:[%s3125 + $0x20] sm:$0xff]
    %v3131 = vld [vmem:[%s3125 + $0x28] sm:$0xff]
    %v3132 = vld [vmem:[%s3125 + $0x30] sm:$0xff]
    %v3133 = vld [vmem:[%s3125 + $0x38] sm:$0xff]
    %v3134 = vld [vmem:[%s3125 + $0x40] sm:$0xff]
    %v3135 = vld [vmem:[%s3125 + $0x48] sm:$0xff]
    %v3136 = vld [vmem:[%s3125 + $0x50] sm:$0xff]
    %v3137 = vld [vmem:[%s3125 + $0x58] sm:$0xff]
    %v3138 = vld [vmem:[%s3125 + $0x60] sm:$0xff]
    %v3139 = vld [vmem:[%s3125 + $0x68] sm:$0xff]
    %v3140 = vld [vmem:[%s3125 + $0x70] sm:$0xff]
    %v3141 = vld [vmem:[%s3125 + $0x78] sm:$0xff]
    %v3158 = vunpack.c.l.b16 %v3126
    %v3159 = vunpack.c.h.b16 %v3126
    %v3160 = vunpack.c.l.b16 %v3127
    %v3161 = vunpack.c.h.b16 %v3127
    %v3162 = vunpack.c.l.b16 %v3128
    %v3163 = vunpack.c.h.b16 %v3128
    %v3164 = vunpack.c.l.b16 %v3129
    %v3165 = vunpack.c.h.b16 %v3129
    %v3166 = vunpack.c.l.b16 %v3130
    %v3167 = vunpack.c.h.b16 %v3130
    %v3168 = vunpack.c.l.b16 %v3131
    %v3169 = vunpack.c.h.b16 %v3131
    %v3170 = vunpack.c.l.b16 %v3132
    %v3171 = vunpack.c.h.b16 %v3132
    %v3172 = vunpack.c.l.b16 %v3133
    %v3173 = vunpack.c.h.b16 %v3133
    %v3174 = vunpack.c.l.b16 %v3134
    %v3175 = vunpack.c.h.b16 %v3134
    %v3176 = vunpack.c.l.b16 %v3135
    %v3177 = vunpack.c.h.b16 %v3135
    %v3178 = vunpack.c.l.b16 %v3136
    %v3179 = vunpack.c.h.b16 %v3136
    %v3180 = vunpack.c.l.b16 %v3137
    %v3181 = vunpack.c.h.b16 %v3137
    %v3182 = vunpack.c.l.b16 %v3138
    %v3183 = vunpack.c.h.b16 %v3138
    %v3184 = vunpack.c.l.b16 %v3139
    %v3185 = vunpack.c.h.b16 %v3139
    %v3186 = vunpack.c.l.b16 %v3140
    %v3187 = vunpack.c.h.b16 %v3140
    %v3188 = vunpack.c.l.b16 %v3141
    %v3189 = vunpack.c.h.b16 %v3141
    %v3190 = vpack.c.b16 %v3160, %v3158
    %v3191 = vpack.c.b16 %v3161, %v3159
    %v3192 = vpack.c.b16 %v3164, %v3162
    %v3193 = vpack.c.b16 %v3165, %v3163
    %v3194 = vpack.c.b16 %v3168, %v3166
    %v3195 = vpack.c.b16 %v3169, %v3167
    %v3196 = vpack.c.b16 %v3172, %v3170
    %v3197 = vpack.c.b16 %v3173, %v3171
    %v3198 = vpack.c.b16 %v3176, %v3174
    %v3199 = vpack.c.b16 %v3177, %v3175
    %v3200 = vpack.c.b16 %v3180, %v3178
    %v3201 = vpack.c.b16 %v3181, %v3179
    %v3202 = vpack.c.b16 %v3184, %v3182
    %v3203 = vpack.c.b16 %v3185, %v3183
    %v3204 = vpack.c.b16 %v3188, %v3186
    %v3205 = vpack.c.b16 %v3189, %v3187
    %3222 = vmatprep.subr.bf16.mxu0 %v3205
    %3223 = vmatpush1.bf16.msra.mxu0 %v3204
    %3224 = vmatprep.subr.bf16.mxu0 %v3203
    %3225 = vmatpush1.bf16.msra.mxu0 %v3202
    %3226 = vmatprep.subr.bf16.mxu0 %v3201
    %3227 = vmatpush1.bf16.msra.mxu0 %v3200
    %3228 = vmatprep.subr.bf16.mxu0 %v3199
    %3229 = vmatpush1.bf16.msra.mxu0 %v3198
    %3230 = vmatprep.subr.bf16.mxu0 %v3197
    %3231 = vmatpush1.bf16.msra.mxu0 %v3196
    %3232 = vmatprep.subr.bf16.mxu0 %v3195
    %3233 = vmatpush1.bf16.msra.mxu0 %v3194
    %3234 = vmatprep.subr.bf16.mxu0 %v3193
    %3235 = vmatpush1.bf16.msra.mxu0 %v3192
    %3236 = vmatprep.subr.bf16.mxu0 %v3191
    %3237 = vmatpush1.bf16.msra.mxu0 %v3190
    %3238 = vmatprep.subr.bf16.mxu0 0
    %3239 = vmatpush2.bf16.msra.mxu0 0
    %3240 = vmatprep.subr.bf16.mxu0 0
    %3241 = vmatpush2.bf16.msra.mxu0 0
    %3242 = vmatprep.subr.bf16.mxu0 0
    %3243 = vmatpush2.bf16.msra.mxu0 0
    %3244 = vmatprep.subr.bf16.mxu0 0
    %3245 = vmatpush2.bf16.msra.mxu0 0
    %3246 = vmatprep.subr.bf16.mxu0 0
    %3247 = vmatpush2.bf16.msra.mxu0 0
    %3248 = vmatprep.subr.bf16.mxu0 0
    %3249 = vmatpush2.bf16.msra.mxu0 0
    %3250 = vmatprep.subr.bf16.mxu0 0
    %3251 = vmatpush2.bf16.msra.mxu0 0
    %3252 = vmatprep.subr.bf16.mxu0 0
    %3253 = vmatpush2.bf16.msra.mxu0 0
    %3254 = vmatprep.mubr.bf16.mxu0 0
    %3255 = vmatmul.mubr.bf16.gmra.mxu0 %v3124
    %v3256 = vpop.f32.mrf.mxu0
    %v3257 = vadd.f32 0.0, %v3256
    %v3258 = vpop.f32.mrf.mxu0
    %v3259 = vadd.f32 0.0, %v3258
    %v3260 = vpop.f32.mrf.mxu0
    %v3261 = vpop.f32.mrf.mxu0
    %3262 = vdwg.mxu0
    %v3263 = vadd.f32 %v3121, %v3257
    %v3264 = vadd.f32 %v3122, %v3259
    %v3265 = vld [vmem:[#allocation2 + $0x18] sm:$0x3]
    %v3266 = vpack.c.bf16 %v3265, %v3265
    %s3267 = scalar_lea.vmem %s7, 1536
    %v3268 = vld [vmem:[%s3267] sm:$0xff]
    %v3269 = vld [vmem:[%s3267 + $0x8] sm:$0xff]
    %v3270 = vld [vmem:[%s3267 + $0x10] sm:$0xff]
    %v3271 = vld [vmem:[%s3267 + $0x18] sm:$0xff]
    %v3272 = vld [vmem:[%s3267 + $0x20] sm:$0xff]
    %v3273 = vld [vmem:[%s3267 + $0x28] sm:$0xff]
    %v3274 = vld [vmem:[%s3267 + $0x30] sm:$0xff]
    %v3275 = vld [vmem:[%s3267 + $0x38] sm:$0xff]
    %v3276 = vld [vmem:[%s3267 + $0x40] sm:$0xff]
    %v3277 = vld [vmem:[%s3267 + $0x48] sm:$0xff]
    %v3278 = vld [vmem:[%s3267 + $0x50] sm:$0xff]
    %v3279 = vld [vmem:[%s3267 + $0x58] sm:$0xff]
    %v3280 = vld [vmem:[%s3267 + $0x60] sm:$0xff]
    %v3281 = vld [vmem:[%s3267 + $0x68] sm:$0xff]
    %v3282 = vld [vmem:[%s3267 + $0x70] sm:$0xff]
    %v3283 = vld [vmem:[%s3267 + $0x78] sm:$0xff]
    %v3300 = vunpack.c.l.b16 %v3268
    %v3301 = vunpack.c.h.b16 %v3268
    %v3302 = vunpack.c.l.b16 %v3269
    %v3303 = vunpack.c.h.b16 %v3269
    %v3304 = vunpack.c.l.b16 %v3270
    %v3305 = vunpack.c.h.b16 %v3270
    %v3306 = vunpack.c.l.b16 %v3271
    %v3307 = vunpack.c.h.b16 %v3271
    %v3308 = vunpack.c.l.b16 %v3272
    %v3309 = vunpack.c.h.b16 %v3272
    %v3310 = vunpack.c.l.b16 %v3273
    %v3311 = vunpack.c.h.b16 %v3273
    %v3312 = vunpack.c.l.b16 %v3274
    %v3313 = vunpack.c.h.b16 %v3274
    %v3314 = vunpack.c.l.b16 %v3275
    %v3315 = vunpack.c.h.b16 %v3275
    %v3316 = vunpack.c.l.b16 %v3276
    %v3317 = vunpack.c.h.b16 %v3276
    %v3318 = vunpack.c.l.b16 %v3277
    %v3319 = vunpack.c.h.b16 %v3277
    %v3320 = vunpack.c.l.b16 %v3278
    %v3321 = vunpack.c.h.b16 %v3278
    %v3322 = vunpack.c.l.b16 %v3279
    %v3323 = vunpack.c.h.b16 %v3279
    %v3324 = vunpack.c.l.b16 %v3280
    %v3325 = vunpack.c.h.b16 %v3280
    %v3326 = vunpack.c.l.b16 %v3281
    %v3327 = vunpack.c.h.b16 %v3281
    %v3328 = vunpack.c.l.b16 %v3282
    %v3329 = vunpack.c.h.b16 %v3282
    %v3330 = vunpack.c.l.b16 %v3283
    %v3331 = vunpack.c.h.b16 %v3283
    %v3332 = vpack.c.b16 %v3302, %v3300
    %v3333 = vpack.c.b16 %v3303, %v3301
    %v3334 = vpack.c.b16 %v3306, %v3304
    %v3335 = vpack.c.b16 %v3307, %v3305
    %v3336 = vpack.c.b16 %v3310, %v3308
    %v3337 = vpack.c.b16 %v3311, %v3309
    %v3338 = vpack.c.b16 %v3314, %v3312
    %v3339 = vpack.c.b16 %v3315, %v3313
    %v3340 = vpack.c.b16 %v3318, %v3316
    %v3341 = vpack.c.b16 %v3319, %v3317
    %v3342 = vpack.c.b16 %v3322, %v3320
    %v3343 = vpack.c.b16 %v3323, %v3321
    %v3344 = vpack.c.b16 %v3326, %v3324
    %v3345 = vpack.c.b16 %v3327, %v3325
    %v3346 = vpack.c.b16 %v3330, %v3328
    %v3347 = vpack.c.b16 %v3331, %v3329
    %3364 = vmatprep.subr.bf16.mxu0 %v3347
    %3365 = vmatpush1.bf16.msra.mxu0 %v3346
    %3366 = vmatprep.subr.bf16.mxu0 %v3345
    %3367 = vmatpush1.bf16.msra.mxu0 %v3344
    %3368 = vmatprep.subr.bf16.mxu0 %v3343
    %3369 = vmatpush1.bf16.msra.mxu0 %v3342
    %3370 = vmatprep.subr.bf16.mxu0 %v3341
    %3371 = vmatpush1.bf16.msra.mxu0 %v3340
    %3372 = vmatprep.subr.bf16.mxu0 %v3339
    %3373 = vmatpush1.bf16.msra.mxu0 %v3338
    %3374 = vmatprep.subr.bf16.mxu0 %v3337
    %3375 = vmatpush1.bf16.msra.mxu0 %v3336
    %3376 = vmatprep.subr.bf16.mxu0 %v3335
    %3377 = vmatpush1.bf16.msra.mxu0 %v3334
    %3378 = vmatprep.subr.bf16.mxu0 %v3333
    %3379 = vmatpush1.bf16.msra.mxu0 %v3332
    %3380 = vmatprep.subr.bf16.mxu0 0
    %3381 = vmatpush2.bf16.msra.mxu0 0
    %3382 = vmatprep.subr.bf16.mxu0 0
    %3383 = vmatpush2.bf16.msra.mxu0 0
    %3384 = vmatprep.subr.bf16.mxu0 0
    %3385 = vmatpush2.bf16.msra.mxu0 0
    %3386 = vmatprep.subr.bf16.mxu0 0
    %3387 = vmatpush2.bf16.msra.mxu0 0
    %3388 = vmatprep.subr.bf16.mxu0 0
    %3389 = vmatpush2.bf16.msra.mxu0 0
    %3390 = vmatprep.subr.bf16.mxu0 0
    %3391 = vmatpush2.bf16.msra.mxu0 0
    %3392 = vmatprep.subr.bf16.mxu0 0
    %3393 = vmatpush2.bf16.msra.mxu0 0
    %3394 = vmatprep.subr.bf16.mxu0 0
    %3395 = vmatpush2.bf16.msra.mxu0 0
    %3396 = vmatprep.mubr.bf16.mxu0 0
    %3397 = vmatmul.mubr.bf16.gmra.mxu0 %v3266
    %v3398 = vpop.f32.mrf.mxu0
    %v3399 = vadd.f32 0.0, %v3398
    %v3400 = vpop.f32.mrf.mxu0
    %v3401 = vadd.f32 0.0, %v3400
    %v3402 = vpop.f32.mrf.mxu0
    %v3403 = vpop.f32.mrf.mxu0
    %3404 = vdwg.mxu0
    %v3405 = vadd.f32 %v3263, %v3399
    %v3406 = vadd.f32 %v3264, %v3401
    %v3407 = vld [vmem:[#allocation2 + $0x1a] sm:$0x3]
    %v3408 = vpack.c.bf16 %v3407, %v3407
    %s3409 = scalar_lea.vmem %s7, 1664
    %v3410 = vld [vmem:[%s3409] sm:$0xff]
    %v3411 = vld [vmem:[%s3409 + $0x8] sm:$0xff]
    %v3412 = vld [vmem:[%s3409 + $0x10] sm:$0xff]
    %v3413 = vld [vmem:[%s3409 + $0x18] sm:$0xff]
    %v3414 = vld [vmem:[%s3409 + $0x20] sm:$0xff]
    %v3415 = vld [vmem:[%s3409 + $0x28] sm:$0xff]
    %v3416 = vld [vmem:[%s3409 + $0x30] sm:$0xff]
    %v3417 = vld [vmem:[%s3409 + $0x38] sm:$0xff]
    %v3418 = vld [vmem:[%s3409 + $0x40] sm:$0xff]
    %v3419 = vld [vmem:[%s3409 + $0x48] sm:$0xff]
    %v3420 = vld [vmem:[%s3409 + $0x50] sm:$0xff]
    %v3421 = vld [vmem:[%s3409 + $0x58] sm:$0xff]
    %v3422 = vld [vmem:[%s3409 + $0x60] sm:$0xff]
    %v3423 = vld [vmem:[%s3409 + $0x68] sm:$0xff]
    %v3424 = vld [vmem:[%s3409 + $0x70] sm:$0xff]
    %v3425 = vld [vmem:[%s3409 + $0x78] sm:$0xff]
    %v3442 = vunpack.c.l.b16 %v3410
    %v3443 = vunpack.c.h.b16 %v3410
    %v3444 = vunpack.c.l.b16 %v3411
    %v3445 = vunpack.c.h.b16 %v3411
    %v3446 = vunpack.c.l.b16 %v3412
    %v3447 = vunpack.c.h.b16 %v3412
    %v3448 = vunpack.c.l.b16 %v3413
    %v3449 = vunpack.c.h.b16 %v3413
    %v3450 = vunpack.c.l.b16 %v3414
    %v3451 = vunpack.c.h.b16 %v3414
    %v3452 = vunpack.c.l.b16 %v3415
    %v3453 = vunpack.c.h.b16 %v3415
    %v3454 = vunpack.c.l.b16 %v3416
    %v3455 = vunpack.c.h.b16 %v3416
    %v3456 = vunpack.c.l.b16 %v3417
    %v3457 = vunpack.c.h.b16 %v3417
    %v3458 = vunpack.c.l.b16 %v3418
    %v3459 = vunpack.c.h.b16 %v3418
    %v3460 = vunpack.c.l.b16 %v3419
    %v3461 = vunpack.c.h.b16 %v3419
    %v3462 = vunpack.c.l.b16 %v3420
    %v3463 = vunpack.c.h.b16 %v3420
    %v3464 = vunpack.c.l.b16 %v3421
    %v3465 = vunpack.c.h.b16 %v3421
    %v3466 = vunpack.c.l.b16 %v3422
    %v3467 = vunpack.c.h.b16 %v3422
    %v3468 = vunpack.c.l.b16 %v3423
    %v3469 = vunpack.c.h.b16 %v3423
    %v3470 = vunpack.c.l.b16 %v3424
    %v3471 = vunpack.c.h.b16 %v3424
    %v3472 = vunpack.c.l.b16 %v3425
    %v3473 = vunpack.c.h.b16 %v3425
    %v3474 = vpack.c.b16 %v3444, %v3442
    %v3475 = vpack.c.b16 %v3445, %v3443
    %v3476 = vpack.c.b16 %v3448, %v3446
    %v3477 = vpack.c.b16 %v3449, %v3447
    %v3478 = vpack.c.b16 %v3452, %v3450
    %v3479 = vpack.c.b16 %v3453, %v3451
    %v3480 = vpack.c.b16 %v3456, %v3454
    %v3481 = vpack.c.b16 %v3457, %v3455
    %v3482 = vpack.c.b16 %v3460, %v3458
    %v3483 = vpack.c.b16 %v3461, %v3459
    %v3484 = vpack.c.b16 %v3464, %v3462
    %v3485 = vpack.c.b16 %v3465, %v3463
    %v3486 = vpack.c.b16 %v3468, %v3466
    %v3487 = vpack.c.b16 %v3469, %v3467
    %v3488 = vpack.c.b16 %v3472, %v3470
    %v3489 = vpack.c.b16 %v3473, %v3471
    %3506 = vmatprep.subr.bf16.mxu0 %v3489
    %3507 = vmatpush1.bf16.msra.mxu0 %v3488
    %3508 = vmatprep.subr.bf16.mxu0 %v3487
    %3509 = vmatpush1.bf16.msra.mxu0 %v3486
    %3510 = vmatprep.subr.bf16.mxu0 %v3485
    %3511 = vmatpush1.bf16.msra.mxu0 %v3484
    %3512 = vmatprep.subr.bf16.mxu0 %v3483
    %3513 = vmatpush1.bf16.msra.mxu0 %v3482
    %3514 = vmatprep.subr.bf16.mxu0 %v3481
    %3515 = vmatpush1.bf16.msra.mxu0 %v3480
    %3516 = vmatprep.subr.bf16.mxu0 %v3479
    %3517 = vmatpush1.bf16.msra.mxu0 %v3478
    %3518 = vmatprep.subr.bf16.mxu0 %v3477
    %3519 = vmatpush1.bf16.msra.mxu0 %v3476
    %3520 = vmatprep.subr.bf16.mxu0 %v3475
    %3521 = vmatpush1.bf16.msra.mxu0 %v3474
    %3522 = vmatprep.subr.bf16.mxu0 0
    %3523 = vmatpush2.bf16.msra.mxu0 0
    %3524 = vmatprep.subr.bf16.mxu0 0
    %3525 = vmatpush2.bf16.msra.mxu0 0
    %3526 = vmatprep.subr.bf16.mxu0 0
    %3527 = vmatpush2.bf16.msra.mxu0 0
    %3528 = vmatprep.subr.bf16.mxu0 0
    %3529 = vmatpush2.bf16.msra.mxu0 0
    %3530 = vmatprep.subr.bf16.mxu0 0
    %3531 = vmatpush2.bf16.msra.mxu0 0
    %3532 = vmatprep.subr.bf16.mxu0 0
    %3533 = vmatpush2.bf16.msra.mxu0 0
    %3534 = vmatprep.subr.bf16.mxu0 0
    %3535 = vmatpush2.bf16.msra.mxu0 0
    %3536 = vmatprep.subr.bf16.mxu0 0
    %3537 = vmatpush2.bf16.msra.mxu0 0
    %3538 = vmatprep.mubr.bf16.mxu0 0
    %3539 = vmatmul.mubr.bf16.gmra.mxu0 %v3408
    %v3540 = vpop.f32.mrf.mxu0
    %v3541 = vadd.f32 0.0, %v3540
    %v3542 = vpop.f32.mrf.mxu0
    %v3543 = vadd.f32 0.0, %v3542
    %v3544 = vpop.f32.mrf.mxu0
    %v3545 = vpop.f32.mrf.mxu0
    %3546 = vdwg.mxu0
    %v3547 = vadd.f32 %v3405, %v3541
    %v3548 = vadd.f32 %v3406, %v3543
    %v3549 = vld [vmem:[#allocation2 + $0x1c] sm:$0x3]
    %v3550 = vpack.c.bf16 %v3549, %v3549
    %s3551 = scalar_lea.vmem %s7, 1792
    %v3552 = vld [vmem:[%s3551] sm:$0xff]
    %v3553 = vld [vmem:[%s3551 + $0x8] sm:$0xff]
    %v3554 = vld [vmem:[%s3551 + $0x10] sm:$0xff]
    %v3555 = vld [vmem:[%s3551 + $0x18] sm:$0xff]
    %v3556 = vld [vmem:[%s3551 + $0x20] sm:$0xff]
    %v3557 = vld [vmem:[%s3551 + $0x28] sm:$0xff]
    %v3558 = vld [vmem:[%s3551 + $0x30] sm:$0xff]
    %v3559 = vld [vmem:[%s3551 + $0x38] sm:$0xff]
    %v3560 = vld [vmem:[%s3551 + $0x40] sm:$0xff]
    %v3561 = vld [vmem:[%s3551 + $0x48] sm:$0xff]
    %v3562 = vld [vmem:[%s3551 + $0x50] sm:$0xff]
    %v3563 = vld [vmem:[%s3551 + $0x58] sm:$0xff]
    %v3564 = vld [vmem:[%s3551 + $0x60] sm:$0xff]
    %v3565 = vld [vmem:[%s3551 + $0x68] sm:$0xff]
    %v3566 = vld [vmem:[%s3551 + $0x70] sm:$0xff]
    %v3567 = vld [vmem:[%s3551 + $0x78] sm:$0xff]
    %v3584 = vunpack.c.l.b16 %v3552
    %v3585 = vunpack.c.h.b16 %v3552
    %v3586 = vunpack.c.l.b16 %v3553
    %v3587 = vunpack.c.h.b16 %v3553
    %v3588 = vunpack.c.l.b16 %v3554
    %v3589 = vunpack.c.h.b16 %v3554
    %v3590 = vunpack.c.l.b16 %v3555
    %v3591 = vunpack.c.h.b16 %v3555
    %v3592 = vunpack.c.l.b16 %v3556
    %v3593 = vunpack.c.h.b16 %v3556
    %v3594 = vunpack.c.l.b16 %v3557
    %v3595 = vunpack.c.h.b16 %v3557
    %v3596 = vunpack.c.l.b16 %v3558
    %v3597 = vunpack.c.h.b16 %v3558
    %v3598 = vunpack.c.l.b16 %v3559
    %v3599 = vunpack.c.h.b16 %v3559
    %v3600 = vunpack.c.l.b16 %v3560
    %v3601 = vunpack.c.h.b16 %v3560
    %v3602 = vunpack.c.l.b16 %v3561
    %v3603 = vunpack.c.h.b16 %v3561
    %v3604 = vunpack.c.l.b16 %v3562
    %v3605 = vunpack.c.h.b16 %v3562
    %v3606 = vunpack.c.l.b16 %v3563
    %v3607 = vunpack.c.h.b16 %v3563
    %v3608 = vunpack.c.l.b16 %v3564
    %v3609 = vunpack.c.h.b16 %v3564
    %v3610 = vunpack.c.l.b16 %v3565
    %v3611 = vunpack.c.h.b16 %v3565
    %v3612 = vunpack.c.l.b16 %v3566
    %v3613 = vunpack.c.h.b16 %v3566
    %v3614 = vunpack.c.l.b16 %v3567
    %v3615 = vunpack.c.h.b16 %v3567
    %v3616 = vpack.c.b16 %v3586, %v3584
    %v3617 = vpack.c.b16 %v3587, %v3585
    %v3618 = vpack.c.b16 %v3590, %v3588
    %v3619 = vpack.c.b16 %v3591, %v3589
    %v3620 = vpack.c.b16 %v3594, %v3592
    %v3621 = vpack.c.b16 %v3595, %v3593
    %v3622 = vpack.c.b16 %v3598, %v3596
    %v3623 = vpack.c.b16 %v3599, %v3597
    %v3624 = vpack.c.b16 %v3602, %v3600
    %v3625 = vpack.c.b16 %v3603, %v3601
    %v3626 = vpack.c.b16 %v3606, %v3604
    %v3627 = vpack.c.b16 %v3607, %v3605
    %v3628 = vpack.c.b16 %v3610, %v3608
    %v3629 = vpack.c.b16 %v3611, %v3609
    %v3630 = vpack.c.b16 %v3614, %v3612
    %v3631 = vpack.c.b16 %v3615, %v3613
    %3648 = vmatprep.subr.bf16.mxu0 %v3631
    %3649 = vmatpush1.bf16.msra.mxu0 %v3630
    %3650 = vmatprep.subr.bf16.mxu0 %v3629
    %3651 = vmatpush1.bf16.msra.mxu0 %v3628
    %3652 = vmatprep.subr.bf16.mxu0 %v3627
    %3653 = vmatpush1.bf16.msra.mxu0 %v3626
    %3654 = vmatprep.subr.bf16.mxu0 %v3625
    %3655 = vmatpush1.bf16.msra.mxu0 %v3624
    %3656 = vmatprep.subr.bf16.mxu0 %v3623
    %3657 = vmatpush1.bf16.msra.mxu0 %v3622
    %3658 = vmatprep.subr.bf16.mxu0 %v3621
    %3659 = vmatpush1.bf16.msra.mxu0 %v3620
    %3660 = vmatprep.subr.bf16.mxu0 %v3619
    %3661 = vmatpush1.bf16.msra.mxu0 %v3618
    %3662 = vmatprep.subr.bf16.mxu0 %v3617
    %3663 = vmatpush1.bf16.msra.mxu0 %v3616
    %3664 = vmatprep.subr.bf16.mxu0 0
    %3665 = vmatpush2.bf16.msra.mxu0 0
    %3666 = vmatprep.subr.bf16.mxu0 0
    %3667 = vmatpush2.bf16.msra.mxu0 0
    %3668 = vmatprep.subr.bf16.mxu0 0
    %3669 = vmatpush2.bf16.msra.mxu0 0
    %3670 = vmatprep.subr.bf16.mxu0 0
    %3671 = vmatpush2.bf16.msra.mxu0 0
    %3672 = vmatprep.subr.bf16.mxu0 0
    %3673 = vmatpush2.bf16.msra.mxu0 0
    %3674 = vmatprep.subr.bf16.mxu0 0
    %3675 = vmatpush2.bf16.msra.mxu0 0
    %3676 = vmatprep.subr.bf16.mxu0 0
    %3677 = vmatpush2.bf16.msra.mxu0 0
    %3678 = vmatprep.subr.bf16.mxu0 0
    %3679 = vmatpush2.bf16.msra.mxu0 0
    %3680 = vmatprep.mubr.bf16.mxu0 0
    %3681 = vmatmul.mubr.bf16.gmra.mxu0 %v3550
    %v3682 = vpop.f32.mrf.mxu0
    %v3683 = vadd.f32 0.0, %v3682
    %v3684 = vpop.f32.mrf.mxu0
    %v3685 = vadd.f32 0.0, %v3684
    %v3686 = vpop.f32.mrf.mxu0
    %v3687 = vpop.f32.mrf.mxu0
    %3688 = vdwg.mxu0
    %v3689 = vadd.f32 %v3547, %v3683
    %v3690 = vadd.f32 %v3548, %v3685
    %v3691 = vld [vmem:[#allocation2 + $0x1e] sm:$0x3]
    %v3692 = vpack.c.bf16 %v3691, %v3691
    %s3693 = scalar_lea.vmem %s7, 1920
    %v3694 = vld [vmem:[%s3693] sm:$0xff]
    %v3695 = vld [vmem:[%s3693 + $0x8] sm:$0xff]
    %v3696 = vld [vmem:[%s3693 + $0x10] sm:$0xff]
    %v3697 = vld [vmem:[%s3693 + $0x18] sm:$0xff]
    %v3698 = vld [vmem:[%s3693 + $0x20] sm:$0xff]
    %v3699 = vld [vmem:[%s3693 + $0x28] sm:$0xff]
    %v3700 = vld [vmem:[%s3693 + $0x30] sm:$0xff]
    %v3701 = vld [vmem:[%s3693 + $0x38] sm:$0xff]
    %v3702 = vld [vmem:[%s3693 + $0x40] sm:$0xff]
    %v3703 = vld [vmem:[%s3693 + $0x48] sm:$0xff]
    %v3704 = vld [vmem:[%s3693 + $0x50] sm:$0xff]
    %v3705 = vld [vmem:[%s3693 + $0x58] sm:$0xff]
    %v3706 = vld [vmem:[%s3693 + $0x60] sm:$0xff]
    %v3707 = vld [vmem:[%s3693 + $0x68] sm:$0xff]
    %v3708 = vld [vmem:[%s3693 + $0x70] sm:$0xff]
    %v3709 = vld [vmem:[%s3693 + $0x78] sm:$0xff]
    %v3726 = vunpack.c.l.b16 %v3694
    %v3727 = vunpack.c.h.b16 %v3694
    %v3728 = vunpack.c.l.b16 %v3695
    %v3729 = vunpack.c.h.b16 %v3695
    %v3730 = vunpack.c.l.b16 %v3696
    %v3731 = vunpack.c.h.b16 %v3696
    %v3732 = vunpack.c.l.b16 %v3697
    %v3733 = vunpack.c.h.b16 %v3697
    %v3734 = vunpack.c.l.b16 %v3698
    %v3735 = vunpack.c.h.b16 %v3698
    %v3736 = vunpack.c.l.b16 %v3699
    %v3737 = vunpack.c.h.b16 %v3699
    %v3738 = vunpack.c.l.b16 %v3700
    %v3739 = vunpack.c.h.b16 %v3700
    %v3740 = vunpack.c.l.b16 %v3701
    %v3741 = vunpack.c.h.b16 %v3701
    %v3742 = vunpack.c.l.b16 %v3702
    %v3743 = vunpack.c.h.b16 %v3702
    %v3744 = vunpack.c.l.b16 %v3703
    %v3745 = vunpack.c.h.b16 %v3703
    %v3746 = vunpack.c.l.b16 %v3704
    %v3747 = vunpack.c.h.b16 %v3704
    %v3748 = vunpack.c.l.b16 %v3705
    %v3749 = vunpack.c.h.b16 %v3705
    %v3750 = vunpack.c.l.b16 %v3706
    %v3751 = vunpack.c.h.b16 %v3706
    %v3752 = vunpack.c.l.b16 %v3707
    %v3753 = vunpack.c.h.b16 %v3707
    %v3754 = vunpack.c.l.b16 %v3708
    %v3755 = vunpack.c.h.b16 %v3708
    %v3756 = vunpack.c.l.b16 %v3709
    %v3757 = vunpack.c.h.b16 %v3709
    %v3758 = vpack.c.b16 %v3728, %v3726
    %v3759 = vpack.c.b16 %v3729, %v3727
    %v3760 = vpack.c.b16 %v3732, %v3730
    %v3761 = vpack.c.b16 %v3733, %v3731
    %v3762 = vpack.c.b16 %v3736, %v3734
    %v3763 = vpack.c.b16 %v3737, %v3735
    %v3764 = vpack.c.b16 %v3740, %v3738
    %v3765 = vpack.c.b16 %v3741, %v3739
    %v3766 = vpack.c.b16 %v3744, %v3742
    %v3767 = vpack.c.b16 %v3745, %v3743
    %v3768 = vpack.c.b16 %v3748, %v3746
    %v3769 = vpack.c.b16 %v3749, %v3747
    %v3770 = vpack.c.b16 %v3752, %v3750
    %v3771 = vpack.c.b16 %v3753, %v3751
    %v3772 = vpack.c.b16 %v3756, %v3754
    %v3773 = vpack.c.b16 %v3757, %v3755
    %3790 = vmatprep.subr.bf16.mxu0 %v3773
    %3791 = vmatpush1.bf16.msra.mxu0 %v3772
    %3792 = vmatprep.subr.bf16.mxu0 %v3771
    %3793 = vmatpush1.bf16.msra.mxu0 %v3770
    %3794 = vmatprep.subr.bf16.mxu0 %v3769
    %3795 = vmatpush1.bf16.msra.mxu0 %v3768
    %3796 = vmatprep.subr.bf16.mxu0 %v3767
    %3797 = vmatpush1.bf16.msra.mxu0 %v3766
    %3798 = vmatprep.subr.bf16.mxu0 %v3765
    %3799 = vmatpush1.bf16.msra.mxu0 %v3764
    %3800 = vmatprep.subr.bf16.mxu0 %v3763
    %3801 = vmatpush1.bf16.msra.mxu0 %v3762
    %3802 = vmatprep.subr.bf16.mxu0 %v3761
    %3803 = vmatpush1.bf16.msra.mxu0 %v3760
    %3804 = vmatprep.subr.bf16.mxu0 %v3759
    %3805 = vmatpush1.bf16.msra.mxu0 %v3758
    %3806 = vmatprep.subr.bf16.mxu0 0
    %3807 = vmatpush2.bf16.msra.mxu0 0
    %3808 = vmatprep.subr.bf16.mxu0 0
    %3809 = vmatpush2.bf16.msra.mxu0 0
    %3810 = vmatprep.subr.bf16.mxu0 0
    %3811 = vmatpush2.bf16.msra.mxu0 0
    %3812 = vmatprep.subr.bf16.mxu0 0
    %3813 = vmatpush2.bf16.msra.mxu0 0
    %3814 = vmatprep.subr.bf16.mxu0 0
    %3815 = vmatpush2.bf16.msra.mxu0 0
    %3816 = vmatprep.subr.bf16.mxu0 0
    %3817 = vmatpush2.bf16.msra.mxu0 0
    %3818 = vmatprep.subr.bf16.mxu0 0
    %3819 = vmatpush2.bf16.msra.mxu0 0
    %3820 = vmatprep.subr.bf16.mxu0 0
    %3821 = vmatpush2.bf16.msra.mxu0 0
    %3822 = vmatprep.mubr.bf16.mxu0 0
    %3823 = vmatmul.mubr.bf16.gmra.mxu0 %v3692
    %v3824 = vpop.f32.mrf.mxu0
    %v3825 = vadd.f32 0.0, %v3824
    %v3826 = vpop.f32.mrf.mxu0
    %v3827 = vadd.f32 0.0, %v3826
    %v3828 = vpop.f32.mrf.mxu0
    %v3829 = vpop.f32.mrf.mxu0
    %3830 = vdwg.mxu0
    %v3831 = vadd.f32 %v3689, %v3825
    %v3832 = vadd.f32 %v3690, %v3827
    %v3833 = vld [vmem:[%s8] sm:$0x3]
    %v3835 = vlaneseq
    %v3836 = vshrl.u32 %v3835, 7
    %v3837 = vsub.s32 0, %v3836
    %v3838 = vrot.slane %v3833, %v3837
    %v3839 = vlaneseq
    %v3840 = vshrl.u32 %v3839, 7
    %v3841 = vsub.s32 1, %v3840
    %v3842 = vrot.slane %v3833, %v3841
    %v3845 = vadd.f32 %v3831, %v3838
    %v3846 = vadd.f32 %v3832, %v3842
    %v3847 = vmax.f32 %v3845, 0.0
    %v3848 = vmax.f32 %v3846, 0.0
    %v3849 = vpack.c.bf16 %v3847, %v3847
    %v3850 = vpack.c.bf16 %v3848, %v3848
    %v3851 = vld [vmem:[%s9] sm:$0xf]
    %v3852 = vld [vmem:[%s9 + $0x4] sm:$0xf]
    %v3853 = vld [vmem:[%s9 + $0x8] sm:$0xf]
    %v3854 = vld [vmem:[%s9 + $0xc] sm:$0xf]
    %v3855 = vld [vmem:[%s9 + $0x10] sm:$0xf]
    %v3856 = vld [vmem:[%s9 + $0x14] sm:$0xf]
    %v3857 = vld [vmem:[%s9 + $0x18] sm:$0xf]
    %v3858 = vld [vmem:[%s9 + $0x1c] sm:$0xf]
    %v3859 = vld [vmem:[%s9 + $0x20] sm:$0xf]
    %v3860 = vld [vmem:[%s9 + $0x24] sm:$0xf]
    %v3861 = vld [vmem:[%s9 + $0x28] sm:$0xf]
    %v3862 = vld [vmem:[%s9 + $0x2c] sm:$0xf]
    %v3863 = vld [vmem:[%s9 + $0x30] sm:$0xf]
    %v3864 = vld [vmem:[%s9 + $0x34] sm:$0xf]
    %v3865 = vld [vmem:[%s9 + $0x38] sm:$0xf]
    %v3866 = vld [vmem:[%s9 + $0x3c] sm:$0xf]
    %v3867 = vld [vmem:[%s9 + $0x40] sm:$0xf]
    %v3868 = vld [vmem:[%s9 + $0x44] sm:$0xf]
    %v3869 = vld [vmem:[%s9 + $0x48] sm:$0xf]
    %v3870 = vld [vmem:[%s9 + $0x4c] sm:$0xf]
    %v3871 = vld [vmem:[%s9 + $0x50] sm:$0xf]
    %v3872 = vld [vmem:[%s9 + $0x54] sm:$0xf]
    %v3873 = vld [vmem:[%s9 + $0x58] sm:$0xf]
    %v3874 = vld [vmem:[%s9 + $0x5c] sm:$0xf]
    %v3875 = vld [vmem:[%s9 + $0x60] sm:$0xf]
    %v3876 = vld [vmem:[%s9 + $0x64] sm:$0xf]
    %v3877 = vld [vmem:[%s9 + $0x68] sm:$0xf]
    %v3878 = vld [vmem:[%s9 + $0x6c] sm:$0xf]
    %v3879 = vld [vmem:[%s9 + $0x70] sm:$0xf]
    %v3880 = vld [vmem:[%s9 + $0x74] sm:$0xf]
    %v3881 = vld [vmem:[%s9 + $0x78] sm:$0xf]
    %v3882 = vld [vmem:[%s9 + $0x7c] sm:$0xf]
    %v3883 = vld [vmem:[%s10] sm:$0x1]
    %v3885 = vlaneseq
    %v3886 = vshrl.u32 %v3885, 7
    %v3887 = vsub.s32 0, %v3886
    %v3888 = vrot.slane %v3883, %v3887
    %v3922 = vunpack.c.l.b16 %v3851
    %v3923 = vunpack.c.l.b16 %v3852
    %v3924 = vunpack.c.l.b16 %v3853
    %v3925 = vunpack.c.l.b16 %v3854
    %v3926 = vunpack.c.l.b16 %v3855
    %v3927 = vunpack.c.l.b16 %v3856
    %v3928 = vunpack.c.l.b16 %v3857
    %v3929 = vunpack.c.l.b16 %v3858
    %v3930 = vunpack.c.l.b16 %v3859
    %v3931 = vunpack.c.l.b16 %v3860
    %v3932 = vunpack.c.l.b16 %v3861
    %v3933 = vunpack.c.l.b16 %v3862
    %v3934 = vunpack.c.l.b16 %v3863
    %v3935 = vunpack.c.l.b16 %v3864
    %v3936 = vunpack.c.l.b16 %v3865
    %v3937 = vunpack.c.l.b16 %v3866
    %v3938 = vunpack.c.l.b16 %v3867
    %v3939 = vunpack.c.l.b16 %v3868
    %v3940 = vunpack.c.l.b16 %v3869
    %v3941 = vunpack.c.l.b16 %v3870
    %v3942 = vunpack.c.l.b16 %v3871
    %v3943 = vunpack.c.l.b16 %v3872
    %v3944 = vunpack.c.l.b16 %v3873
    %v3945 = vunpack.c.l.b16 %v3874
    %v3946 = vunpack.c.l.b16 %v3875
    %v3947 = vunpack.c.l.b16 %v3876
    %v3948 = vunpack.c.l.b16 %v3877
    %v3949 = vunpack.c.l.b16 %v3878
    %v3950 = vunpack.c.l.b16 %v3879
    %v3951 = vunpack.c.l.b16 %v3880
    %v3952 = vunpack.c.l.b16 %v3881
    %v3953 = vunpack.c.l.b16 %v3882
    %v3954 = vpack.c.b16 %v3923, %v3922
    %v3955 = vpack.c.b16 %v3925, %v3924
    %v3956 = vpack.c.b16 %v3927, %v3926
    %v3957 = vpack.c.b16 %v3929, %v3928
    %v3958 = vpack.c.b16 %v3931, %v3930
    %v3959 = vpack.c.b16 %v3933, %v3932
    %v3960 = vpack.c.b16 %v3935, %v3934
    %v3961 = vpack.c.b16 %v3937, %v3936
    %v3962 = vpack.c.b16 %v3939, %v3938
    %v3963 = vpack.c.b16 %v3941, %v3940
    %v3964 = vpack.c.b16 %v3943, %v3942
    %v3965 = vpack.c.b16 %v3945, %v3944
    %v3966 = vpack.c.b16 %v3947, %v3946
    %v3967 = vpack.c.b16 %v3949, %v3948
    %v3968 = vpack.c.b16 %v3951, %v3950
    %v3969 = vpack.c.b16 %v3953, %v3952
    %3986 = vmatprep.subr.bf16.mxu0 0
    %3987 = vmatpush1.bf16.msra.mxu0 %v3961
    %3988 = vmatprep.subr.bf16.mxu0 0
    %3989 = vmatpush1.bf16.msra.mxu0 %v3960
    %3990 = vmatprep.subr.bf16.mxu0 0
    %3991 = vmatpush1.bf16.msra.mxu0 %v3959
    %3992 = vmatprep.subr.bf16.mxu0 0
    %3993 = vmatpush1.bf16.msra.mxu0 %v3958
    %3994 = vmatprep.subr.bf16.mxu0 0
    %3995 = vmatpush1.bf16.msra.mxu0 %v3957
    %3996 = vmatprep.subr.bf16.mxu0 0
    %3997 = vmatpush1.bf16.msra.mxu0 %v3956
    %3998 = vmatprep.subr.bf16.mxu0 0
    %3999 = vmatpush1.bf16.msra.mxu0 %v3955
    %4000 = vmatprep.subr.bf16.mxu0 0
    %4001 = vmatpush1.bf16.msra.mxu0 %v3954
    %4002 = vmatprep.subr.bf16.mxu0 0
    %4003 = vmatpush2.bf16.msra.mxu0 %v3969
    %4004 = vmatprep.subr.bf16.mxu0 0
    %4005 = vmatpush2.bf16.msra.mxu0 %v3968
    %4006 = vmatprep.subr.bf16.mxu0 0
    %4007 = vmatpush2.bf16.msra.mxu0 %v3967
    %4008 = vmatprep.subr.bf16.mxu0 0
    %4009 = vmatpush2.bf16.msra.mxu0 %v3966
    %4010 = vmatprep.subr.bf16.mxu0 0
    %4011 = vmatpush2.bf16.msra.mxu0 %v3965
    %4012 = vmatprep.subr.bf16.mxu0 0
    %4013 = vmatpush2.bf16.msra.mxu0 %v3964
    %4014 = vmatprep.subr.bf16.mxu0 0
    %4015 = vmatpush2.bf16.msra.mxu0 %v3963
    %4016 = vmatprep.subr.bf16.mxu0 0
    %4017 = vmatpush2.bf16.msra.mxu0 %v3962
    %4018 = vmatprep.mubr.bf16.mxu0 %v3850
    %4019 = vmatmul.mubr.bf16.gmra.mxu0 %v3849
    %v4020 = vpop.f32.mrf.mxu0
    %v4021 = vadd.f32 %v3888, %v4020
    %v4022 = vpop.f32.mrf.mxu0
    %v4023 = vpop.f32.mrf.mxu0
    %v4024 = vpop.f32.mrf.mxu0
    %4025 = vdwg.mxu0
    %v4026 = vlaneseq
    %v4027 = vand.u32 %v4026, 127
    %vm4028 = vcmp.eq.s32.totalorder %v4027, 4
    %v4029 = vsel %vm4028, %v4021, 0.0
    %vm4030 = vcmask 33792
    %v4031 = vsel %vm4030, %v4029, 0.0
    %4032 = vadd.xlane.f32.xlu0 %v4031
    %v4033 = vpop.xlane.xlu0 %4032
    %v4034 = vsel %vm4028, 0.0, %v4021
    %v4035 = vsel %vm4030, %v4034, 0.0
    %4036 = vadd.xlane.f32.xlu0 %v4035
    %v4037 = vpop.xlane.xlu0 %4036
    %v4038 = vmul.f32 %v4037, 0.25
    %v4039 = vadd.f32 %v4021, %v4033
    %v4040 = vsub.f32 %v4039, %v4038
    %vm4041 = vcmask 25600
    %4042 = vst.msk [vmem:[#allocation3] sm:$0x3] %vm4041, %v4040
    // Predicated region
    $region46: #{ddqn_forward.1} parent=1 // pred_check
      _
    $region47: #{ddqn_forward.1} parent=1 // pred_check_branch
      %4044 = sbr.rel (0) target = $region49
    $region48: #{ddqn_forward.1} parent=1 // pred_region
      %s4046 = ssub.s32 32, 32
      %4047 = vsyncadd [#allocation4], %s4046
      %s4049 = sshll.u32 [#allocation3], 4
      %s4050 = int_to_ptr.vmem [resolvable:$true] %s4049
      %4052 = dma.vmem_to_hbm [thread:$0]  %s4050, 32, %s11, [#allocation4]
    $region49: #{ddqn_forward.1} parent=1 // pred_fallthru
      _
    // Predicated region
    $region50: #{ddqn_forward.1} parent=1 // pred_check
      _
    $region51: #{ddqn_forward.1} parent=1 // pred_check_branch
      %4054 = sbr.rel (0) target = $region53
    $region52: #{ddqn_forward.1} parent=1 // pred_region
      %4055 = dma.done [#allocation4], 32
    $region53: #{ddqn_forward.1} parent=1 // pred_fallthru
      _
    %4056 = vsyncpa [#allocation4], 1

</llo_original>
